<compile_context>
chip_gen: v5e
topology: v5e:2x2
jax: 0.10.0
libtpu: 0.0.40
codegen_flags: <defaults>
</compile_context>

<pallas_src>
import functools

import jax
import jax.numpy as jnp
from jax import lax
from jax.experimental import pallas as pl
from jax.experimental.pallas import tpu as pltpu


def _conv_bn_relu_pool_kernel(x_ref, w_ref, scale_ref, shift_ref, o_ref, *, pool):
    """One (image, output-row-strip) step of conv3x3 + folded BN(+bias) + ReLU + PxP max-pool.

    x_ref:     (1, H+2, W+2, Cin)   bf16  zero-padded NHWC image (whole image, revisited across strips)
    w_ref:     (9*Cin, Cout)        bf16  conv taps packed row-major as (dy, dx, ci)
    scale_ref: (1, Cout)            f32   gamma / sqrt(var + eps)
    shift_ref: (1, Cout)            f32   (conv_bias - mean) * scale + beta
    o_ref:     (1, S_out, Wo, Cout) f32   pooled output strip
    """
    P = pool
    _, S_out, Wo, Cout = o_ref.shape
    _, _, Wp2, Cin = x_ref.shape
    W = Wp2 - 2
    S_in = S_out * P                       # conv rows produced by this strip

    r = pl.program_id(1)
    row0 = r * S_in                        # first padded-input row needed by this strip
    if S_in % 8 == 0:
        row0 = pl.multiple_of(row0, 8)

    # im2col: 9 shifted (S_in, W, Cin) windows -> one (S_in*W, 9*Cin) matrix, then a single
    # MXU matmul against the pre-packed weights (bf16 operands, f32 accumulation).
    patches = []
    for dy in range(3):
        for dx in range(3):
            patches.append(x_ref[0, pl.ds(row0 + dy, S_in), pl.ds(dx, W), :])
    col = jnp.concatenate(patches, axis=-1).reshape(S_in * W, 9 * Cin)
    acc = jnp.dot(col, w_ref[...], preferred_element_type=jnp.float32)    # (S_in*W, Cout) f32

    # Folded BatchNorm (absorbs conv bias) + ReLU, in f32 (v5e-safe elementwise tail).
    y = jnp.maximum(acc * scale_ref[...] + shift_ref[...], 0.0)

    # MaxPool2d(P) entirely in registers: rows of y are (h, w) with w fastest.
    yw = jnp.max(y.reshape(S_in * Wo, P, Cout), axis=1)          # pool along W -> (S_in*Wo, Cout)
    pooled = jnp.max(yw.reshape(S_out, P, Wo, Cout), axis=1)     # pool along H -> (S_out, Wo, Cout)

    # TODO(synk): for small Cout, packing (Wo, Cout) onto the 128-lane axis before the store would
    # make the output stores fully lane-dense; left out to keep lowering simple at these shapes.
    o_ref[0] = pooled.astype(o_ref.dtype)


def conv_block_forward_nhwc(x_nhwc, w_hwio, scale, shift, pool_size, *, strip_rows=8):
    """NHWC-in / NHWC-out fused conv+BN+ReLU+maxpool (use this form when chaining blocks)."""
    N, H, W, Cin = x_nhwc.shape
    KH, KW, _, Cout = w_hwio.shape
    assert (KH, KW) == (3, 3), "kernel is specialized to 3x3, pad=1, stride=1"
    P = int(pool_size)
    assert P >= 1 and H % P == 0 and W % P == 0
    Ho, Wo = H // P, W // P

    # Row-strip tiling of the pooled output (strip_rows output rows per grid step).
    if (strip_rows is None or strip_rows <= 0 or Ho % strip_rows != 0
            or (strip_rows % 8 != 0 and strip_rows != Ho)):
        strip_rows = Ho
    R = Ho // strip_rows

    xb = x_nhwc.astype(jnp.bfloat16)
    # TODO(synk): fold this 1-px halo pad into the kernel (zero-fill in VMEM) to drop the extra
    # HBM pass over the input.
    x_pad = jnp.pad(xb, ((0, 0), (1, 1), (1, 1), (0, 0)))
    w_packed = w_hwio.astype(jnp.bfloat16).reshape(KH * KW * Cin, Cout)   # rows ordered (dy, dx, ci)
    scale2d = scale.reshape(1, Cout).astype(jnp.float32)
    shift2d = shift.reshape(1, Cout).astype(jnp.float32)

    kernel = functools.partial(_conv_bn_relu_pool_kernel, pool=P)

    out_nhwc = pl.pallas_call(
        kernel,
        out_shape=jax.ShapeDtypeStruct((N, Ho, Wo, Cout), jnp.float32),
        grid_spec=pltpu.PrefetchScalarGridSpec(
            num_scalar_prefetch=0,
            grid=(N, R),
            in_specs=[
                # Whole padded image per batch element; block index is constant across r, so it is
                # DMA'd once per image and revisited by every strip.
                pl.BlockSpec((1, H + 2, W + 2, Cin), lambda n, r: (n, 0, 0, 0)),
                pl.BlockSpec((KH * KW * Cin, Cout), lambda n, r: (0, 0)),
                pl.BlockSpec((1, Cout), lambda n, r: (0, 0)),
                pl.BlockSpec((1, Cout), lambda n, r: (0, 0)),
            ],
            out_specs=pl.BlockSpec((1, strip_rows, Wo, Cout), lambda n, r: (n, r, 0, 0)),
        ),
        compiler_params=pltpu.CompilerParams(
            dimension_semantics=("parallel", "parallel"),
            vmem_limit_bytes=48 * 1024 * 1024),
    )(x_pad, w_packed, scale2d, shift2d)

    return out_nhwc


def conv_block_w_output_forward(x_nchw, w_hwio, scale, shift, pool_size, *, strip_rows=8):
    """Mirrors ConvBlockWOutput.only_forward (add_output=False): returns (fwd, 0, None)."""
    # TODO(synk): keep activations NHWC across chained ConvBlocks; these NCHW<->NHWC transposes only
    # exist to match the PyTorch module interface.
    x_nhwc = jnp.transpose(x_nchw, (0, 2, 3, 1))
    fwd_nhwc = conv_block_forward_nhwc(x_nhwc, w_hwio, scale, shift, pool_size,
                                       strip_rows=strip_rows)
    fwd = jnp.transpose(fwd_nhwc, (0, 3, 1, 2))
    # TODO(synk): af.InternalClassifier (early-exit head used when add_output=True) is not defined in
    # the provided source; this implements the only_forward path.
    return fwd, 0, None


def _reference_forward(x_nchw, w_hwio, scale, shift, pool_size):
    """Pure-JAX reference (same bf16 input/weight rounding as the kernel), NCHW in/out."""
    x = jnp.transpose(x_nchw, (0, 2, 3, 1)).astype(jnp.bfloat16).astype(jnp.float32)
    w = w_hwio.astype(jnp.bfloat16).astype(jnp.float32)
    conv = lax.conv_general_dilated(
        x, w, window_strides=(1, 1), padding="SAME",
        dimension_numbers=("NHWC", "HWIO", "NHWC"),
        precision=lax.Precision.HIGHEST)
    y = jnp.maximum(conv * scale + shift, 0.0)
    pooled = lax.reduce_window(
        y, -jnp.inf, lax.max,
        window_dimensions=(1, pool_size, pool_size, 1),
        window_strides=(1, pool_size, pool_size, 1),
        padding="VALID")
    return jnp.transpose(pooled, (0, 3, 1, 2))


if __name__ == "__main__":
    # conv_params = (Cin, Cout, max_pool_size, batch_norm=True); output_params -> add_output=False
    N, Cin, Cout, H, W = 2, 4, 8, 32, 32
    POOL = 2

    key = jax.random.PRNGKey(0)
    kx, kw, kb, kg, kbeta, kmean, kvar = jax.random.split(key, 7)

    x_nchw = jax.random.normal(kx, (N, Cin, H, W), jnp.float32)

    # Conv2d(Cin, Cout, kernel=3, padding=1, stride=1) parameters (PyTorch OIHW layout).
    w_oihw = 0.1 * jax.random.normal(kw, (Cout, Cin, 3, 3), jnp.float32)
    bias = 0.1 * jax.random.normal(kb, (Cout,), jnp.float32)
    # BatchNorm2d(Cout) eval-mode parameters.
    gamma = 1.0 + 0.1 * jax.random.normal(kg, (Cout,), jnp.float32)
    beta = 0.1 * jax.random.normal(kbeta, (Cout,), jnp.float32)
    running_mean = 0.1 * jax.random.normal(kmean, (Cout,), jnp.float32)
    running_var = jax.random.uniform(kvar, (Cout,), jnp.float32, 0.5, 1.5)
    eps = 1e-5

    # Fold conv bias + eval-mode BN into one per-channel affine applied after the conv matmul.
    bn_scale = gamma / jnp.sqrt(running_var + eps)
    scale = bn_scale
    shift = (bias - running_mean) * bn_scale + beta
    w_hwio = jnp.transpose(w_oihw, (2, 3, 1, 0))   # OIHW -> HWIO

    fwd, is_output, output = conv_block_w_output_forward(
        x_nchw, w_hwio, scale, shift, POOL, strip_rows=8)
    fwd = jax.block_until_ready(fwd)

    ref = _reference_forward(x_nchw, w_hwio, scale, shift, POOL)
    assert fwd.shape == (N, Cout, H // POOL, W // POOL), fwd.shape
    assert is_output == 0 and output is None
    max_err = float(jnp.max(jnp.abs(fwd - ref)))
    assert jnp.allclose(fwd, ref, atol=2e-3, rtol=2e-3), max_err

    print("KERNEL_OK")
</pallas_src>

<mosaic_0001>
module attributes {stable_mosaic.version = 11 : i64} {
  func.func @_conv_bn_relu_pool_kernel(%arg0: i32, %arg1: i32, %arg2: memref<1x34x34x4xbf16, #tpu.memory_space<vmem>>, %arg3: memref<36x8xbf16, #tpu.memory_space<vmem>>, %arg4: memref<1x8xf32, #tpu.memory_space<vmem>>, %arg5: memref<1x8xf32, #tpu.memory_space<vmem>>, %arg6: memref<1x8x16x8xf32, #tpu.memory_space<vmem>>) attributes {dimension_semantics = [#tpu.dimension_semantics<parallel>, #tpu.dimension_semantics<parallel>], iteration_bounds = array<i64: 2, 2>, scalar_prefetch = 0 : i64, scratch_operands = 0 : i64, tpu.core_type = #tpu.core_type<tc>, window_params = [{transform_indices = @transform_0, window_bounds = array<i64: 1, 34, 34, 4>}, {pipeline_mode = #tpu.pipeline_mode<synchronous>, transform_indices = @transform_1, window_bounds = array<i64: 36, 8>}, {pipeline_mode = #tpu.pipeline_mode<synchronous>, transform_indices = @transform_2, window_bounds = array<i64: 1, 8>}, {pipeline_mode = #tpu.pipeline_mode<synchronous>, transform_indices = @transform_3, window_bounds = array<i64: 1, 8>}, {transform_indices = @transform_4, window_bounds = array<i64: 1, 8, 16, 8>}]} {
    %c16_i32 = arith.constant 16 : i32
    %0 = arith.muli %arg1, %c16_i32 : i32
    %1 = tpu.assume_multiple %0, 8 : i32
    %c0_i32 = arith.constant 0 : i32
    %2 = arith.addi %1, %c0_i32 : i32
    %c0 = arith.constant 0 : index
    %3 = arith.index_cast %2 : i32 to index
    %c0_0 = arith.constant 0 : index
    %c0_1 = arith.constant 0 : index
    %4 = vector.load %arg2[%c0, %3, %c0_0, %c0_1] : memref<1x34x34x4xbf16, #tpu.memory_space<vmem>>, vector<1x16x32x4xbf16>
    %5 = vector.shape_cast %4 : vector<1x16x32x4xbf16> to vector<16x32x4xbf16>
    %c0_i32_2 = arith.constant 0 : i32
    %6 = arith.addi %1, %c0_i32_2 : i32
    %c0_3 = arith.constant 0 : index
    %7 = arith.index_cast %6 : i32 to index
    %c1 = arith.constant 1 : index
    %c0_4 = arith.constant 0 : index
    %8 = vector.load %arg2[%c0_3, %7, %c1, %c0_4] : memref<1x34x34x4xbf16, #tpu.memory_space<vmem>>, vector<1x16x32x4xbf16>
    %9 = vector.shape_cast %8 : vector<1x16x32x4xbf16> to vector<16x32x4xbf16>
    %c0_i32_5 = arith.constant 0 : i32
    %10 = arith.addi %1, %c0_i32_5 : i32
    %c0_6 = arith.constant 0 : index
    %11 = arith.index_cast %10 : i32 to index
    %c2 = arith.constant 2 : index
    %c0_7 = arith.constant 0 : index
    %12 = vector.load %arg2[%c0_6, %11, %c2, %c0_7] : memref<1x34x34x4xbf16, #tpu.memory_space<vmem>>, vector<1x16x32x4xbf16>
    %13 = vector.shape_cast %12 : vector<1x16x32x4xbf16> to vector<16x32x4xbf16>
    %c1_i32 = arith.constant 1 : i32
    %14 = arith.addi %1, %c1_i32 : i32
    %c0_8 = arith.constant 0 : index
    %15 = arith.index_cast %14 : i32 to index
    %c0_9 = arith.constant 0 : index
    %c0_10 = arith.constant 0 : index
    %16 = vector.load %arg2[%c0_8, %15, %c0_9, %c0_10] : memref<1x34x34x4xbf16, #tpu.memory_space<vmem>>, vector<1x16x32x4xbf16>
    %17 = vector.shape_cast %16 : vector<1x16x32x4xbf16> to vector<16x32x4xbf16>
    %c1_i32_11 = arith.constant 1 : i32
    %18 = arith.addi %1, %c1_i32_11 : i32
    %c0_12 = arith.constant 0 : index
    %19 = arith.index_cast %18 : i32 to index
    %c1_13 = arith.constant 1 : index
    %c0_14 = arith.constant 0 : index
    %20 = vector.load %arg2[%c0_12, %19, %c1_13, %c0_14] : memref<1x34x34x4xbf16, #tpu.memory_space<vmem>>, vector<1x16x32x4xbf16>
    %21 = vector.shape_cast %20 : vector<1x16x32x4xbf16> to vector<16x32x4xbf16>
    %c1_i32_15 = arith.constant 1 : i32
    %22 = arith.addi %1, %c1_i32_15 : i32
    %c0_16 = arith.constant 0 : index
    %23 = arith.index_cast %22 : i32 to index
    %c2_17 = arith.constant 2 : index
    %c0_18 = arith.constant 0 : index
    %24 = vector.load %arg2[%c0_16, %23, %c2_17, %c0_18] : memref<1x34x34x4xbf16, #tpu.memory_space<vmem>>, vector<1x16x32x4xbf16>
    %25 = vector.shape_cast %24 : vector<1x16x32x4xbf16> to vector<16x32x4xbf16>
    %c2_i32 = arith.constant 2 : i32
    %26 = arith.addi %1, %c2_i32 : i32
    %c0_19 = arith.constant 0 : index
    %27 = arith.index_cast %26 : i32 to index
    %c0_20 = arith.constant 0 : index
    %c0_21 = arith.constant 0 : index
    %28 = vector.load %arg2[%c0_19, %27, %c0_20, %c0_21] : memref<1x34x34x4xbf16, #tpu.memory_space<vmem>>, vector<1x16x32x4xbf16>
    %29 = vector.shape_cast %28 : vector<1x16x32x4xbf16> to vector<16x32x4xbf16>
    %c2_i32_22 = arith.constant 2 : i32
    %30 = arith.addi %1, %c2_i32_22 : i32
    %c0_23 = arith.constant 0 : index
    %31 = arith.index_cast %30 : i32 to index
    %c1_24 = arith.constant 1 : index
    %c0_25 = arith.constant 0 : index
    %32 = vector.load %arg2[%c0_23, %31, %c1_24, %c0_25] : memref<1x34x34x4xbf16, #tpu.memory_space<vmem>>, vector<1x16x32x4xbf16>
    %33 = vector.shape_cast %32 : vector<1x16x32x4xbf16> to vector<16x32x4xbf16>
    %c2_i32_26 = arith.constant 2 : i32
    %34 = arith.addi %1, %c2_i32_26 : i32
    %c0_27 = arith.constant 0 : index
    %35 = arith.index_cast %34 : i32 to index
    %c2_28 = arith.constant 2 : index
    %c0_29 = arith.constant 0 : index
    %36 = vector.load %arg2[%c0_27, %35, %c2_28, %c0_29] : memref<1x34x34x4xbf16, #tpu.memory_space<vmem>>, vector<1x16x32x4xbf16>
    %37 = vector.shape_cast %36 : vector<1x16x32x4xbf16> to vector<16x32x4xbf16>
    %38 = tpu.concatenate %5, %9, %13, %17, %21, %25, %29, %33, %37 in 2 : vector<16x32x4xbf16>, vector<16x32x4xbf16>, vector<16x32x4xbf16>, vector<16x32x4xbf16>, vector<16x32x4xbf16>, vector<16x32x4xbf16>, vector<16x32x4xbf16>, vector<16x32x4xbf16>, vector<16x32x4xbf16> -> vector<16x32x36xbf16>
    %39 = vector.shape_cast %38 : vector<16x32x36xbf16> to vector<512x36xbf16>
    %c0_30 = arith.constant 0 : index
    %c0_31 = arith.constant 0 : index
    %40 = vector.load %arg3[%c0_30, %c0_31] : memref<36x8xbf16, #tpu.memory_space<vmem>>, vector<36x8xbf16>
    %cst = arith.constant dense<0.000000e+00> : vector<512x8xf32>
    %41 = tpu.matmul %39, %40, %cst {dimension_numbers = #tpu.dot_dimension_numbers<[1], [0], [0], [1], [0, 0, 1, 1], [], []>} : vector<512x36xbf16>, vector<36x8xbf16>, vector<512x8xf32> -> vector<512x8xf32>
    %c0_32 = arith.constant 0 : index
    %c0_33 = arith.constant 0 : index
    %42 = vector.load %arg4[%c0_32, %c0_33] : memref<1x8xf32, #tpu.memory_space<vmem>>, vector<1x8xf32>
    %43 = vector.broadcast %42 : vector<1x8xf32> to vector<512x8xf32>
    %44 = arith.mulf %41, %43 : vector<512x8xf32>
    %c0_34 = arith.constant 0 : index
    %c0_35 = arith.constant 0 : index
    %45 = vector.load %arg5[%c0_34, %c0_35] : memref<1x8xf32, #tpu.memory_space<vmem>>, vector<1x8xf32>
    %46 = vector.broadcast %45 : vector<1x8xf32> to vector<512x8xf32>
    %47 = arith.addf %44, %46 : vector<512x8xf32>
    %cst_36 = arith.constant 0.000000e+00 : f32
    %48 = vector.broadcast %cst_36 : f32 to vector<512x8xf32>
    %49 = arith.maximumf %47, %48 : vector<512x8xf32>
    %50 = vector.shape_cast %49 : vector<512x8xf32> to vector<256x2x8xf32>
    %cst_37 = arith.constant dense<0xFF800000> : vector<256x8xf32>
    %51 = vector.multi_reduction <maximumf>, %50, %cst_37 [1] : vector<256x2x8xf32> to vector<256x8xf32>
    %52 = vector.shape_cast %51 : vector<256x8xf32> to vector<8x2x16x8xf32>
    %cst_38 = arith.constant dense<0xFF800000> : vector<8x16x8xf32>
    %53 = vector.multi_reduction <maximumf>, %52, %cst_38 [1] : vector<8x2x16x8xf32> to vector<8x16x8xf32>
    %c0_39 = arith.constant 0 : index
    %c0_40 = arith.constant 0 : index
    %c0_41 = arith.constant 0 : index
    %c0_42 = arith.constant 0 : index
    %54 = vector.load %arg6[%c0_39, %c0_40, %c0_41, %c0_42] : memref<1x8x16x8xf32, #tpu.memory_space<vmem>>, vector<1x8x16x8xf32>
    %55 = vector.shape_cast %54 : vector<1x8x16x8xf32> to vector<8x16x8xf32>
    %56 = vector.shape_cast %53 : vector<8x16x8xf32> to vector<1x8x16x8xf32>
    tpu.vector_store %arg6[%c0_39, %c0_40, %c0_41, %c0_42], %56 {strides = array<i32>} : memref<1x8x16x8xf32, #tpu.memory_space<vmem>>, vector<1x8x16x8xf32>,
    return
  }
  func.func @transform_0(%arg0: i32, %arg1: i32) -> (i32, i32, i32, i32) {
    %c0_i32 = arith.constant 0 : i32
    %c0_i32_0 = arith.constant 0 : i32
    %c0_i32_1 = arith.constant 0 : i32
    %c0_i32_2 = arith.constant 0 : i32
    return %arg0, %c0_i32, %c0_i32_0, %c0_i32_1 : i32, i32, i32, i32
  }
  func.func @transform_1(%arg0: i32, %arg1: i32) -> (i32, i32) {
    %c0_i32 = arith.constant 0 : i32
    %c0_i32_0 = arith.constant 0 : i32
    %c0_i32_1 = arith.constant 0 : i32
    return %c0_i32, %c0_i32_0 : i32, i32
  }
  func.func @transform_2(%arg0: i32, %arg1: i32) -> (i32, i32) {
    %c0_i32 = arith.constant 0 : i32
    %c0_i32_0 = arith.constant 0 : i32
    %c0_i32_1 = arith.constant 0 : i32
    return %c0_i32, %c0_i32_0 : i32, i32
  }
  func.func @transform_3(%arg0: i32, %arg1: i32) -> (i32, i32) {
    %c0_i32 = arith.constant 0 : i32
    %c0_i32_0 = arith.constant 0 : i32
    %c0_i32_1 = arith.constant 0 : i32
    return %c0_i32, %c0_i32_0 : i32, i32
  }
  func.func @transform_4(%arg0: i32, %arg1: i32) -> (i32, i32, i32, i32) {
    %c0_i32 = arith.constant 0 : i32
    %c0_i32_0 = arith.constant 0 : i32
    %c0_i32_1 = arith.constant 0 : i32
    return %arg0, %arg1, %c0_i32, %c0_i32_0 : i32, i32, i32, i32
  }
}

</mosaic_0001>

<llo_original>
// kernel: tpu_custom_call.1
$region0: #{tpu_custom_call.1}
  #allocation0 [shape = 'u32[]', space=smem, size = 0x4, offset = 0x4, fixed_abs, tag = 'smem constant byte address 0x4 - core index']
  #allocation1 [shape = 'u32[72,128]{1,0:T(1,128)}', space=vmem, size = 0x9000, scoped, tag = 'internal scratch']
  %s0 = inlined_call_operand.vmem [shape: bf16[2,34,34,4], index: 0, kind: input, shape index: {}]
  %s1 = inlined_call_operand.vmem [shape: bf16[36,8], index: 1, kind: input, shape index: {}]
  %s2 = inlined_call_operand.vmem [shape: f32[1,8], index: 2, kind: input, shape index: {}]
  %s3 = inlined_call_operand.vmem [shape: f32[1,8], index: 3, kind: input, shape index: {}]
  %s4 = inlined_call_operand.vmem [shape: f32[2,16,16,8], index: 4, kind: output, shape index: {}]
  %s5 = sld [smem:[#allocation0]]
  $region49: #{tpu_custom_call.1} parent=0
    _
  %s7 = ssub.s32 1, %s5
  %s8 = scalar_select 0, %s7, %s5
  loop: start=0, step=1, limit=6
  $region2: #{tpu_custom_call.1} parent=0 // loop_pre_header
    _
  $region3: #{tpu_custom_call.1} parent=0 // loop_header
    %s10 = sphi 0, %s14
    %p11 = scmp.ge.s32.totalorder %s10, 6
    %s17 = sphi 0, %s29
    %s18 = sphi 0, %s25
    %s19 = sphi 0, %s17
    %s20 = sphi 0, %s18
    %s21 = sphi 0, %s19
    %s22 = sphi 0, %s20
    %s32 = sphi 0, %s34
    %s35 = sphi 0, %s32
    %s36 = sphi 0, %s35
    %s52 = sphi 0, %s36
    %s56 = sphi 0, %s56
    %s58 = sphi 0, %s56
    %s59 = sphi 0, %s58
    %s73 = sphi 0, %s59
    %s77 = sphi 0, %s77
    %s79 = sphi 0, %s77
    %s80 = sphi 0, %s79
    %s94 = sphi 0, %s80
    %s98 = sphi 0, %s98
    %s100 = sphi 0, %s98
    %s101 = sphi 0, %s100
    %s115 = sphi 0, %s101
    %s123 = sphi 0, %s125
    %s126 = sphi 0, %s123
    %s127 = sphi 0, %s126
    %s143 = sphi 0, %s127
  $region4: #{tpu_custom_call.1} parent=0 // loop_header_branch
    %13 = sbr.rel (%p11) target = $region8
  $region5: #{tpu_custom_call.1} parent=0 // loop_body
    %s15 = ssub.s32 %s10, 1
    %s16 = ssub.s32 %s10, 2
    %s23 = sadd.s32 1, %s18
    %p24 = scmp.ge.s32.totalorder %s23, 2
    %s25 = scalar_select %p24, 0, %s23
    %s26 = sadd.s32 1, %s17
    %s27 = scalar_select %p24, %s26, %s17
    %p28 = scmp.ge.s32.totalorder %s27, 2
    %s29 = scalar_select %p28, 0, %s27
    %s30 = ssub.s32 %s17, %s29
    %p31 = scmp.eq.s32.totalorder %s30, 0
    %s33 = sadd.s32 %s32, 1
    %s34 = scalar_select %p31, %s32, %s33
    %p37 = pneg %p31
    %p38 = scmp.eq.s32.totalorder %s10, 3
    %p39 = por %p37, %p38
    %p40 = scmp.ne.s32.totalorder %s32, %s35
    %p41 = scmp.eq.s32.totalorder %s10, 0
    %p42 = por %p40, %p41
    %p43 = scmp.ne.s32.totalorder %s32, %s35
    %p44 = scmp.eq.s32.totalorder %s15, 3
    %p45 = por %p43, %p44
    %p46 = scmp.ne.s32.totalorder %s35, %s36
    %p47 = scmp.eq.s32.totalorder %s15, 0
    %p48 = por %p46, %p47
    %p49 = scmp.ne.s32.totalorder %s35, %s36
    %p50 = scmp.eq.s32.totalorder %s16, 3
    %p51 = por %p49, %p50
    %p53 = scmp.ne.s32.totalorder %s36, %s52
    %p54 = scmp.eq.s32.totalorder %s16, 0
    %p55 = por %p53, %p54
    %s57 = sadd.s32 %s56, 1
    %p60 = scmp.eq.s32.totalorder %s10, 3
    %p61 = scmp.ne.s32.totalorder %s56, %s58
    %p62 = scmp.eq.s32.totalorder %s10, 0
    %p63 = por %p61, %p62
    %p64 = scmp.ne.s32.totalorder %s56, %s58
    %p65 = scmp.eq.s32.totalorder %s15, 3
    %p66 = por %p64, %p65
    %p67 = scmp.ne.s32.totalorder %s58, %s59
    %p68 = scmp.eq.s32.totalorder %s15, 0
    %p69 = por %p67, %p68
    %p70 = scmp.ne.s32.totalorder %s58, %s59
    %p71 = scmp.eq.s32.totalorder %s16, 3
    %p72 = por %p70, %p71
    %p74 = scmp.ne.s32.totalorder %s59, %s73
    %p75 = scmp.eq.s32.totalorder %s16, 0
    %p76 = por %p74, %p75
    %s78 = sadd.s32 %s77, 1
    %p81 = scmp.eq.s32.totalorder %s10, 3
    %p82 = scmp.ne.s32.totalorder %s77, %s79
    %p83 = scmp.eq.s32.totalorder %s10, 0
    %p84 = por %p82, %p83
    %p85 = scmp.ne.s32.totalorder %s77, %s79
    %p86 = scmp.eq.s32.totalorder %s15, 3
    %p87 = por %p85, %p86
    %p88 = scmp.ne.s32.totalorder %s79, %s80
    %p89 = scmp.eq.s32.totalorder %s15, 0
    %p90 = por %p88, %p89
    %p91 = scmp.ne.s32.totalorder %s79, %s80
    %p92 = scmp.eq.s32.totalorder %s16, 3
    %p93 = por %p91, %p92
    %p95 = scmp.ne.s32.totalorder %s80, %s94
    %p96 = scmp.eq.s32.totalorder %s16, 0
    %p97 = por %p95, %p96
    %s99 = sadd.s32 %s98, 1
    %p102 = scmp.eq.s32.totalorder %s10, 3
    %p103 = scmp.ne.s32.totalorder %s98, %s100
    %p104 = scmp.eq.s32.totalorder %s10, 0
    %p105 = por %p103, %p104
    %p106 = scmp.ne.s32.totalorder %s98, %s100
    %p107 = scmp.eq.s32.totalorder %s15, 3
    %p108 = por %p106, %p107
    %p109 = scmp.ne.s32.totalorder %s100, %s101
    %p110 = scmp.eq.s32.totalorder %s15, 0
    %p111 = por %p109, %p110
    %p112 = scmp.ne.s32.totalorder %s100, %s101
    %p113 = scmp.eq.s32.totalorder %s16, 3
    %p114 = por %p112, %p113
    %p116 = scmp.ne.s32.totalorder %s101, %s115
    %p117 = scmp.eq.s32.totalorder %s16, 0
    %p118 = por %p116, %p117
    %s119 = ssub.s32 %s17, %s29
    %s120 = ssub.s32 %s18, %s25
    %s121 = sor.u32 %s119, %s120
    %p122 = scmp.eq.s32.totalorder %s121, 0
    %s124 = sadd.s32 %s123, 1
    %s125 = scalar_select %p122, %s123, %s124
    %p128 = pneg %p122
    %p129 = scmp.eq.s32.totalorder %s10, 3
    %p130 = por %p128, %p129
    %p131 = scmp.ne.s32.totalorder %s123, %s126
    %p132 = scmp.eq.s32.totalorder %s10, 0
    %p133 = por %p131, %p132
    %p134 = scmp.ne.s32.totalorder %s123, %s126
    %p135 = scmp.eq.s32.totalorder %s15, 3
    %p136 = por %p134, %p135
    %p137 = scmp.ne.s32.totalorder %s126, %s127
    %p138 = scmp.eq.s32.totalorder %s15, 0
    %p139 = por %p137, %p138
    %p140 = scmp.ne.s32.totalorder %s126, %s127
    %p141 = scmp.eq.s32.totalorder %s16, 3
    %p142 = por %p140, %p141
    %p144 = scmp.ne.s32.totalorder %s127, %s143
    %p145 = scmp.eq.s32.totalorder %s16, 0
    %p146 = por %p144, %p145
    %p147 = scmp.le.s32.totalorder 1, %s10
    %p148 = scmp.lt.s32.totalorder %s10, 5
    %p149 = pnand %p147, %p148
    %p150 = pneg %p149
    // Predicated region
    $region9: #{tpu_custom_call.1} parent=5 // pred_check
      _
    $region10: #{tpu_custom_call.1} parent=5 // pred_check_branch
      %152 = sbr.rel (%p149) target = $region12
    $region11: #{tpu_custom_call.1} parent=5 // pred_region
      %s153 = ssub.s32 %s10, 1
      // Predicated region
      $region13: #{tpu_custom_call.1} parent=11 // pred_check
        %p154 = pneg %p69
      $region14: #{tpu_custom_call.1} parent=11 // pred_check_branch
        %156 = sbr.rel (%p154) target = $region16
      $region15: #{tpu_custom_call.1} parent=11 // pred_region
        _
      $region16: #{tpu_custom_call.1} parent=11 // pred_fallthru
        _
      // Predicated region
      $region17: #{tpu_custom_call.1} parent=11 // pred_check
        %p157 = pneg %p90
      $region18: #{tpu_custom_call.1} parent=11 // pred_check_branch
        %159 = sbr.rel (%p157) target = $region20
      $region19: #{tpu_custom_call.1} parent=11 // pred_region
        _
      $region20: #{tpu_custom_call.1} parent=11 // pred_fallthru
        _
      // Predicated region
      $region21: #{tpu_custom_call.1} parent=11 // pred_check
        %p160 = pneg %p111
      $region22: #{tpu_custom_call.1} parent=11 // pred_check_branch
        %162 = sbr.rel (%p160) target = $region24
      $region23: #{tpu_custom_call.1} parent=11 // pred_region
        _
      $region24: #{tpu_custom_call.1} parent=11 // pred_fallthru
        _
    $region12: #{tpu_custom_call.1} parent=5 // pred_fallthru
      _
    %p163 = scmp.lt.s32.totalorder %s10, 4
    // Predicated region
    $region25: #{tpu_custom_call.1} parent=5 // pred_check
      %p164 = pneg %p163
    $region26: #{tpu_custom_call.1} parent=5 // pred_check_branch
      %166 = sbr.rel (%p164) target = $region28
    $region27: #{tpu_custom_call.1} parent=5 // pred_region
      // Predicated region
      $region29: #{tpu_custom_call.1} parent=27 // pred_check
        %p167 = pneg %p42
      $region30: #{tpu_custom_call.1} parent=27 // pred_check_branch
        %169 = sbr.rel (%p167) target = $region32
      $region31: #{tpu_custom_call.1} parent=27 // pred_region
        %p170 = scmp.lt.s32.totalorder %s17, 1
        %s171 = scalar_select %p170, %s17, 1
        %s172 = smul.addr %s171, 170
        %s173 = smul.addr %s172, 4
        %s174 = scalar_lea.vmem %s0, %s173
      $region32: #{tpu_custom_call.1} parent=27 // pred_fallthru
        _
    $region28: #{tpu_custom_call.1} parent=5 // pred_fallthru
      _
    %p175 = scmp.le.s32.totalorder 1, %s10
    %p176 = scmp.lt.s32.totalorder %s10, 5
    %p177 = pnand %p175, %p176
    %p178 = pneg %p177
    // Predicated region
    $region33: #{tpu_custom_call.1} parent=5 // pred_check
      _
    $region34: #{tpu_custom_call.1} parent=5 // pred_check_branch
      %180 = sbr.rel (%p177) target = $region36
    $region35: #{tpu_custom_call.1} parent=5 // pred_region
      %s181 = ssub.s32 %s10, 1
      %p182 = scmp.lt.s32.totalorder %s19, 1
      %s183 = scalar_select %p182, %s19, 1
      %s184 = smul.addr %s183, 170
      %s185 = smul.addr %s184, 4
      %s186 = scalar_lea.vmem %s0, %s185
      %p187 = pneg %p48
      %p188 = pneg %p45
      %p189 = pneg %p69
      %p190 = pneg %p66
      %p191 = pneg %p90
      %p192 = pneg %p87
      %p193 = pneg %p111
      %p194 = pneg %p108
      %p195 = pneg %p139
      %p196 = pneg %p136
      %s197 = smul.u32 8, %s20
      %p198 = scmp.lt.s32.totalorder %s19, 1
      %s199 = scalar_select %p198, %s19, 1
      %p200 = scmp.lt.s32.totalorder %s197, 15
      %s201 = scalar_select %p200, %s197, 15
      %s202 = smul.addr %s201, 2
      %s203 = smul.addr %s199, 32
      %s204 = sadd.s32 %s202, %s203
      %s205 = smul.addr %s204, 8
      %s206 = scalar_lea.vmem %s4, %s205
      %p207 = scmp.lt.s32.totalorder %s19, 1
      %s208 = scalar_select %p207, %s19, 1
      %s209 = smul.addr %s208, 170
      %s210 = smul.addr %s209, 4
      %s211 = scalar_lea.vmem %s0, %s210
      %s212 = smul.u32 8, %s20
      %p213 = scmp.lt.s32.totalorder %s19, 1
      %s214 = scalar_select %p213, %s19, 1
      %p215 = scmp.lt.s32.totalorder %s212, 15
      %s216 = scalar_select %p215, %s212, 15
      %s217 = smul.addr %s216, 2
      %s218 = smul.addr %s214, 32
      %s219 = sadd.s32 %s217, %s218
      %s220 = smul.addr %s219, 8
      %s221 = scalar_lea.vmem %s4, %s220
      %s222 = smul.u32 8, %s20
      %s224 = smul.u32 %s20, 16
      %s225 = smul.u32 %s224, 5
      %s226 = smul.addr %s225, 4
      %s227 = scalar_lea.vmem %s211, %s226
      %v228 = vld [vmem:[%s227] sm:$0xf]
      %v229 = vld [vmem:[%s227 + $0x4] sm:$0xf]
      %v230 = vld [vmem:[%s227 + $0x8] sm:$0xf]
      %v231 = vld [vmem:[%s227 + $0xc] sm:$0xf]
      %v232 = vld [vmem:[%s227 + $0x14] sm:$0xf]
      %v233 = vld [vmem:[%s227 + $0x18] sm:$0xf]
      %v234 = vld [vmem:[%s227 + $0x1c] sm:$0xf]
      %v235 = vld [vmem:[%s227 + $0x20] sm:$0xf]
      %v236 = vld [vmem:[%s227 + $0x28] sm:$0xf]
      %v237 = vld [vmem:[%s227 + $0x2c] sm:$0xf]
      %v238 = vld [vmem:[%s227 + $0x30] sm:$0xf]
      %v239 = vld [vmem:[%s227 + $0x34] sm:$0xf]
      %v240 = vld [vmem:[%s227 + $0x3c] sm:$0xf]
      %v241 = vld [vmem:[%s227 + $0x40] sm:$0xf]
      %v242 = vld [vmem:[%s227 + $0x44] sm:$0xf]
      %v243 = vld [vmem:[%s227 + $0x48] sm:$0xf]
      %v244 = vld [vmem:[%s227 + $0x50] sm:$0xf]
      %v245 = vld [vmem:[%s227 + $0x54] sm:$0xf]
      %v246 = vld [vmem:[%s227 + $0x58] sm:$0xf]
      %v247 = vld [vmem:[%s227 + $0x5c] sm:$0xf]
      %v248 = vld [vmem:[%s227 + $0x64] sm:$0xf]
      %v249 = vld [vmem:[%s227 + $0x68] sm:$0xf]
      %v250 = vld [vmem:[%s227 + $0x6c] sm:$0xf]
      %v251 = vld [vmem:[%s227 + $0x70] sm:$0xf]
      %v252 = vld [vmem:[%s227 + $0x78] sm:$0xf]
      %v253 = vld [vmem:[%s227 + $0x7c] sm:$0xf]
      %v254 = vld [vmem:[%s227 + $0x80] sm:$0xf]
      %v255 = vld [vmem:[%s227 + $0x84] sm:$0xf]
      %v256 = vld [vmem:[%s227 + $0x8c] sm:$0xf]
      %v257 = vld [vmem:[%s227 + $0x90] sm:$0xf]
      %v258 = vld [vmem:[%s227 + $0x94] sm:$0xf]
      %v259 = vld [vmem:[%s227 + $0x98] sm:$0xf]
      %v260 = vld [vmem:[%s227 + $0xa0] sm:$0xf]
      %v261 = vld [vmem:[%s227 + $0xa4] sm:$0xf]
      %v262 = vld [vmem:[%s227 + $0xa8] sm:$0xf]
      %v263 = vld [vmem:[%s227 + $0xac] sm:$0xf]
      %v264 = vld [vmem:[%s227 + $0xb4] sm:$0xf]
      %v265 = vld [vmem:[%s227 + $0xb8] sm:$0xf]
      %v266 = vld [vmem:[%s227 + $0xbc] sm:$0xf]
      %v267 = vld [vmem:[%s227 + $0xc0] sm:$0xf]
      %v268 = vld [vmem:[%s227 + $0xc8] sm:$0xf]
      %v269 = vld [vmem:[%s227 + $0xcc] sm:$0xf]
      %v270 = vld [vmem:[%s227 + $0xd0] sm:$0xf]
      %v271 = vld [vmem:[%s227 + $0xd4] sm:$0xf]
      %v272 = vld [vmem:[%s227 + $0xdc] sm:$0xf]
      %v273 = vld [vmem:[%s227 + $0xe0] sm:$0xf]
      %v274 = vld [vmem:[%s227 + $0xe4] sm:$0xf]
      %v275 = vld [vmem:[%s227 + $0xe8] sm:$0xf]
      %v276 = vld [vmem:[%s227 + $0xf0] sm:$0xf]
      %v277 = vld [vmem:[%s227 + $0xf4] sm:$0xf]
      %v278 = vld [vmem:[%s227 + $0xf8] sm:$0xf]
      %v279 = vld [vmem:[%s227 + $0xfc] sm:$0xf]
      %v280 = vld [vmem:[%s227 + $0x104] sm:$0xf]
      %v281 = vld [vmem:[%s227 + $0x108] sm:$0xf]
      %v282 = vld [vmem:[%s227 + $0x10c] sm:$0xf]
      %v283 = vld [vmem:[%s227 + $0x110] sm:$0xf]
      %v284 = vld [vmem:[%s227 + $0x118] sm:$0xf]
      %v285 = vld [vmem:[%s227 + $0x11c] sm:$0xf]
      %v286 = vld [vmem:[%s227 + $0x120] sm:$0xf]
      %v287 = vld [vmem:[%s227 + $0x124] sm:$0xf]
      %v288 = vld [vmem:[%s227 + $0x12c] sm:$0xf]
      %v289 = vld [vmem:[%s227 + $0x130] sm:$0xf]
      %v290 = vld [vmem:[%s227 + $0x134] sm:$0xf]
      %v291 = vld [vmem:[%s227 + $0x138] sm:$0xf]
      %v292 = vld [vmem:[%s227 + $0x10] sm:$0x1]
      %v293 = vld [vmem:[%s227 + $0x24] sm:$0x1]
      %v294 = vld [vmem:[%s227 + $0x38] sm:$0x1]
      %v295 = vld [vmem:[%s227 + $0x4c] sm:$0x1]
      %v296 = vld [vmem:[%s227 + $0x60] sm:$0x1]
      %v297 = vld [vmem:[%s227 + $0x74] sm:$0x1]
      %v298 = vld [vmem:[%s227 + $0x88] sm:$0x1]
      %v299 = vld [vmem:[%s227 + $0x9c] sm:$0x1]
      %v300 = vld [vmem:[%s227 + $0xb0] sm:$0x1]
      %v301 = vld [vmem:[%s227 + $0xc4] sm:$0x1]
      %v302 = vld [vmem:[%s227 + $0xd8] sm:$0x1]
      %v303 = vld [vmem:[%s227 + $0xec] sm:$0x1]
      %v304 = vld [vmem:[%s227 + $0x100] sm:$0x1]
      %v305 = vld [vmem:[%s227 + $0x114] sm:$0x1]
      %v306 = vld [vmem:[%s227 + $0x128] sm:$0x1]
      %v307 = vld [vmem:[%s227 + $0x13c] sm:$0x1]
      %v308 = vld [vmem:[%s227] sm:$0xe]
      %v309 = vld [vmem:[%s227 + $0x14] sm:$0xe]
      %v310 = vld [vmem:[%s227 + $0x28] sm:$0xe]
      %v311 = vld [vmem:[%s227 + $0x3c] sm:$0xe]
      %v312 = vld [vmem:[%s227 + $0x50] sm:$0xe]
      %v313 = vld [vmem:[%s227 + $0x64] sm:$0xe]
      %v314 = vld [vmem:[%s227 + $0x78] sm:$0xe]
      %v315 = vld [vmem:[%s227 + $0x8c] sm:$0xe]
      %v316 = vld [vmem:[%s227 + $0xa0] sm:$0xe]
      %v317 = vld [vmem:[%s227 + $0xb4] sm:$0xe]
      %v318 = vld [vmem:[%s227 + $0xc8] sm:$0xe]
      %v319 = vld [vmem:[%s227 + $0xdc] sm:$0xe]
      %v320 = vld [vmem:[%s227 + $0xf0] sm:$0xe]
      %v321 = vld [vmem:[%s227 + $0x104] sm:$0xe]
      %v322 = vld [vmem:[%s227 + $0x118] sm:$0xe]
      %v323 = vld [vmem:[%s227 + $0x12c] sm:$0xe]
      %s324 = sadd.s32 %s224, 1
      %s325 = smul.u32 %s324, 5
      %s326 = smul.addr %s325, 4
      %s327 = scalar_lea.vmem %s211, %s326
      %v328 = vld [vmem:[%s327] sm:$0xf]
      %v329 = vld [vmem:[%s327 + $0x4] sm:$0xf]
      %v330 = vld [vmem:[%s327 + $0x8] sm:$0xf]
      %v331 = vld [vmem:[%s327 + $0xc] sm:$0xf]
      %v332 = vld [vmem:[%s327 + $0x14] sm:$0xf]
      %v333 = vld [vmem:[%s327 + $0x18] sm:$0xf]
      %v334 = vld [vmem:[%s327 + $0x1c] sm:$0xf]
      %v335 = vld [vmem:[%s327 + $0x20] sm:$0xf]
      %v336 = vld [vmem:[%s327 + $0x28] sm:$0xf]
      %v337 = vld [vmem:[%s327 + $0x2c] sm:$0xf]
      %v338 = vld [vmem:[%s327 + $0x30] sm:$0xf]
      %v339 = vld [vmem:[%s327 + $0x34] sm:$0xf]
      %v340 = vld [vmem:[%s327 + $0x3c] sm:$0xf]
      %v341 = vld [vmem:[%s327 + $0x40] sm:$0xf]
      %v342 = vld [vmem:[%s327 + $0x44] sm:$0xf]
      %v343 = vld [vmem:[%s327 + $0x48] sm:$0xf]
      %v344 = vld [vmem:[%s327 + $0x50] sm:$0xf]
      %v345 = vld [vmem:[%s327 + $0x54] sm:$0xf]
      %v346 = vld [vmem:[%s327 + $0x58] sm:$0xf]
      %v347 = vld [vmem:[%s327 + $0x5c] sm:$0xf]
      %v348 = vld [vmem:[%s327 + $0x64] sm:$0xf]
      %v349 = vld [vmem:[%s327 + $0x68] sm:$0xf]
      %v350 = vld [vmem:[%s327 + $0x6c] sm:$0xf]
      %v351 = vld [vmem:[%s327 + $0x70] sm:$0xf]
      %v352 = vld [vmem:[%s327 + $0x78] sm:$0xf]
      %v353 = vld [vmem:[%s327 + $0x7c] sm:$0xf]
      %v354 = vld [vmem:[%s327 + $0x80] sm:$0xf]
      %v355 = vld [vmem:[%s327 + $0x84] sm:$0xf]
      %v356 = vld [vmem:[%s327 + $0x8c] sm:$0xf]
      %v357 = vld [vmem:[%s327 + $0x90] sm:$0xf]
      %v358 = vld [vmem:[%s327 + $0x94] sm:$0xf]
      %v359 = vld [vmem:[%s327 + $0x98] sm:$0xf]
      %v360 = vld [vmem:[%s327 + $0xa0] sm:$0xf]
      %v361 = vld [vmem:[%s327 + $0xa4] sm:$0xf]
      %v362 = vld [vmem:[%s327 + $0xa8] sm:$0xf]
      %v363 = vld [vmem:[%s327 + $0xac] sm:$0xf]
      %v364 = vld [vmem:[%s327 + $0xb4] sm:$0xf]
      %v365 = vld [vmem:[%s327 + $0xb8] sm:$0xf]
      %v366 = vld [vmem:[%s327 + $0xbc] sm:$0xf]
      %v367 = vld [vmem:[%s327 + $0xc0] sm:$0xf]
      %v368 = vld [vmem:[%s327 + $0xc8] sm:$0xf]
      %v369 = vld [vmem:[%s327 + $0xcc] sm:$0xf]
      %v370 = vld [vmem:[%s327 + $0xd0] sm:$0xf]
      %v371 = vld [vmem:[%s327 + $0xd4] sm:$0xf]
      %v372 = vld [vmem:[%s327 + $0xdc] sm:$0xf]
      %v373 = vld [vmem:[%s327 + $0xe0] sm:$0xf]
      %v374 = vld [vmem:[%s327 + $0xe4] sm:$0xf]
      %v375 = vld [vmem:[%s327 + $0xe8] sm:$0xf]
      %v376 = vld [vmem:[%s327 + $0xf0] sm:$0xf]
      %v377 = vld [vmem:[%s327 + $0xf4] sm:$0xf]
      %v378 = vld [vmem:[%s327 + $0xf8] sm:$0xf]
      %v379 = vld [vmem:[%s327 + $0xfc] sm:$0xf]
      %v380 = vld [vmem:[%s327 + $0x104] sm:$0xf]
      %v381 = vld [vmem:[%s327 + $0x108] sm:$0xf]
      %v382 = vld [vmem:[%s327 + $0x10c] sm:$0xf]
      %v383 = vld [vmem:[%s327 + $0x110] sm:$0xf]
      %v384 = vld [vmem:[%s327 + $0x118] sm:$0xf]
      %v385 = vld [vmem:[%s327 + $0x11c] sm:$0xf]
      %v386 = vld [vmem:[%s327 + $0x120] sm:$0xf]
      %v387 = vld [vmem:[%s327 + $0x124] sm:$0xf]
      %v388 = vld [vmem:[%s327 + $0x12c] sm:$0xf]
      %v389 = vld [vmem:[%s327 + $0x130] sm:$0xf]
      %v390 = vld [vmem:[%s327 + $0x134] sm:$0xf]
      %v391 = vld [vmem:[%s327 + $0x138] sm:$0xf]
      %v392 = vld [vmem:[%s327 + $0x10] sm:$0x1]
      %v393 = vld [vmem:[%s327 + $0x24] sm:$0x1]
      %v394 = vld [vmem:[%s327 + $0x38] sm:$0x1]
      %v395 = vld [vmem:[%s327 + $0x4c] sm:$0x1]
      %v396 = vld [vmem:[%s327 + $0x60] sm:$0x1]
      %v397 = vld [vmem:[%s327 + $0x74] sm:$0x1]
      %v398 = vld [vmem:[%s327 + $0x88] sm:$0x1]
      %v399 = vld [vmem:[%s327 + $0x9c] sm:$0x1]
      %v400 = vld [vmem:[%s327 + $0xb0] sm:$0x1]
      %v401 = vld [vmem:[%s327 + $0xc4] sm:$0x1]
      %v402 = vld [vmem:[%s327 + $0xd8] sm:$0x1]
      %v403 = vld [vmem:[%s327 + $0xec] sm:$0x1]
      %v404 = vld [vmem:[%s327 + $0x100] sm:$0x1]
      %v405 = vld [vmem:[%s327 + $0x114] sm:$0x1]
      %v406 = vld [vmem:[%s327 + $0x128] sm:$0x1]
      %v407 = vld [vmem:[%s327 + $0x13c] sm:$0x1]
      %v408 = vld [vmem:[%s327] sm:$0xe]
      %v409 = vld [vmem:[%s327 + $0x14] sm:$0xe]
      %v410 = vld [vmem:[%s327 + $0x28] sm:$0xe]
      %v411 = vld [vmem:[%s327 + $0x3c] sm:$0xe]
      %v412 = vld [vmem:[%s327 + $0x50] sm:$0xe]
      %v413 = vld [vmem:[%s327 + $0x64] sm:$0xe]
      %v414 = vld [vmem:[%s327 + $0x78] sm:$0xe]
      %v415 = vld [vmem:[%s327 + $0x8c] sm:$0xe]
      %v416 = vld [vmem:[%s327 + $0xa0] sm:$0xe]
      %v417 = vld [vmem:[%s327 + $0xb4] sm:$0xe]
      %v418 = vld [vmem:[%s327 + $0xc8] sm:$0xe]
      %v419 = vld [vmem:[%s327 + $0xdc] sm:$0xe]
      %v420 = vld [vmem:[%s327 + $0xf0] sm:$0xe]
      %v421 = vld [vmem:[%s327 + $0x104] sm:$0xe]
      %v422 = vld [vmem:[%s327 + $0x118] sm:$0xe]
      %v423 = vld [vmem:[%s327 + $0x12c] sm:$0xe]
      %s424 = sadd.s32 %s224, 2
      %s425 = smul.u32 %s424, 5
      %s426 = smul.addr %s425, 4
      %s427 = scalar_lea.vmem %s211, %s426
      %v428 = vld [vmem:[%s427] sm:$0xf]
      %v429 = vld [vmem:[%s427 + $0x4] sm:$0xf]
      %v430 = vld [vmem:[%s427 + $0x8] sm:$0xf]
      %v431 = vld [vmem:[%s427 + $0xc] sm:$0xf]
      %v432 = vld [vmem:[%s427 + $0x14] sm:$0xf]
      %v433 = vld [vmem:[%s427 + $0x18] sm:$0xf]
      %v434 = vld [vmem:[%s427 + $0x1c] sm:$0xf]
      %v435 = vld [vmem:[%s427 + $0x20] sm:$0xf]
      %v436 = vld [vmem:[%s427 + $0x28] sm:$0xf]
      %v437 = vld [vmem:[%s427 + $0x2c] sm:$0xf]
      %v438 = vld [vmem:[%s427 + $0x30] sm:$0xf]
      %v439 = vld [vmem:[%s427 + $0x34] sm:$0xf]
      %v440 = vld [vmem:[%s427 + $0x3c] sm:$0xf]
      %v441 = vld [vmem:[%s427 + $0x40] sm:$0xf]
      %v442 = vld [vmem:[%s427 + $0x44] sm:$0xf]
      %v443 = vld [vmem:[%s427 + $0x48] sm:$0xf]
      %v444 = vld [vmem:[%s427 + $0x50] sm:$0xf]
      %v445 = vld [vmem:[%s427 + $0x54] sm:$0xf]
      %v446 = vld [vmem:[%s427 + $0x58] sm:$0xf]
      %v447 = vld [vmem:[%s427 + $0x5c] sm:$0xf]
      %v448 = vld [vmem:[%s427 + $0x64] sm:$0xf]
      %v449 = vld [vmem:[%s427 + $0x68] sm:$0xf]
      %v450 = vld [vmem:[%s427 + $0x6c] sm:$0xf]
      %v451 = vld [vmem:[%s427 + $0x70] sm:$0xf]
      %v452 = vld [vmem:[%s427 + $0x78] sm:$0xf]
      %v453 = vld [vmem:[%s427 + $0x7c] sm:$0xf]
      %v454 = vld [vmem:[%s427 + $0x80] sm:$0xf]
      %v455 = vld [vmem:[%s427 + $0x84] sm:$0xf]
      %v456 = vld [vmem:[%s427 + $0x8c] sm:$0xf]
      %v457 = vld [vmem:[%s427 + $0x90] sm:$0xf]
      %v458 = vld [vmem:[%s427 + $0x94] sm:$0xf]
      %v459 = vld [vmem:[%s427 + $0x98] sm:$0xf]
      %v460 = vld [vmem:[%s427 + $0xa0] sm:$0xf]
      %v461 = vld [vmem:[%s427 + $0xa4] sm:$0xf]
      %v462 = vld [vmem:[%s427 + $0xa8] sm:$0xf]
      %v463 = vld [vmem:[%s427 + $0xac] sm:$0xf]
      %v464 = vld [vmem:[%s427 + $0xb4] sm:$0xf]
      %v465 = vld [vmem:[%s427 + $0xb8] sm:$0xf]
      %v466 = vld [vmem:[%s427 + $0xbc] sm:$0xf]
      %v467 = vld [vmem:[%s427 + $0xc0] sm:$0xf]
      %v468 = vld [vmem:[%s427 + $0xc8] sm:$0xf]
      %v469 = vld [vmem:[%s427 + $0xcc] sm:$0xf]
      %v470 = vld [vmem:[%s427 + $0xd0] sm:$0xf]
      %v471 = vld [vmem:[%s427 + $0xd4] sm:$0xf]
      %v472 = vld [vmem:[%s427 + $0xdc] sm:$0xf]
      %v473 = vld [vmem:[%s427 + $0xe0] sm:$0xf]
      %v474 = vld [vmem:[%s427 + $0xe4] sm:$0xf]
      %v475 = vld [vmem:[%s427 + $0xe8] sm:$0xf]
      %v476 = vld [vmem:[%s427 + $0xf0] sm:$0xf]
      %v477 = vld [vmem:[%s427 + $0xf4] sm:$0xf]
      %v478 = vld [vmem:[%s427 + $0xf8] sm:$0xf]
      %v479 = vld [vmem:[%s427 + $0xfc] sm:$0xf]
      %v480 = vld [vmem:[%s427 + $0x104] sm:$0xf]
      %v481 = vld [vmem:[%s427 + $0x108] sm:$0xf]
      %v482 = vld [vmem:[%s427 + $0x10c] sm:$0xf]
      %v483 = vld [vmem:[%s427 + $0x110] sm:$0xf]
      %v484 = vld [vmem:[%s427 + $0x118] sm:$0xf]
      %v485 = vld [vmem:[%s427 + $0x11c] sm:$0xf]
      %v486 = vld [vmem:[%s427 + $0x120] sm:$0xf]
      %v487 = vld [vmem:[%s427 + $0x124] sm:$0xf]
      %v488 = vld [vmem:[%s427 + $0x12c] sm:$0xf]
      %v489 = vld [vmem:[%s427 + $0x130] sm:$0xf]
      %v490 = vld [vmem:[%s427 + $0x134] sm:$0xf]
      %v491 = vld [vmem:[%s427 + $0x138] sm:$0xf]
      %v492 = vld [vmem:[%s427 + $0x10] sm:$0x1]
      %v493 = vld [vmem:[%s427 + $0x24] sm:$0x1]
      %v494 = vld [vmem:[%s427 + $0x38] sm:$0x1]
      %v495 = vld [vmem:[%s427 + $0x4c] sm:$0x1]
      %v496 = vld [vmem:[%s427 + $0x60] sm:$0x1]
      %v497 = vld [vmem:[%s427 + $0x74] sm:$0x1]
      %v498 = vld [vmem:[%s427 + $0x88] sm:$0x1]
      %v499 = vld [vmem:[%s427 + $0x9c] sm:$0x1]
      %v500 = vld [vmem:[%s427 + $0xb0] sm:$0x1]
      %v501 = vld [vmem:[%s427 + $0xc4] sm:$0x1]
      %v502 = vld [vmem:[%s427 + $0xd8] sm:$0x1]
      %v503 = vld [vmem:[%s427 + $0xec] sm:$0x1]
      %v504 = vld [vmem:[%s427 + $0x100] sm:$0x1]
      %v505 = vld [vmem:[%s427 + $0x114] sm:$0x1]
      %v506 = vld [vmem:[%s427 + $0x128] sm:$0x1]
      %v507 = vld [vmem:[%s427 + $0x13c] sm:$0x1]
      %v508 = vld [vmem:[%s427] sm:$0xe]
      %v509 = vld [vmem:[%s427 + $0x14] sm:$0xe]
      %v510 = vld [vmem:[%s427 + $0x28] sm:$0xe]
      %v511 = vld [vmem:[%s427 + $0x3c] sm:$0xe]
      %v512 = vld [vmem:[%s427 + $0x50] sm:$0xe]
      %v513 = vld [vmem:[%s427 + $0x64] sm:$0xe]
      %v514 = vld [vmem:[%s427 + $0x78] sm:$0xe]
      %v515 = vld [vmem:[%s427 + $0x8c] sm:$0xe]
      %v516 = vld [vmem:[%s427 + $0xa0] sm:$0xe]
      %v517 = vld [vmem:[%s427 + $0xb4] sm:$0xe]
      %v518 = vld [vmem:[%s427 + $0xc8] sm:$0xe]
      %v519 = vld [vmem:[%s427 + $0xdc] sm:$0xe]
      %v520 = vld [vmem:[%s427 + $0xf0] sm:$0xe]
      %v521 = vld [vmem:[%s427 + $0x104] sm:$0xe]
      %v522 = vld [vmem:[%s427 + $0x118] sm:$0xe]
      %v523 = vld [vmem:[%s427 + $0x12c] sm:$0xe]
      %v588 = vunpack.c.l.b16 %v228
      %v589 = vunpack.c.l.b16 %v229
      %v590 = vunpack.c.l.b16 %v230
      %v591 = vunpack.c.l.b16 %v231
      %v592 = vunpack.c.l.b16 %v232
      %v593 = vunpack.c.l.b16 %v233
      %v594 = vunpack.c.l.b16 %v234
      %v595 = vunpack.c.l.b16 %v235
      %v596 = vunpack.c.l.b16 %v236
      %v597 = vunpack.c.l.b16 %v237
      %v598 = vunpack.c.l.b16 %v238
      %v599 = vunpack.c.l.b16 %v239
      %v600 = vunpack.c.l.b16 %v240
      %v601 = vunpack.c.l.b16 %v241
      %v602 = vunpack.c.l.b16 %v242
      %v603 = vunpack.c.l.b16 %v243
      %v604 = vunpack.c.l.b16 %v244
      %v605 = vunpack.c.l.b16 %v245
      %v606 = vunpack.c.l.b16 %v246
      %v607 = vunpack.c.l.b16 %v247
      %v608 = vunpack.c.l.b16 %v248
      %v609 = vunpack.c.l.b16 %v249
      %v610 = vunpack.c.l.b16 %v250
      %v611 = vunpack.c.l.b16 %v251
      %v612 = vunpack.c.l.b16 %v252
      %v613 = vunpack.c.l.b16 %v253
      %v614 = vunpack.c.l.b16 %v254
      %v615 = vunpack.c.l.b16 %v255
      %v616 = vunpack.c.l.b16 %v256
      %v617 = vunpack.c.l.b16 %v257
      %v618 = vunpack.c.l.b16 %v258
      %v619 = vunpack.c.l.b16 %v259
      %v620 = vunpack.c.l.b16 %v260
      %v621 = vunpack.c.l.b16 %v261
      %v622 = vunpack.c.l.b16 %v262
      %v623 = vunpack.c.l.b16 %v263
      %v624 = vunpack.c.l.b16 %v264
      %v625 = vunpack.c.l.b16 %v265
      %v626 = vunpack.c.l.b16 %v266
      %v627 = vunpack.c.l.b16 %v267
      %v628 = vunpack.c.l.b16 %v268
      %v629 = vunpack.c.l.b16 %v269
      %v630 = vunpack.c.l.b16 %v270
      %v631 = vunpack.c.l.b16 %v271
      %v632 = vunpack.c.l.b16 %v272
      %v633 = vunpack.c.l.b16 %v273
      %v634 = vunpack.c.l.b16 %v274
      %v635 = vunpack.c.l.b16 %v275
      %v636 = vunpack.c.l.b16 %v276
      %v637 = vunpack.c.l.b16 %v277
      %v638 = vunpack.c.l.b16 %v278
      %v639 = vunpack.c.l.b16 %v279
      %v640 = vunpack.c.l.b16 %v280
      %v641 = vunpack.c.l.b16 %v281
      %v642 = vunpack.c.l.b16 %v282
      %v643 = vunpack.c.l.b16 %v283
      %v644 = vunpack.c.l.b16 %v284
      %v645 = vunpack.c.l.b16 %v285
      %v646 = vunpack.c.l.b16 %v286
      %v647 = vunpack.c.l.b16 %v287
      %v648 = vunpack.c.l.b16 %v288
      %v649 = vunpack.c.l.b16 %v289
      %v650 = vunpack.c.l.b16 %v290
      %v651 = vunpack.c.l.b16 %v291
      %v652 = vpack.c.b16 %v589, %v588
      %v653 = vpack.c.b16 %v591, %v590
      %v654 = vpack.c.b16 %v593, %v592
      %v655 = vpack.c.b16 %v595, %v594
      %v656 = vpack.c.b16 %v597, %v596
      %v657 = vpack.c.b16 %v599, %v598
      %v658 = vpack.c.b16 %v601, %v600
      %v659 = vpack.c.b16 %v603, %v602
      %v660 = vpack.c.b16 %v605, %v604
      %v661 = vpack.c.b16 %v607, %v606
      %v662 = vpack.c.b16 %v609, %v608
      %v663 = vpack.c.b16 %v611, %v610
      %v664 = vpack.c.b16 %v613, %v612
      %v665 = vpack.c.b16 %v615, %v614
      %v666 = vpack.c.b16 %v617, %v616
      %v667 = vpack.c.b16 %v619, %v618
      %v668 = vpack.c.b16 %v621, %v620
      %v669 = vpack.c.b16 %v623, %v622
      %v670 = vpack.c.b16 %v625, %v624
      %v671 = vpack.c.b16 %v627, %v626
      %v672 = vpack.c.b16 %v629, %v628
      %v673 = vpack.c.b16 %v631, %v630
      %v674 = vpack.c.b16 %v633, %v632
      %v675 = vpack.c.b16 %v635, %v634
      %v676 = vpack.c.b16 %v637, %v636
      %v677 = vpack.c.b16 %v639, %v638
      %v678 = vpack.c.b16 %v641, %v640
      %v679 = vpack.c.b16 %v643, %v642
      %v680 = vpack.c.b16 %v645, %v644
      %v681 = vpack.c.b16 %v647, %v646
      %v682 = vpack.c.b16 %v649, %v648
      %v683 = vpack.c.b16 %v651, %v650
      %v700 = vunpack.c.l.b16 %v292
      %v701 = vunpack.c.l.b16 %v293
      %v702 = vunpack.c.l.b16 %v294
      %v703 = vunpack.c.l.b16 %v295
      %v704 = vunpack.c.l.b16 %v296
      %v705 = vunpack.c.l.b16 %v297
      %v706 = vunpack.c.l.b16 %v298
      %v707 = vunpack.c.l.b16 %v299
      %v708 = vunpack.c.l.b16 %v300
      %v709 = vunpack.c.l.b16 %v301
      %v710 = vunpack.c.l.b16 %v302
      %v711 = vunpack.c.l.b16 %v303
      %v712 = vunpack.c.l.b16 %v304
      %v713 = vunpack.c.l.b16 %v305
      %v714 = vunpack.c.l.b16 %v306
      %v715 = vunpack.c.l.b16 %v307
      %v716 = vpack.c.b16 %v700, %v700
      %v717 = vpack.c.b16 %v701, %v701
      %v718 = vpack.c.b16 %v702, %v702
      %v719 = vpack.c.b16 %v703, %v703
      %v720 = vpack.c.b16 %v704, %v704
      %v721 = vpack.c.b16 %v705, %v705
      %v722 = vpack.c.b16 %v706, %v706
      %v723 = vpack.c.b16 %v707, %v707
      %v724 = vpack.c.b16 %v708, %v708
      %v725 = vpack.c.b16 %v709, %v709
      %v726 = vpack.c.b16 %v710, %v710
      %v727 = vpack.c.b16 %v711, %v711
      %v728 = vpack.c.b16 %v712, %v712
      %v729 = vpack.c.b16 %v713, %v713
      %v730 = vpack.c.b16 %v714, %v714
      %v731 = vpack.c.b16 %v715, %v715
      %vm732 = vsmask.f32 7424
      %v734 = vshrl.u32 %v652, 16
      %v736 = vshll.u32 %v652, 16
      %v738 = vrot.slane %v736, 1
      %v739 = vor.u32 %v734, %v738
      %v741 = vshll.u32 %v653, 16
      %v743 = vrot.slane %v741, 1
      %v744 = vsel %vm732, %v739, %v743
      %v745 = vshrl.u32 %v653, 16
      %v747 = vor.u32 %v745, %v743
      %v749 = vshll.u32 %v716, 16
      %v751 = vrot.slane %v749, 1
      %v752 = vsel %vm732, %v747, %v751
      %v754 = vshrl.u32 %v654, 16
      %v756 = vshll.u32 %v654, 16
      %v758 = vrot.slane %v756, 1
      %v759 = vor.u32 %v754, %v758
      %v761 = vshll.u32 %v655, 16
      %v763 = vrot.slane %v761, 1
      %v764 = vsel %vm732, %v759, %v763
      %v765 = vshrl.u32 %v655, 16
      %v767 = vor.u32 %v765, %v763
      %v769 = vshll.u32 %v717, 16
      %v771 = vrot.slane %v769, 1
      %v772 = vsel %vm732, %v767, %v771
      %v774 = vshrl.u32 %v656, 16
      %v776 = vshll.u32 %v656, 16
      %v778 = vrot.slane %v776, 1
      %v779 = vor.u32 %v774, %v778
      %v781 = vshll.u32 %v657, 16
      %v783 = vrot.slane %v781, 1
      %v784 = vsel %vm732, %v779, %v783
      %v785 = vshrl.u32 %v657, 16
      %v787 = vor.u32 %v785, %v783
      %v789 = vshll.u32 %v718, 16
      %v791 = vrot.slane %v789, 1
      %v792 = vsel %vm732, %v787, %v791
      %v794 = vshrl.u32 %v658, 16
      %v796 = vshll.u32 %v658, 16
      %v798 = vrot.slane %v796, 1
      %v799 = vor.u32 %v794, %v798
      %v801 = vshll.u32 %v659, 16
      %v803 = vrot.slane %v801, 1
      %v804 = vsel %vm732, %v799, %v803
      %v805 = vshrl.u32 %v659, 16
      %v807 = vor.u32 %v805, %v803
      %v809 = vshll.u32 %v719, 16
      %v811 = vrot.slane %v809, 1
      %v812 = vsel %vm732, %v807, %v811
      %v814 = vshrl.u32 %v660, 16
      %v816 = vshll.u32 %v660, 16
      %v818 = vrot.slane %v816, 1
      %v819 = vor.u32 %v814, %v818
      %v821 = vshll.u32 %v661, 16
      %v823 = vrot.slane %v821, 1
      %v824 = vsel %vm732, %v819, %v823
      %v825 = vshrl.u32 %v661, 16
      %v827 = vor.u32 %v825, %v823
      %v829 = vshll.u32 %v720, 16
      %v831 = vrot.slane %v829, 1
      %v832 = vsel %vm732, %v827, %v831
      %v834 = vshrl.u32 %v662, 16
      %v836 = vshll.u32 %v662, 16
      %v838 = vrot.slane %v836, 1
      %v839 = vor.u32 %v834, %v838
      %v841 = vshll.u32 %v663, 16
      %v843 = vrot.slane %v841, 1
      %v844 = vsel %vm732, %v839, %v843
      %v845 = vshrl.u32 %v663, 16
      %v847 = vor.u32 %v845, %v843
      %v849 = vshll.u32 %v721, 16
      %v851 = vrot.slane %v849, 1
      %v852 = vsel %vm732, %v847, %v851
      %v854 = vshrl.u32 %v664, 16
      %v856 = vshll.u32 %v664, 16
      %v858 = vrot.slane %v856, 1
      %v859 = vor.u32 %v854, %v858
      %v861 = vshll.u32 %v665, 16
      %v863 = vrot.slane %v861, 1
      %v864 = vsel %vm732, %v859, %v863
      %v865 = vshrl.u32 %v665, 16
      %v867 = vor.u32 %v865, %v863
      %v869 = vshll.u32 %v722, 16
      %v871 = vrot.slane %v869, 1
      %v872 = vsel %vm732, %v867, %v871
      %v874 = vshrl.u32 %v666, 16
      %v876 = vshll.u32 %v666, 16
      %v878 = vrot.slane %v876, 1
      %v879 = vor.u32 %v874, %v878
      %v881 = vshll.u32 %v667, 16
      %v883 = vrot.slane %v881, 1
      %v884 = vsel %vm732, %v879, %v883
      %v885 = vshrl.u32 %v667, 16
      %v887 = vor.u32 %v885, %v883
      %v889 = vshll.u32 %v723, 16
      %v891 = vrot.slane %v889, 1
      %v892 = vsel %vm732, %v887, %v891
      %v894 = vshrl.u32 %v668, 16
      %v896 = vshll.u32 %v668, 16
      %v898 = vrot.slane %v896, 1
      %v899 = vor.u32 %v894, %v898
      %v901 = vshll.u32 %v669, 16
      %v903 = vrot.slane %v901, 1
      %v904 = vsel %vm732, %v899, %v903
      %v905 = vshrl.u32 %v669, 16
      %v907 = vor.u32 %v905, %v903
      %v909 = vshll.u32 %v724, 16
      %v911 = vrot.slane %v909, 1
      %v912 = vsel %vm732, %v907, %v911
      %v914 = vshrl.u32 %v670, 16
      %v916 = vshll.u32 %v670, 16
      %v918 = vrot.slane %v916, 1
      %v919 = vor.u32 %v914, %v918
      %v921 = vshll.u32 %v671, 16
      %v923 = vrot.slane %v921, 1
      %v924 = vsel %vm732, %v919, %v923
      %v925 = vshrl.u32 %v671, 16
      %v927 = vor.u32 %v925, %v923
      %v929 = vshll.u32 %v725, 16
      %v931 = vrot.slane %v929, 1
      %v932 = vsel %vm732, %v927, %v931
      %v934 = vshrl.u32 %v672, 16
      %v936 = vshll.u32 %v672, 16
      %v938 = vrot.slane %v936, 1
      %v939 = vor.u32 %v934, %v938
      %v941 = vshll.u32 %v673, 16
      %v943 = vrot.slane %v941, 1
      %v944 = vsel %vm732, %v939, %v943
      %v945 = vshrl.u32 %v673, 16
      %v947 = vor.u32 %v945, %v943
      %v949 = vshll.u32 %v726, 16
      %v951 = vrot.slane %v949, 1
      %v952 = vsel %vm732, %v947, %v951
      %v954 = vshrl.u32 %v674, 16
      %v956 = vshll.u32 %v674, 16
      %v958 = vrot.slane %v956, 1
      %v959 = vor.u32 %v954, %v958
      %v961 = vshll.u32 %v675, 16
      %v963 = vrot.slane %v961, 1
      %v964 = vsel %vm732, %v959, %v963
      %v965 = vshrl.u32 %v675, 16
      %v967 = vor.u32 %v965, %v963
      %v969 = vshll.u32 %v727, 16
      %v971 = vrot.slane %v969, 1
      %v972 = vsel %vm732, %v967, %v971
      %v974 = vshrl.u32 %v676, 16
      %v976 = vshll.u32 %v676, 16
      %v978 = vrot.slane %v976, 1
      %v979 = vor.u32 %v974, %v978
      %v981 = vshll.u32 %v677, 16
      %v983 = vrot.slane %v981, 1
      %v984 = vsel %vm732, %v979, %v983
      %v985 = vshrl.u32 %v677, 16
      %v987 = vor.u32 %v985, %v983
      %v989 = vshll.u32 %v728, 16
      %v991 = vrot.slane %v989, 1
      %v992 = vsel %vm732, %v987, %v991
      %v994 = vshrl.u32 %v678, 16
      %v996 = vshll.u32 %v678, 16
      %v998 = vrot.slane %v996, 1
      %v999 = vor.u32 %v994, %v998
      %v1001 = vshll.u32 %v679, 16
      %v1003 = vrot.slane %v1001, 1
      %v1004 = vsel %vm732, %v999, %v1003
      %v1005 = vshrl.u32 %v679, 16
      %v1007 = vor.u32 %v1005, %v1003
      %v1009 = vshll.u32 %v729, 16
      %v1011 = vrot.slane %v1009, 1
      %v1012 = vsel %vm732, %v1007, %v1011
      %v1014 = vshrl.u32 %v680, 16
      %v1016 = vshll.u32 %v680, 16
      %v1018 = vrot.slane %v1016, 1
      %v1019 = vor.u32 %v1014, %v1018
      %v1021 = vshll.u32 %v681, 16
      %v1023 = vrot.slane %v1021, 1
      %v1024 = vsel %vm732, %v1019, %v1023
      %v1025 = vshrl.u32 %v681, 16
      %v1027 = vor.u32 %v1025, %v1023
      %v1029 = vshll.u32 %v730, 16
      %v1031 = vrot.slane %v1029, 1
      %v1032 = vsel %vm732, %v1027, %v1031
      %v1034 = vshrl.u32 %v682, 16
      %v1036 = vshll.u32 %v682, 16
      %v1038 = vrot.slane %v1036, 1
      %v1039 = vor.u32 %v1034, %v1038
      %v1041 = vshll.u32 %v683, 16
      %v1043 = vrot.slane %v1041, 1
      %v1044 = vsel %vm732, %v1039, %v1043
      %v1045 = vshrl.u32 %v683, 16
      %v1047 = vor.u32 %v1045, %v1043
      %v1049 = vshll.u32 %v731, 16
      %v1051 = vrot.slane %v1049, 1
      %v1052 = vsel %vm732, %v1047, %v1051
      %1053 = vrot.lane.b32.xlu0 %v744, 4
      %v1054 = vpop.permute.xlu0 %1053
      %1055 = vrot.lane.b32.xlu0 %v752, 4
      %v1056 = vpop.permute.xlu0 %1055
      %1057 = vrot.lane.b32.xlu0 %v764, 4
      %v1058 = vpop.permute.xlu0 %1057
      %1059 = vrot.lane.b32.xlu0 %v772, 4
      %v1060 = vpop.permute.xlu0 %1059
      %1061 = vrot.lane.b32.xlu0 %v784, 4
      %v1062 = vpop.permute.xlu0 %1061
      %1063 = vrot.lane.b32.xlu0 %v792, 4
      %v1064 = vpop.permute.xlu0 %1063
      %1065 = vrot.lane.b32.xlu0 %v804, 4
      %v1066 = vpop.permute.xlu0 %1065
      %1067 = vrot.lane.b32.xlu0 %v812, 4
      %v1068 = vpop.permute.xlu0 %1067
      %1069 = vrot.lane.b32.xlu0 %v824, 4
      %v1070 = vpop.permute.xlu0 %1069
      %1071 = vrot.lane.b32.xlu0 %v832, 4
      %v1072 = vpop.permute.xlu0 %1071
      %1073 = vrot.lane.b32.xlu0 %v844, 4
      %v1074 = vpop.permute.xlu0 %1073
      %1075 = vrot.lane.b32.xlu0 %v852, 4
      %v1076 = vpop.permute.xlu0 %1075
      %1077 = vrot.lane.b32.xlu0 %v864, 4
      %v1078 = vpop.permute.xlu0 %1077
      %1079 = vrot.lane.b32.xlu0 %v872, 4
      %v1080 = vpop.permute.xlu0 %1079
      %1081 = vrot.lane.b32.xlu0 %v884, 4
      %v1082 = vpop.permute.xlu0 %1081
      %1083 = vrot.lane.b32.xlu0 %v892, 4
      %v1084 = vpop.permute.xlu0 %1083
      %1085 = vrot.lane.b32.xlu0 %v904, 4
      %v1086 = vpop.permute.xlu0 %1085
      %1087 = vrot.lane.b32.xlu0 %v912, 4
      %v1088 = vpop.permute.xlu0 %1087
      %1089 = vrot.lane.b32.xlu0 %v924, 4
      %v1090 = vpop.permute.xlu0 %1089
      %1091 = vrot.lane.b32.xlu0 %v932, 4
      %v1092 = vpop.permute.xlu0 %1091
      %1093 = vrot.lane.b32.xlu0 %v944, 4
      %v1094 = vpop.permute.xlu0 %1093
      %1095 = vrot.lane.b32.xlu0 %v952, 4
      %v1096 = vpop.permute.xlu0 %1095
      %1097 = vrot.lane.b32.xlu0 %v964, 4
      %v1098 = vpop.permute.xlu0 %1097
      %1099 = vrot.lane.b32.xlu0 %v972, 4
      %v1100 = vpop.permute.xlu0 %1099
      %1101 = vrot.lane.b32.xlu0 %v984, 4
      %v1102 = vpop.permute.xlu0 %1101
      %1103 = vrot.lane.b32.xlu0 %v992, 4
      %v1104 = vpop.permute.xlu0 %1103
      %1105 = vrot.lane.b32.xlu0 %v1004, 4
      %v1106 = vpop.permute.xlu0 %1105
      %1107 = vrot.lane.b32.xlu0 %v1012, 4
      %v1108 = vpop.permute.xlu0 %1107
      %1109 = vrot.lane.b32.xlu0 %v1024, 4
      %v1110 = vpop.permute.xlu0 %1109
      %1111 = vrot.lane.b32.xlu0 %v1032, 4
      %v1112 = vpop.permute.xlu0 %1111
      %1113 = vrot.lane.b32.xlu0 %v1044, 4
      %v1114 = vpop.permute.xlu0 %1113
      %1115 = vrot.lane.b32.xlu0 %v1052, 4
      %v1116 = vpop.permute.xlu0 %1115
      %v1133 = vunpack.c.l.b16 %v308
      %v1134 = vunpack.c.l.b16 %v309
      %v1135 = vunpack.c.l.b16 %v310
      %v1136 = vunpack.c.l.b16 %v311
      %v1137 = vunpack.c.l.b16 %v312
      %v1138 = vunpack.c.l.b16 %v313
      %v1139 = vunpack.c.l.b16 %v314
      %v1140 = vunpack.c.l.b16 %v315
      %v1141 = vunpack.c.l.b16 %v316
      %v1142 = vunpack.c.l.b16 %v317
      %v1143 = vunpack.c.l.b16 %v318
      %v1144 = vunpack.c.l.b16 %v319
      %v1145 = vunpack.c.l.b16 %v320
      %v1146 = vunpack.c.l.b16 %v321
      %v1147 = vunpack.c.l.b16 %v322
      %v1148 = vunpack.c.l.b16 %v323
      %v1149 = vpack.c.b16 %v589, %v1133
      %v1150 = vpack.c.b16 %v593, %v1134
      %v1151 = vpack.c.b16 %v597, %v1135
      %v1152 = vpack.c.b16 %v601, %v1136
      %v1153 = vpack.c.b16 %v605, %v1137
      %v1154 = vpack.c.b16 %v609, %v1138
      %v1155 = vpack.c.b16 %v613, %v1139
      %v1156 = vpack.c.b16 %v617, %v1140
      %v1157 = vpack.c.b16 %v621, %v1141
      %v1158 = vpack.c.b16 %v625, %v1142
      %v1159 = vpack.c.b16 %v629, %v1143
      %v1160 = vpack.c.b16 %v633, %v1144
      %v1161 = vpack.c.b16 %v637, %v1145
      %v1162 = vpack.c.b16 %v641, %v1146
      %v1163 = vpack.c.b16 %v645, %v1147
      %v1164 = vpack.c.b16 %v649, %v1148
      %vm1165 = vcmask 1046528
      %v1166 = vrot.slane %v1149, 1
      %v1167 = vrot.slane %v653, 1
      %v1168 = vsel %vm1165, %v1166, %v1167
      %v1169 = vrot.slane %v716, 1
      %v1170 = vsel %vm1165, %v1167, %v1169
      %v1171 = vrot.slane %v1150, 1
      %v1172 = vrot.slane %v655, 1
      %v1173 = vsel %vm1165, %v1171, %v1172
      %v1174 = vrot.slane %v717, 1
      %v1175 = vsel %vm1165, %v1172, %v1174
      %v1176 = vrot.slane %v1151, 1
      %v1177 = vrot.slane %v657, 1
      %v1178 = vsel %vm1165, %v1176, %v1177
      %v1179 = vrot.slane %v718, 1
      %v1180 = vsel %vm1165, %v1177, %v1179
      %v1181 = vrot.slane %v1152, 1
      %v1182 = vrot.slane %v659, 1
      %v1183 = vsel %vm1165, %v1181, %v1182
      %v1184 = vrot.slane %v719, 1
      %v1185 = vsel %vm1165, %v1182, %v1184
      %v1186 = vrot.slane %v1153, 1
      %v1187 = vrot.slane %v661, 1
      %v1188 = vsel %vm1165, %v1186, %v1187
      %v1189 = vrot.slane %v720, 1
      %v1190 = vsel %vm1165, %v1187, %v1189
      %v1191 = vrot.slane %v1154, 1
      %v1192 = vrot.slane %v663, 1
      %v1193 = vsel %vm1165, %v1191, %v1192
      %v1194 = vrot.slane %v721, 1
      %v1195 = vsel %vm1165, %v1192, %v1194
      %v1196 = vrot.slane %v1155, 1
      %v1197 = vrot.slane %v665, 1
      %v1198 = vsel %vm1165, %v1196, %v1197
      %v1199 = vrot.slane %v722, 1
      %v1200 = vsel %vm1165, %v1197, %v1199
      %v1201 = vrot.slane %v1156, 1
      %v1202 = vrot.slane %v667, 1
      %v1203 = vsel %vm1165, %v1201, %v1202
      %v1204 = vrot.slane %v723, 1
      %v1205 = vsel %vm1165, %v1202, %v1204
      %v1206 = vrot.slane %v1157, 1
      %v1207 = vrot.slane %v669, 1
      %v1208 = vsel %vm1165, %v1206, %v1207
      %v1209 = vrot.slane %v724, 1
      %v1210 = vsel %vm1165, %v1207, %v1209
      %v1211 = vrot.slane %v1158, 1
      %v1212 = vrot.slane %v671, 1
      %v1213 = vsel %vm1165, %v1211, %v1212
      %v1214 = vrot.slane %v725, 1
      %v1215 = vsel %vm1165, %v1212, %v1214
      %v1216 = vrot.slane %v1159, 1
      %v1217 = vrot.slane %v673, 1
      %v1218 = vsel %vm1165, %v1216, %v1217
      %v1219 = vrot.slane %v726, 1
      %v1220 = vsel %vm1165, %v1217, %v1219
      %v1221 = vrot.slane %v1160, 1
      %v1222 = vrot.slane %v675, 1
      %v1223 = vsel %vm1165, %v1221, %v1222
      %v1224 = vrot.slane %v727, 1
      %v1225 = vsel %vm1165, %v1222, %v1224
      %v1226 = vrot.slane %v1161, 1
      %v1227 = vrot.slane %v677, 1
      %v1228 = vsel %vm1165, %v1226, %v1227
      %v1229 = vrot.slane %v728, 1
      %v1230 = vsel %vm1165, %v1227, %v1229
      %v1231 = vrot.slane %v1162, 1
      %v1232 = vrot.slane %v679, 1
      %v1233 = vsel %vm1165, %v1231, %v1232
      %v1234 = vrot.slane %v729, 1
      %v1235 = vsel %vm1165, %v1232, %v1234
      %v1236 = vrot.slane %v1163, 1
      %v1237 = vrot.slane %v681, 1
      %v1238 = vsel %vm1165, %v1236, %v1237
      %v1239 = vrot.slane %v730, 1
      %v1240 = vsel %vm1165, %v1237, %v1239
      %v1241 = vrot.slane %v1164, 1
      %v1242 = vrot.slane %v683, 1
      %v1243 = vsel %vm1165, %v1241, %v1242
      %v1244 = vrot.slane %v731, 1
      %v1245 = vsel %vm1165, %v1242, %v1244
      %1246 = vrot.lane.b32.xlu0 %v1168, 8
      %v1247 = vpop.permute.xlu0 %1246
      %1248 = vrot.lane.b32.xlu0 %v1170, 8
      %v1249 = vpop.permute.xlu0 %1248
      %1250 = vrot.lane.b32.xlu0 %v1173, 8
      %v1251 = vpop.permute.xlu0 %1250
      %1252 = vrot.lane.b32.xlu0 %v1175, 8
      %v1253 = vpop.permute.xlu0 %1252
      %1254 = vrot.lane.b32.xlu0 %v1178, 8
      %v1255 = vpop.permute.xlu0 %1254
      %1256 = vrot.lane.b32.xlu0 %v1180, 8
      %v1257 = vpop.permute.xlu0 %1256
      %1258 = vrot.lane.b32.xlu0 %v1183, 8
      %v1259 = vpop.permute.xlu0 %1258
      %1260 = vrot.lane.b32.xlu0 %v1185, 8
      %v1261 = vpop.permute.xlu0 %1260
      %1262 = vrot.lane.b32.xlu0 %v1188, 8
      %v1263 = vpop.permute.xlu0 %1262
      %1264 = vrot.lane.b32.xlu0 %v1190, 8
      %v1265 = vpop.permute.xlu0 %1264
      %1266 = vrot.lane.b32.xlu0 %v1193, 8
      %v1267 = vpop.permute.xlu0 %1266
      %1268 = vrot.lane.b32.xlu0 %v1195, 8
      %v1269 = vpop.permute.xlu0 %1268
      %1270 = vrot.lane.b32.xlu0 %v1198, 8
      %v1271 = vpop.permute.xlu0 %1270
      %1272 = vrot.lane.b32.xlu0 %v1200, 8
      %v1273 = vpop.permute.xlu0 %1272
      %1274 = vrot.lane.b32.xlu0 %v1203, 8
      %v1275 = vpop.permute.xlu0 %1274
      %1276 = vrot.lane.b32.xlu0 %v1205, 8
      %v1277 = vpop.permute.xlu0 %1276
      %1278 = vrot.lane.b32.xlu0 %v1208, 8
      %v1279 = vpop.permute.xlu0 %1278
      %1280 = vrot.lane.b32.xlu0 %v1210, 8
      %v1281 = vpop.permute.xlu0 %1280
      %1282 = vrot.lane.b32.xlu0 %v1213, 8
      %v1283 = vpop.permute.xlu0 %1282
      %1284 = vrot.lane.b32.xlu0 %v1215, 8
      %v1285 = vpop.permute.xlu0 %1284
      %1286 = vrot.lane.b32.xlu0 %v1218, 8
      %v1287 = vpop.permute.xlu0 %1286
      %1288 = vrot.lane.b32.xlu0 %v1220, 8
      %v1289 = vpop.permute.xlu0 %1288
      %1290 = vrot.lane.b32.xlu0 %v1223, 8
      %v1291 = vpop.permute.xlu0 %1290
      %1292 = vrot.lane.b32.xlu0 %v1225, 8
      %v1293 = vpop.permute.xlu0 %1292
      %1294 = vrot.lane.b32.xlu0 %v1228, 8
      %v1295 = vpop.permute.xlu0 %1294
      %1296 = vrot.lane.b32.xlu0 %v1230, 8
      %v1297 = vpop.permute.xlu0 %1296
      %1298 = vrot.lane.b32.xlu0 %v1233, 8
      %v1299 = vpop.permute.xlu0 %1298
      %1300 = vrot.lane.b32.xlu0 %v1235, 8
      %v1301 = vpop.permute.xlu0 %1300
      %1302 = vrot.lane.b32.xlu0 %v1238, 8
      %v1303 = vpop.permute.xlu0 %1302
      %1304 = vrot.lane.b32.xlu0 %v1240, 8
      %v1305 = vpop.permute.xlu0 %1304
      %1306 = vrot.lane.b32.xlu0 %v1243, 8
      %v1307 = vpop.permute.xlu0 %1306
      %1308 = vrot.lane.b32.xlu0 %v1245, 8
      %v1309 = vpop.permute.xlu0 %1308
      %v1374 = vunpack.c.l.b16 %v328
      %v1375 = vunpack.c.l.b16 %v329
      %v1376 = vunpack.c.l.b16 %v330
      %v1377 = vunpack.c.l.b16 %v331
      %v1378 = vunpack.c.l.b16 %v332
      %v1379 = vunpack.c.l.b16 %v333
      %v1380 = vunpack.c.l.b16 %v334
      %v1381 = vunpack.c.l.b16 %v335
      %v1382 = vunpack.c.l.b16 %v336
      %v1383 = vunpack.c.l.b16 %v337
      %v1384 = vunpack.c.l.b16 %v338
      %v1385 = vunpack.c.l.b16 %v339
      %v1386 = vunpack.c.l.b16 %v340
      %v1387 = vunpack.c.l.b16 %v341
      %v1388 = vunpack.c.l.b16 %v342
      %v1389 = vunpack.c.l.b16 %v343
      %v1390 = vunpack.c.l.b16 %v344
      %v1391 = vunpack.c.l.b16 %v345
      %v1392 = vunpack.c.l.b16 %v346
      %v1393 = vunpack.c.l.b16 %v347
      %v1394 = vunpack.c.l.b16 %v348
      %v1395 = vunpack.c.l.b16 %v349
      %v1396 = vunpack.c.l.b16 %v350
      %v1397 = vunpack.c.l.b16 %v351
      %v1398 = vunpack.c.l.b16 %v352
      %v1399 = vunpack.c.l.b16 %v353
      %v1400 = vunpack.c.l.b16 %v354
      %v1401 = vunpack.c.l.b16 %v355
      %v1402 = vunpack.c.l.b16 %v356
      %v1403 = vunpack.c.l.b16 %v357
      %v1404 = vunpack.c.l.b16 %v358
      %v1405 = vunpack.c.l.b16 %v359
      %v1406 = vunpack.c.l.b16 %v360
      %v1407 = vunpack.c.l.b16 %v361
      %v1408 = vunpack.c.l.b16 %v362
      %v1409 = vunpack.c.l.b16 %v363
      %v1410 = vunpack.c.l.b16 %v364
      %v1411 = vunpack.c.l.b16 %v365
      %v1412 = vunpack.c.l.b16 %v366
      %v1413 = vunpack.c.l.b16 %v367
      %v1414 = vunpack.c.l.b16 %v368
      %v1415 = vunpack.c.l.b16 %v369
      %v1416 = vunpack.c.l.b16 %v370
      %v1417 = vunpack.c.l.b16 %v371
      %v1418 = vunpack.c.l.b16 %v372
      %v1419 = vunpack.c.l.b16 %v373
      %v1420 = vunpack.c.l.b16 %v374
      %v1421 = vunpack.c.l.b16 %v375
      %v1422 = vunpack.c.l.b16 %v376
      %v1423 = vunpack.c.l.b16 %v377
      %v1424 = vunpack.c.l.b16 %v378
      %v1425 = vunpack.c.l.b16 %v379
      %v1426 = vunpack.c.l.b16 %v380
      %v1427 = vunpack.c.l.b16 %v381
      %v1428 = vunpack.c.l.b16 %v382
      %v1429 = vunpack.c.l.b16 %v383
      %v1430 = vunpack.c.l.b16 %v384
      %v1431 = vunpack.c.l.b16 %v385
      %v1432 = vunpack.c.l.b16 %v386
      %v1433 = vunpack.c.l.b16 %v387
      %v1434 = vunpack.c.l.b16 %v388
      %v1435 = vunpack.c.l.b16 %v389
      %v1436 = vunpack.c.l.b16 %v390
      %v1437 = vunpack.c.l.b16 %v391
      %v1438 = vpack.c.b16 %v1375, %v1374
      %v1439 = vpack.c.b16 %v1377, %v1376
      %v1440 = vpack.c.b16 %v1379, %v1378
      %v1441 = vpack.c.b16 %v1381, %v1380
      %v1442 = vpack.c.b16 %v1383, %v1382
      %v1443 = vpack.c.b16 %v1385, %v1384
      %v1444 = vpack.c.b16 %v1387, %v1386
      %v1445 = vpack.c.b16 %v1389, %v1388
      %v1446 = vpack.c.b16 %v1391, %v1390
      %v1447 = vpack.c.b16 %v1393, %v1392
      %v1448 = vpack.c.b16 %v1395, %v1394
      %v1449 = vpack.c.b16 %v1397, %v1396
      %v1450 = vpack.c.b16 %v1399, %v1398
      %v1451 = vpack.c.b16 %v1401, %v1400
      %v1452 = vpack.c.b16 %v1403, %v1402
      %v1453 = vpack.c.b16 %v1405, %v1404
      %v1454 = vpack.c.b16 %v1407, %v1406
      %v1455 = vpack.c.b16 %v1409, %v1408
      %v1456 = vpack.c.b16 %v1411, %v1410
      %v1457 = vpack.c.b16 %v1413, %v1412
      %v1458 = vpack.c.b16 %v1415, %v1414
      %v1459 = vpack.c.b16 %v1417, %v1416
      %v1460 = vpack.c.b16 %v1419, %v1418
      %v1461 = vpack.c.b16 %v1421, %v1420
      %v1462 = vpack.c.b16 %v1423, %v1422
      %v1463 = vpack.c.b16 %v1425, %v1424
      %v1464 = vpack.c.b16 %v1427, %v1426
      %v1465 = vpack.c.b16 %v1429, %v1428
      %v1466 = vpack.c.b16 %v1431, %v1430
      %v1467 = vpack.c.b16 %v1433, %v1432
      %v1468 = vpack.c.b16 %v1435, %v1434
      %v1469 = vpack.c.b16 %v1437, %v1436
      %1470 = vrot.lane.b32.xlu0 %v1438, 12
      %v1471 = vpop.permute.xlu0 %1470
      %1472 = vrot.lane.b32.xlu0 %v1439, 12
      %v1473 = vpop.permute.xlu0 %1472
      %1474 = vrot.lane.b32.xlu0 %v1440, 12
      %v1475 = vpop.permute.xlu0 %1474
      %1476 = vrot.lane.b32.xlu0 %v1441, 12
      %v1477 = vpop.permute.xlu0 %1476
      %1478 = vrot.lane.b32.xlu0 %v1442, 12
      %v1479 = vpop.permute.xlu0 %1478
      %1480 = vrot.lane.b32.xlu0 %v1443, 12
      %v1481 = vpop.permute.xlu0 %1480
      %1482 = vrot.lane.b32.xlu0 %v1444, 12
      %v1483 = vpop.permute.xlu0 %1482
      %1484 = vrot.lane.b32.xlu0 %v1445, 12
      %v1485 = vpop.permute.xlu0 %1484
      %1486 = vrot.lane.b32.xlu0 %v1446, 12
      %v1487 = vpop.permute.xlu0 %1486
      %1488 = vrot.lane.b32.xlu0 %v1447, 12
      %v1489 = vpop.permute.xlu0 %1488
      %1490 = vrot.lane.b32.xlu0 %v1448, 12
      %v1491 = vpop.permute.xlu0 %1490
      %1492 = vrot.lane.b32.xlu0 %v1449, 12
      %v1493 = vpop.permute.xlu0 %1492
      %1494 = vrot.lane.b32.xlu0 %v1450, 12
      %v1495 = vpop.permute.xlu0 %1494
      %1496 = vrot.lane.b32.xlu0 %v1451, 12
      %v1497 = vpop.permute.xlu0 %1496
      %1498 = vrot.lane.b32.xlu0 %v1452, 12
      %v1499 = vpop.permute.xlu0 %1498
      %1500 = vrot.lane.b32.xlu0 %v1453, 12
      %v1501 = vpop.permute.xlu0 %1500
      %1502 = vrot.lane.b32.xlu0 %v1454, 12
      %v1503 = vpop.permute.xlu0 %1502
      %1504 = vrot.lane.b32.xlu0 %v1455, 12
      %v1505 = vpop.permute.xlu0 %1504
      %1506 = vrot.lane.b32.xlu0 %v1456, 12
      %v1507 = vpop.permute.xlu0 %1506
      %1508 = vrot.lane.b32.xlu0 %v1457, 12
      %v1509 = vpop.permute.xlu0 %1508
      %1510 = vrot.lane.b32.xlu0 %v1458, 12
      %v1511 = vpop.permute.xlu0 %1510
      %1512 = vrot.lane.b32.xlu0 %v1459, 12
      %v1513 = vpop.permute.xlu0 %1512
      %1514 = vrot.lane.b32.xlu0 %v1460, 12
      %v1515 = vpop.permute.xlu0 %1514
      %1516 = vrot.lane.b32.xlu0 %v1461, 12
      %v1517 = vpop.permute.xlu0 %1516
      %1518 = vrot.lane.b32.xlu0 %v1462, 12
      %v1519 = vpop.permute.xlu0 %1518
      %1520 = vrot.lane.b32.xlu0 %v1463, 12
      %v1521 = vpop.permute.xlu0 %1520
      %1522 = vrot.lane.b32.xlu0 %v1464, 12
      %v1523 = vpop.permute.xlu0 %1522
      %1524 = vrot.lane.b32.xlu0 %v1465, 12
      %v1525 = vpop.permute.xlu0 %1524
      %1526 = vrot.lane.b32.xlu0 %v1466, 12
      %v1527 = vpop.permute.xlu0 %1526
      %1528 = vrot.lane.b32.xlu0 %v1467, 12
      %v1529 = vpop.permute.xlu0 %1528
      %1530 = vrot.lane.b32.xlu0 %v1468, 12
      %v1531 = vpop.permute.xlu0 %1530
      %1532 = vrot.lane.b32.xlu0 %v1469, 12
      %v1533 = vpop.permute.xlu0 %1532
      %v1550 = vunpack.c.l.b16 %v392
      %v1551 = vunpack.c.l.b16 %v393
      %v1552 = vunpack.c.l.b16 %v394
      %v1553 = vunpack.c.l.b16 %v395
      %v1554 = vunpack.c.l.b16 %v396
      %v1555 = vunpack.c.l.b16 %v397
      %v1556 = vunpack.c.l.b16 %v398
      %v1557 = vunpack.c.l.b16 %v399
      %v1558 = vunpack.c.l.b16 %v400
      %v1559 = vunpack.c.l.b16 %v401
      %v1560 = vunpack.c.l.b16 %v402
      %v1561 = vunpack.c.l.b16 %v403
      %v1562 = vunpack.c.l.b16 %v404
      %v1563 = vunpack.c.l.b16 %v405
      %v1564 = vunpack.c.l.b16 %v406
      %v1565 = vunpack.c.l.b16 %v407
      %v1566 = vpack.c.b16 %v1550, %v1550
      %v1567 = vpack.c.b16 %v1551, %v1551
      %v1568 = vpack.c.b16 %v1552, %v1552
      %v1569 = vpack.c.b16 %v1553, %v1553
      %v1570 = vpack.c.b16 %v1554, %v1554
      %v1571 = vpack.c.b16 %v1555, %v1555
      %v1572 = vpack.c.b16 %v1556, %v1556
      %v1573 = vpack.c.b16 %v1557, %v1557
      %v1574 = vpack.c.b16 %v1558, %v1558
      %v1575 = vpack.c.b16 %v1559, %v1559
      %v1576 = vpack.c.b16 %v1560, %v1560
      %v1577 = vpack.c.b16 %v1561, %v1561
      %v1578 = vpack.c.b16 %v1562, %v1562
      %v1579 = vpack.c.b16 %v1563, %v1563
      %v1580 = vpack.c.b16 %v1564, %v1564
      %v1581 = vpack.c.b16 %v1565, %v1565
      %v1583 = vshrl.u32 %v1438, 16
      %v1585 = vshll.u32 %v1438, 16
      %v1587 = vrot.slane %v1585, 1
      %v1588 = vor.u32 %v1583, %v1587
      %v1590 = vshll.u32 %v1439, 16
      %v1592 = vrot.slane %v1590, 1
      %v1593 = vsel %vm732, %v1588, %v1592
      %v1594 = vshrl.u32 %v1439, 16
      %v1596 = vor.u32 %v1594, %v1592
      %v1598 = vshll.u32 %v1566, 16
      %v1600 = vrot.slane %v1598, 1
      %v1601 = vsel %vm732, %v1596, %v1600
      %v1603 = vshrl.u32 %v1440, 16
      %v1605 = vshll.u32 %v1440, 16
      %v1607 = vrot.slane %v1605, 1
      %v1608 = vor.u32 %v1603, %v1607
      %v1610 = vshll.u32 %v1441, 16
      %v1612 = vrot.slane %v1610, 1
      %v1613 = vsel %vm732, %v1608, %v1612
      %v1614 = vshrl.u32 %v1441, 16
      %v1616 = vor.u32 %v1614, %v1612
      %v1618 = vshll.u32 %v1567, 16
      %v1620 = vrot.slane %v1618, 1
      %v1621 = vsel %vm732, %v1616, %v1620
      %v1623 = vshrl.u32 %v1442, 16
      %v1625 = vshll.u32 %v1442, 16
      %v1627 = vrot.slane %v1625, 1
      %v1628 = vor.u32 %v1623, %v1627
      %v1630 = vshll.u32 %v1443, 16
      %v1632 = vrot.slane %v1630, 1
      %v1633 = vsel %vm732, %v1628, %v1632
      %v1634 = vshrl.u32 %v1443, 16
      %v1636 = vor.u32 %v1634, %v1632
      %v1638 = vshll.u32 %v1568, 16
      %v1640 = vrot.slane %v1638, 1
      %v1641 = vsel %vm732, %v1636, %v1640
      %v1643 = vshrl.u32 %v1444, 16
      %v1645 = vshll.u32 %v1444, 16
      %v1647 = vrot.slane %v1645, 1
      %v1648 = vor.u32 %v1643, %v1647
      %v1650 = vshll.u32 %v1445, 16
      %v1652 = vrot.slane %v1650, 1
      %v1653 = vsel %vm732, %v1648, %v1652
      %v1654 = vshrl.u32 %v1445, 16
      %v1656 = vor.u32 %v1654, %v1652
      %v1658 = vshll.u32 %v1569, 16
      %v1660 = vrot.slane %v1658, 1
      %v1661 = vsel %vm732, %v1656, %v1660
      %v1663 = vshrl.u32 %v1446, 16
      %v1665 = vshll.u32 %v1446, 16
      %v1667 = vrot.slane %v1665, 1
      %v1668 = vor.u32 %v1663, %v1667
      %v1670 = vshll.u32 %v1447, 16
      %v1672 = vrot.slane %v1670, 1
      %v1673 = vsel %vm732, %v1668, %v1672
      %v1674 = vshrl.u32 %v1447, 16
      %v1676 = vor.u32 %v1674, %v1672
      %v1678 = vshll.u32 %v1570, 16
      %v1680 = vrot.slane %v1678, 1
      %v1681 = vsel %vm732, %v1676, %v1680
      %v1683 = vshrl.u32 %v1448, 16
      %v1685 = vshll.u32 %v1448, 16
      %v1687 = vrot.slane %v1685, 1
      %v1688 = vor.u32 %v1683, %v1687
      %v1690 = vshll.u32 %v1449, 16
      %v1692 = vrot.slane %v1690, 1
      %v1693 = vsel %vm732, %v1688, %v1692
      %v1694 = vshrl.u32 %v1449, 16
      %v1696 = vor.u32 %v1694, %v1692
      %v1698 = vshll.u32 %v1571, 16
      %v1700 = vrot.slane %v1698, 1
      %v1701 = vsel %vm732, %v1696, %v1700
      %v1703 = vshrl.u32 %v1450, 16
      %v1705 = vshll.u32 %v1450, 16
      %v1707 = vrot.slane %v1705, 1
      %v1708 = vor.u32 %v1703, %v1707
      %v1710 = vshll.u32 %v1451, 16
      %v1712 = vrot.slane %v1710, 1
      %v1713 = vsel %vm732, %v1708, %v1712
      %v1714 = vshrl.u32 %v1451, 16
      %v1716 = vor.u32 %v1714, %v1712
      %v1718 = vshll.u32 %v1572, 16
      %v1720 = vrot.slane %v1718, 1
      %v1721 = vsel %vm732, %v1716, %v1720
      %v1723 = vshrl.u32 %v1452, 16
      %v1725 = vshll.u32 %v1452, 16
      %v1727 = vrot.slane %v1725, 1
      %v1728 = vor.u32 %v1723, %v1727
      %v1730 = vshll.u32 %v1453, 16
      %v1732 = vrot.slane %v1730, 1
      %v1733 = vsel %vm732, %v1728, %v1732
      %v1734 = vshrl.u32 %v1453, 16
      %v1736 = vor.u32 %v1734, %v1732
      %v1738 = vshll.u32 %v1573, 16
      %v1740 = vrot.slane %v1738, 1
      %v1741 = vsel %vm732, %v1736, %v1740
      %v1743 = vshrl.u32 %v1454, 16
      %v1745 = vshll.u32 %v1454, 16
      %v1747 = vrot.slane %v1745, 1
      %v1748 = vor.u32 %v1743, %v1747
      %v1750 = vshll.u32 %v1455, 16
      %v1752 = vrot.slane %v1750, 1
      %v1753 = vsel %vm732, %v1748, %v1752
      %v1754 = vshrl.u32 %v1455, 16
      %v1756 = vor.u32 %v1754, %v1752
      %v1758 = vshll.u32 %v1574, 16
      %v1760 = vrot.slane %v1758, 1
      %v1761 = vsel %vm732, %v1756, %v1760
      %v1763 = vshrl.u32 %v1456, 16
      %v1765 = vshll.u32 %v1456, 16
      %v1767 = vrot.slane %v1765, 1
      %v1768 = vor.u32 %v1763, %v1767
      %v1770 = vshll.u32 %v1457, 16
      %v1772 = vrot.slane %v1770, 1
      %v1773 = vsel %vm732, %v1768, %v1772
      %v1774 = vshrl.u32 %v1457, 16
      %v1776 = vor.u32 %v1774, %v1772
      %v1778 = vshll.u32 %v1575, 16
      %v1780 = vrot.slane %v1778, 1
      %v1781 = vsel %vm732, %v1776, %v1780
      %v1783 = vshrl.u32 %v1458, 16
      %v1785 = vshll.u32 %v1458, 16
      %v1787 = vrot.slane %v1785, 1
      %v1788 = vor.u32 %v1783, %v1787
      %v1790 = vshll.u32 %v1459, 16
      %v1792 = vrot.slane %v1790, 1
      %v1793 = vsel %vm732, %v1788, %v1792
      %v1794 = vshrl.u32 %v1459, 16
      %v1796 = vor.u32 %v1794, %v1792
      %v1798 = vshll.u32 %v1576, 16
      %v1800 = vrot.slane %v1798, 1
      %v1801 = vsel %vm732, %v1796, %v1800
      %v1803 = vshrl.u32 %v1460, 16
      %v1805 = vshll.u32 %v1460, 16
      %v1807 = vrot.slane %v1805, 1
      %v1808 = vor.u32 %v1803, %v1807
      %v1810 = vshll.u32 %v1461, 16
      %v1812 = vrot.slane %v1810, 1
      %v1813 = vsel %vm732, %v1808, %v1812
      %v1814 = vshrl.u32 %v1461, 16
      %v1816 = vor.u32 %v1814, %v1812
      %v1818 = vshll.u32 %v1577, 16
      %v1820 = vrot.slane %v1818, 1
      %v1821 = vsel %vm732, %v1816, %v1820
      %v1823 = vshrl.u32 %v1462, 16
      %v1825 = vshll.u32 %v1462, 16
      %v1827 = vrot.slane %v1825, 1
      %v1828 = vor.u32 %v1823, %v1827
      %v1830 = vshll.u32 %v1463, 16
      %v1832 = vrot.slane %v1830, 1
      %v1833 = vsel %vm732, %v1828, %v1832
      %v1834 = vshrl.u32 %v1463, 16
      %v1836 = vor.u32 %v1834, %v1832
      %v1838 = vshll.u32 %v1578, 16
      %v1840 = vrot.slane %v1838, 1
      %v1841 = vsel %vm732, %v1836, %v1840
      %v1843 = vshrl.u32 %v1464, 16
      %v1845 = vshll.u32 %v1464, 16
      %v1847 = vrot.slane %v1845, 1
      %v1848 = vor.u32 %v1843, %v1847
      %v1850 = vshll.u32 %v1465, 16
      %v1852 = vrot.slane %v1850, 1
      %v1853 = vsel %vm732, %v1848, %v1852
      %v1854 = vshrl.u32 %v1465, 16
      %v1856 = vor.u32 %v1854, %v1852
      %v1858 = vshll.u32 %v1579, 16
      %v1860 = vrot.slane %v1858, 1
      %v1861 = vsel %vm732, %v1856, %v1860
      %v1863 = vshrl.u32 %v1466, 16
      %v1865 = vshll.u32 %v1466, 16
      %v1867 = vrot.slane %v1865, 1
      %v1868 = vor.u32 %v1863, %v1867
      %v1870 = vshll.u32 %v1467, 16
      %v1872 = vrot.slane %v1870, 1
      %v1873 = vsel %vm732, %v1868, %v1872
      %v1874 = vshrl.u32 %v1467, 16
      %v1876 = vor.u32 %v1874, %v1872
      %v1878 = vshll.u32 %v1580, 16
      %v1880 = vrot.slane %v1878, 1
      %v1881 = vsel %vm732, %v1876, %v1880
      %v1883 = vshrl.u32 %v1468, 16
      %v1885 = vshll.u32 %v1468, 16
      %v1887 = vrot.slane %v1885, 1
      %v1888 = vor.u32 %v1883, %v1887
      %v1890 = vshll.u32 %v1469, 16
      %v1892 = vrot.slane %v1890, 1
      %v1893 = vsel %vm732, %v1888, %v1892
      %v1894 = vshrl.u32 %v1469, 16
      %v1896 = vor.u32 %v1894, %v1892
      %v1898 = vshll.u32 %v1581, 16
      %v1900 = vrot.slane %v1898, 1
      %v1901 = vsel %vm732, %v1896, %v1900
      %1902 = vrot.lane.b32.xlu0 %v1593, 16
      %v1903 = vpop.permute.xlu0 %1902
      %1904 = vrot.lane.b32.xlu0 %v1601, 16
      %v1905 = vpop.permute.xlu0 %1904
      %1906 = vrot.lane.b32.xlu0 %v1613, 16
      %v1907 = vpop.permute.xlu0 %1906
      %1908 = vrot.lane.b32.xlu0 %v1621, 16
      %v1909 = vpop.permute.xlu0 %1908
      %1910 = vrot.lane.b32.xlu0 %v1633, 16
      %v1911 = vpop.permute.xlu0 %1910
      %1912 = vrot.lane.b32.xlu0 %v1641, 16
      %v1913 = vpop.permute.xlu0 %1912
      %1914 = vrot.lane.b32.xlu0 %v1653, 16
      %v1915 = vpop.permute.xlu0 %1914
      %1916 = vrot.lane.b32.xlu0 %v1661, 16
      %v1917 = vpop.permute.xlu0 %1916
      %1918 = vrot.lane.b32.xlu0 %v1673, 16
      %v1919 = vpop.permute.xlu0 %1918
      %1920 = vrot.lane.b32.xlu0 %v1681, 16
      %v1921 = vpop.permute.xlu0 %1920
      %1922 = vrot.lane.b32.xlu0 %v1693, 16
      %v1923 = vpop.permute.xlu0 %1922
      %1924 = vrot.lane.b32.xlu0 %v1701, 16
      %v1925 = vpop.permute.xlu0 %1924
      %1926 = vrot.lane.b32.xlu0 %v1713, 16
      %v1927 = vpop.permute.xlu0 %1926
      %1928 = vrot.lane.b32.xlu0 %v1721, 16
      %v1929 = vpop.permute.xlu0 %1928
      %1930 = vrot.lane.b32.xlu0 %v1733, 16
      %v1931 = vpop.permute.xlu0 %1930
      %1932 = vrot.lane.b32.xlu0 %v1741, 16
      %v1933 = vpop.permute.xlu0 %1932
      %1934 = vrot.lane.b32.xlu0 %v1753, 16
      %v1935 = vpop.permute.xlu0 %1934
      %1936 = vrot.lane.b32.xlu0 %v1761, 16
      %v1937 = vpop.permute.xlu0 %1936
      %1938 = vrot.lane.b32.xlu0 %v1773, 16
      %v1939 = vpop.permute.xlu0 %1938
      %1940 = vrot.lane.b32.xlu0 %v1781, 16
      %v1941 = vpop.permute.xlu0 %1940
      %1942 = vrot.lane.b32.xlu0 %v1793, 16
      %v1943 = vpop.permute.xlu0 %1942
      %1944 = vrot.lane.b32.xlu0 %v1801, 16
      %v1945 = vpop.permute.xlu0 %1944
      %1946 = vrot.lane.b32.xlu0 %v1813, 16
      %v1947 = vpop.permute.xlu0 %1946
      %1948 = vrot.lane.b32.xlu0 %v1821, 16
      %v1949 = vpop.permute.xlu0 %1948
      %1950 = vrot.lane.b32.xlu0 %v1833, 16
      %v1951 = vpop.permute.xlu0 %1950
      %1952 = vrot.lane.b32.xlu0 %v1841, 16
      %v1953 = vpop.permute.xlu0 %1952
      %1954 = vrot.lane.b32.xlu0 %v1853, 16
      %v1955 = vpop.permute.xlu0 %1954
      %1956 = vrot.lane.b32.xlu0 %v1861, 16
      %v1957 = vpop.permute.xlu0 %1956
      %1958 = vrot.lane.b32.xlu0 %v1873, 16
      %v1959 = vpop.permute.xlu0 %1958
      %1960 = vrot.lane.b32.xlu0 %v1881, 16
      %v1961 = vpop.permute.xlu0 %1960
      %1962 = vrot.lane.b32.xlu0 %v1893, 16
      %v1963 = vpop.permute.xlu0 %1962
      %1964 = vrot.lane.b32.xlu0 %v1901, 16
      %v1965 = vpop.permute.xlu0 %1964
      %v1982 = vunpack.c.l.b16 %v408
      %v1983 = vunpack.c.l.b16 %v409
      %v1984 = vunpack.c.l.b16 %v410
      %v1985 = vunpack.c.l.b16 %v411
      %v1986 = vunpack.c.l.b16 %v412
      %v1987 = vunpack.c.l.b16 %v413
      %v1988 = vunpack.c.l.b16 %v414
      %v1989 = vunpack.c.l.b16 %v415
      %v1990 = vunpack.c.l.b16 %v416
      %v1991 = vunpack.c.l.b16 %v417
      %v1992 = vunpack.c.l.b16 %v418
      %v1993 = vunpack.c.l.b16 %v419
      %v1994 = vunpack.c.l.b16 %v420
      %v1995 = vunpack.c.l.b16 %v421
      %v1996 = vunpack.c.l.b16 %v422
      %v1997 = vunpack.c.l.b16 %v423
      %v1998 = vpack.c.b16 %v1375, %v1982
      %v1999 = vpack.c.b16 %v1379, %v1983
      %v2000 = vpack.c.b16 %v1383, %v1984
      %v2001 = vpack.c.b16 %v1387, %v1985
      %v2002 = vpack.c.b16 %v1391, %v1986
      %v2003 = vpack.c.b16 %v1395, %v1987
      %v2004 = vpack.c.b16 %v1399, %v1988
      %v2005 = vpack.c.b16 %v1403, %v1989
      %v2006 = vpack.c.b16 %v1407, %v1990
      %v2007 = vpack.c.b16 %v1411, %v1991
      %v2008 = vpack.c.b16 %v1415, %v1992
      %v2009 = vpack.c.b16 %v1419, %v1993
      %v2010 = vpack.c.b16 %v1423, %v1994
      %v2011 = vpack.c.b16 %v1427, %v1995
      %v2012 = vpack.c.b16 %v1431, %v1996
      %v2013 = vpack.c.b16 %v1435, %v1997
      %v2014 = vrot.slane %v1998, 1
      %v2015 = vrot.slane %v1439, 1
      %v2016 = vsel %vm1165, %v2014, %v2015
      %v2017 = vrot.slane %v1566, 1
      %v2018 = vsel %vm1165, %v2015, %v2017
      %v2019 = vrot.slane %v1999, 1
      %v2020 = vrot.slane %v1441, 1
      %v2021 = vsel %vm1165, %v2019, %v2020
      %v2022 = vrot.slane %v1567, 1
      %v2023 = vsel %vm1165, %v2020, %v2022
      %v2024 = vrot.slane %v2000, 1
      %v2025 = vrot.slane %v1443, 1
      %v2026 = vsel %vm1165, %v2024, %v2025
      %v2027 = vrot.slane %v1568, 1
      %v2028 = vsel %vm1165, %v2025, %v2027
      %v2029 = vrot.slane %v2001, 1
      %v2030 = vrot.slane %v1445, 1
      %v2031 = vsel %vm1165, %v2029, %v2030
      %v2032 = vrot.slane %v1569, 1
      %v2033 = vsel %vm1165, %v2030, %v2032
      %v2034 = vrot.slane %v2002, 1
      %v2035 = vrot.slane %v1447, 1
      %v2036 = vsel %vm1165, %v2034, %v2035
      %v2037 = vrot.slane %v1570, 1
      %v2038 = vsel %vm1165, %v2035, %v2037
      %v2039 = vrot.slane %v2003, 1
      %v2040 = vrot.slane %v1449, 1
      %v2041 = vsel %vm1165, %v2039, %v2040
      %v2042 = vrot.slane %v1571, 1
      %v2043 = vsel %vm1165, %v2040, %v2042
      %v2044 = vrot.slane %v2004, 1
      %v2045 = vrot.slane %v1451, 1
      %v2046 = vsel %vm1165, %v2044, %v2045
      %v2047 = vrot.slane %v1572, 1
      %v2048 = vsel %vm1165, %v2045, %v2047
      %v2049 = vrot.slane %v2005, 1
      %v2050 = vrot.slane %v1453, 1
      %v2051 = vsel %vm1165, %v2049, %v2050
      %v2052 = vrot.slane %v1573, 1
      %v2053 = vsel %vm1165, %v2050, %v2052
      %v2054 = vrot.slane %v2006, 1
      %v2055 = vrot.slane %v1455, 1
      %v2056 = vsel %vm1165, %v2054, %v2055
      %v2057 = vrot.slane %v1574, 1
      %v2058 = vsel %vm1165, %v2055, %v2057
      %v2059 = vrot.slane %v2007, 1
      %v2060 = vrot.slane %v1457, 1
      %v2061 = vsel %vm1165, %v2059, %v2060
      %v2062 = vrot.slane %v1575, 1
      %v2063 = vsel %vm1165, %v2060, %v2062
      %v2064 = vrot.slane %v2008, 1
      %v2065 = vrot.slane %v1459, 1
      %v2066 = vsel %vm1165, %v2064, %v2065
      %v2067 = vrot.slane %v1576, 1
      %v2068 = vsel %vm1165, %v2065, %v2067
      %v2069 = vrot.slane %v2009, 1
      %v2070 = vrot.slane %v1461, 1
      %v2071 = vsel %vm1165, %v2069, %v2070
      %v2072 = vrot.slane %v1577, 1
      %v2073 = vsel %vm1165, %v2070, %v2072
      %v2074 = vrot.slane %v2010, 1
      %v2075 = vrot.slane %v1463, 1
      %v2076 = vsel %vm1165, %v2074, %v2075
      %v2077 = vrot.slane %v1578, 1
      %v2078 = vsel %vm1165, %v2075, %v2077
      %v2079 = vrot.slane %v2011, 1
      %v2080 = vrot.slane %v1465, 1
      %v2081 = vsel %vm1165, %v2079, %v2080
      %v2082 = vrot.slane %v1579, 1
      %v2083 = vsel %vm1165, %v2080, %v2082
      %v2084 = vrot.slane %v2012, 1
      %v2085 = vrot.slane %v1467, 1
      %v2086 = vsel %vm1165, %v2084, %v2085
      %v2087 = vrot.slane %v1580, 1
      %v2088 = vsel %vm1165, %v2085, %v2087
      %v2089 = vrot.slane %v2013, 1
      %v2090 = vrot.slane %v1469, 1
      %v2091 = vsel %vm1165, %v2089, %v2090
      %v2092 = vrot.slane %v1581, 1
      %v2093 = vsel %vm1165, %v2090, %v2092
      %2094 = vrot.lane.b32.xlu0 %v2016, 20
      %v2095 = vpop.permute.xlu0 %2094
      %2096 = vrot.lane.b32.xlu0 %v2018, 20
      %v2097 = vpop.permute.xlu0 %2096
      %2098 = vrot.lane.b32.xlu0 %v2021, 20
      %v2099 = vpop.permute.xlu0 %2098
      %2100 = vrot.lane.b32.xlu0 %v2023, 20
      %v2101 = vpop.permute.xlu0 %2100
      %2102 = vrot.lane.b32.xlu0 %v2026, 20
      %v2103 = vpop.permute.xlu0 %2102
      %2104 = vrot.lane.b32.xlu0 %v2028, 20
      %v2105 = vpop.permute.xlu0 %2104
      %2106 = vrot.lane.b32.xlu0 %v2031, 20
      %v2107 = vpop.permute.xlu0 %2106
      %2108 = vrot.lane.b32.xlu0 %v2033, 20
      %v2109 = vpop.permute.xlu0 %2108
      %2110 = vrot.lane.b32.xlu0 %v2036, 20
      %v2111 = vpop.permute.xlu0 %2110
      %2112 = vrot.lane.b32.xlu0 %v2038, 20
      %v2113 = vpop.permute.xlu0 %2112
      %2114 = vrot.lane.b32.xlu0 %v2041, 20
      %v2115 = vpop.permute.xlu0 %2114
      %2116 = vrot.lane.b32.xlu0 %v2043, 20
      %v2117 = vpop.permute.xlu0 %2116
      %2118 = vrot.lane.b32.xlu0 %v2046, 20
      %v2119 = vpop.permute.xlu0 %2118
      %2120 = vrot.lane.b32.xlu0 %v2048, 20
      %v2121 = vpop.permute.xlu0 %2120
      %2122 = vrot.lane.b32.xlu0 %v2051, 20
      %v2123 = vpop.permute.xlu0 %2122
      %2124 = vrot.lane.b32.xlu0 %v2053, 20
      %v2125 = vpop.permute.xlu0 %2124
      %2126 = vrot.lane.b32.xlu0 %v2056, 20
      %v2127 = vpop.permute.xlu0 %2126
      %2128 = vrot.lane.b32.xlu0 %v2058, 20
      %v2129 = vpop.permute.xlu0 %2128
      %2130 = vrot.lane.b32.xlu0 %v2061, 20
      %v2131 = vpop.permute.xlu0 %2130
      %2132 = vrot.lane.b32.xlu0 %v2063, 20
      %v2133 = vpop.permute.xlu0 %2132
      %2134 = vrot.lane.b32.xlu0 %v2066, 20
      %v2135 = vpop.permute.xlu0 %2134
      %2136 = vrot.lane.b32.xlu0 %v2068, 20
      %v2137 = vpop.permute.xlu0 %2136
      %2138 = vrot.lane.b32.xlu0 %v2071, 20
      %v2139 = vpop.permute.xlu0 %2138
      %2140 = vrot.lane.b32.xlu0 %v2073, 20
      %v2141 = vpop.permute.xlu0 %2140
      %2142 = vrot.lane.b32.xlu0 %v2076, 20
      %v2143 = vpop.permute.xlu0 %2142
      %2144 = vrot.lane.b32.xlu0 %v2078, 20
      %v2145 = vpop.permute.xlu0 %2144
      %2146 = vrot.lane.b32.xlu0 %v2081, 20
      %v2147 = vpop.permute.xlu0 %2146
      %2148 = vrot.lane.b32.xlu0 %v2083, 20
      %v2149 = vpop.permute.xlu0 %2148
      %2150 = vrot.lane.b32.xlu0 %v2086, 20
      %v2151 = vpop.permute.xlu0 %2150
      %2152 = vrot.lane.b32.xlu0 %v2088, 20
      %v2153 = vpop.permute.xlu0 %2152
      %2154 = vrot.lane.b32.xlu0 %v2091, 20
      %v2155 = vpop.permute.xlu0 %2154
      %2156 = vrot.lane.b32.xlu0 %v2093, 20
      %v2157 = vpop.permute.xlu0 %2156
      %v2222 = vunpack.c.l.b16 %v428
      %v2223 = vunpack.c.l.b16 %v429
      %v2224 = vunpack.c.l.b16 %v430
      %v2225 = vunpack.c.l.b16 %v431
      %v2226 = vunpack.c.l.b16 %v432
      %v2227 = vunpack.c.l.b16 %v433
      %v2228 = vunpack.c.l.b16 %v434
      %v2229 = vunpack.c.l.b16 %v435
      %v2230 = vunpack.c.l.b16 %v436
      %v2231 = vunpack.c.l.b16 %v437
      %v2232 = vunpack.c.l.b16 %v438
      %v2233 = vunpack.c.l.b16 %v439
      %v2234 = vunpack.c.l.b16 %v440
      %v2235 = vunpack.c.l.b16 %v441
      %v2236 = vunpack.c.l.b16 %v442
      %v2237 = vunpack.c.l.b16 %v443
      %v2238 = vunpack.c.l.b16 %v444
      %v2239 = vunpack.c.l.b16 %v445
      %v2240 = vunpack.c.l.b16 %v446
      %v2241 = vunpack.c.l.b16 %v447
      %v2242 = vunpack.c.l.b16 %v448
      %v2243 = vunpack.c.l.b16 %v449
      %v2244 = vunpack.c.l.b16 %v450
      %v2245 = vunpack.c.l.b16 %v451
      %v2246 = vunpack.c.l.b16 %v452
      %v2247 = vunpack.c.l.b16 %v453
      %v2248 = vunpack.c.l.b16 %v454
      %v2249 = vunpack.c.l.b16 %v455
      %v2250 = vunpack.c.l.b16 %v456
      %v2251 = vunpack.c.l.b16 %v457
      %v2252 = vunpack.c.l.b16 %v458
      %v2253 = vunpack.c.l.b16 %v459
      %v2254 = vunpack.c.l.b16 %v460
      %v2255 = vunpack.c.l.b16 %v461
      %v2256 = vunpack.c.l.b16 %v462
      %v2257 = vunpack.c.l.b16 %v463
      %v2258 = vunpack.c.l.b16 %v464
      %v2259 = vunpack.c.l.b16 %v465
      %v2260 = vunpack.c.l.b16 %v466
      %v2261 = vunpack.c.l.b16 %v467
      %v2262 = vunpack.c.l.b16 %v468
      %v2263 = vunpack.c.l.b16 %v469
      %v2264 = vunpack.c.l.b16 %v470
      %v2265 = vunpack.c.l.b16 %v471
      %v2266 = vunpack.c.l.b16 %v472
      %v2267 = vunpack.c.l.b16 %v473
      %v2268 = vunpack.c.l.b16 %v474
      %v2269 = vunpack.c.l.b16 %v475
      %v2270 = vunpack.c.l.b16 %v476
      %v2271 = vunpack.c.l.b16 %v477
      %v2272 = vunpack.c.l.b16 %v478
      %v2273 = vunpack.c.l.b16 %v479
      %v2274 = vunpack.c.l.b16 %v480
      %v2275 = vunpack.c.l.b16 %v481
      %v2276 = vunpack.c.l.b16 %v482
      %v2277 = vunpack.c.l.b16 %v483
      %v2278 = vunpack.c.l.b16 %v484
      %v2279 = vunpack.c.l.b16 %v485
      %v2280 = vunpack.c.l.b16 %v486
      %v2281 = vunpack.c.l.b16 %v487
      %v2282 = vunpack.c.l.b16 %v488
      %v2283 = vunpack.c.l.b16 %v489
      %v2284 = vunpack.c.l.b16 %v490
      %v2285 = vunpack.c.l.b16 %v491
      %v2286 = vpack.c.b16 %v2223, %v2222
      %v2287 = vpack.c.b16 %v2225, %v2224
      %v2288 = vpack.c.b16 %v2227, %v2226
      %v2289 = vpack.c.b16 %v2229, %v2228
      %v2290 = vpack.c.b16 %v2231, %v2230
      %v2291 = vpack.c.b16 %v2233, %v2232
      %v2292 = vpack.c.b16 %v2235, %v2234
      %v2293 = vpack.c.b16 %v2237, %v2236
      %v2294 = vpack.c.b16 %v2239, %v2238
      %v2295 = vpack.c.b16 %v2241, %v2240
      %v2296 = vpack.c.b16 %v2243, %v2242
      %v2297 = vpack.c.b16 %v2245, %v2244
      %v2298 = vpack.c.b16 %v2247, %v2246
      %v2299 = vpack.c.b16 %v2249, %v2248
      %v2300 = vpack.c.b16 %v2251, %v2250
      %v2301 = vpack.c.b16 %v2253, %v2252
      %v2302 = vpack.c.b16 %v2255, %v2254
      %v2303 = vpack.c.b16 %v2257, %v2256
      %v2304 = vpack.c.b16 %v2259, %v2258
      %v2305 = vpack.c.b16 %v2261, %v2260
      %v2306 = vpack.c.b16 %v2263, %v2262
      %v2307 = vpack.c.b16 %v2265, %v2264
      %v2308 = vpack.c.b16 %v2267, %v2266
      %v2309 = vpack.c.b16 %v2269, %v2268
      %v2310 = vpack.c.b16 %v2271, %v2270
      %v2311 = vpack.c.b16 %v2273, %v2272
      %v2312 = vpack.c.b16 %v2275, %v2274
      %v2313 = vpack.c.b16 %v2277, %v2276
      %v2314 = vpack.c.b16 %v2279, %v2278
      %v2315 = vpack.c.b16 %v2281, %v2280
      %v2316 = vpack.c.b16 %v2283, %v2282
      %v2317 = vpack.c.b16 %v2285, %v2284
      %2318 = vrot.lane.b32.xlu0 %v2286, 24
      %v2319 = vpop.permute.xlu0 %2318
      %2320 = vrot.lane.b32.xlu0 %v2287, 24
      %v2321 = vpop.permute.xlu0 %2320
      %2322 = vrot.lane.b32.xlu0 %v2288, 24
      %v2323 = vpop.permute.xlu0 %2322
      %2324 = vrot.lane.b32.xlu0 %v2289, 24
      %v2325 = vpop.permute.xlu0 %2324
      %2326 = vrot.lane.b32.xlu0 %v2290, 24
      %v2327 = vpop.permute.xlu0 %2326
      %2328 = vrot.lane.b32.xlu0 %v2291, 24
      %v2329 = vpop.permute.xlu0 %2328
      %2330 = vrot.lane.b32.xlu0 %v2292, 24
      %v2331 = vpop.permute.xlu0 %2330
      %2332 = vrot.lane.b32.xlu0 %v2293, 24
      %v2333 = vpop.permute.xlu0 %2332
      %2334 = vrot.lane.b32.xlu0 %v2294, 24
      %v2335 = vpop.permute.xlu0 %2334
      %2336 = vrot.lane.b32.xlu0 %v2295, 24
      %v2337 = vpop.permute.xlu0 %2336
      %2338 = vrot.lane.b32.xlu0 %v2296, 24
      %v2339 = vpop.permute.xlu0 %2338
      %2340 = vrot.lane.b32.xlu0 %v2297, 24
      %v2341 = vpop.permute.xlu0 %2340
      %2342 = vrot.lane.b32.xlu0 %v2298, 24
      %v2343 = vpop.permute.xlu0 %2342
      %2344 = vrot.lane.b32.xlu0 %v2299, 24
      %v2345 = vpop.permute.xlu0 %2344
      %2346 = vrot.lane.b32.xlu0 %v2300, 24
      %v2347 = vpop.permute.xlu0 %2346
      %2348 = vrot.lane.b32.xlu0 %v2301, 24
      %v2349 = vpop.permute.xlu0 %2348
      %2350 = vrot.lane.b32.xlu0 %v2302, 24
      %v2351 = vpop.permute.xlu0 %2350
      %2352 = vrot.lane.b32.xlu0 %v2303, 24
      %v2353 = vpop.permute.xlu0 %2352
      %2354 = vrot.lane.b32.xlu0 %v2304, 24
      %v2355 = vpop.permute.xlu0 %2354
      %2356 = vrot.lane.b32.xlu0 %v2305, 24
      %v2357 = vpop.permute.xlu0 %2356
      %2358 = vrot.lane.b32.xlu0 %v2306, 24
      %v2359 = vpop.permute.xlu0 %2358
      %2360 = vrot.lane.b32.xlu0 %v2307, 24
      %v2361 = vpop.permute.xlu0 %2360
      %2362 = vrot.lane.b32.xlu0 %v2308, 24
      %v2363 = vpop.permute.xlu0 %2362
      %2364 = vrot.lane.b32.xlu0 %v2309, 24
      %v2365 = vpop.permute.xlu0 %2364
      %2366 = vrot.lane.b32.xlu0 %v2310, 24
      %v2367 = vpop.permute.xlu0 %2366
      %2368 = vrot.lane.b32.xlu0 %v2311, 24
      %v2369 = vpop.permute.xlu0 %2368
      %2370 = vrot.lane.b32.xlu0 %v2312, 24
      %v2371 = vpop.permute.xlu0 %2370
      %2372 = vrot.lane.b32.xlu0 %v2313, 24
      %v2373 = vpop.permute.xlu0 %2372
      %2374 = vrot.lane.b32.xlu0 %v2314, 24
      %v2375 = vpop.permute.xlu0 %2374
      %2376 = vrot.lane.b32.xlu0 %v2315, 24
      %v2377 = vpop.permute.xlu0 %2376
      %2378 = vrot.lane.b32.xlu0 %v2316, 24
      %v2379 = vpop.permute.xlu0 %2378
      %2380 = vrot.lane.b32.xlu0 %v2317, 24
      %v2381 = vpop.permute.xlu0 %2380
      %v2398 = vunpack.c.l.b16 %v492
      %v2399 = vunpack.c.l.b16 %v493
      %v2400 = vunpack.c.l.b16 %v494
      %v2401 = vunpack.c.l.b16 %v495
      %v2402 = vunpack.c.l.b16 %v496
      %v2403 = vunpack.c.l.b16 %v497
      %v2404 = vunpack.c.l.b16 %v498
      %v2405 = vunpack.c.l.b16 %v499
      %v2406 = vunpack.c.l.b16 %v500
      %v2407 = vunpack.c.l.b16 %v501
      %v2408 = vunpack.c.l.b16 %v502
      %v2409 = vunpack.c.l.b16 %v503
      %v2410 = vunpack.c.l.b16 %v504
      %v2411 = vunpack.c.l.b16 %v505
      %v2412 = vunpack.c.l.b16 %v506
      %v2413 = vunpack.c.l.b16 %v507
      %v2414 = vpack.c.b16 %v2398, %v2398
      %v2415 = vpack.c.b16 %v2399, %v2399
      %v2416 = vpack.c.b16 %v2400, %v2400
      %v2417 = vpack.c.b16 %v2401, %v2401
      %v2418 = vpack.c.b16 %v2402, %v2402
      %v2419 = vpack.c.b16 %v2403, %v2403
      %v2420 = vpack.c.b16 %v2404, %v2404
      %v2421 = vpack.c.b16 %v2405, %v2405
      %v2422 = vpack.c.b16 %v2406, %v2406
      %v2423 = vpack.c.b16 %v2407, %v2407
      %v2424 = vpack.c.b16 %v2408, %v2408
      %v2425 = vpack.c.b16 %v2409, %v2409
      %v2426 = vpack.c.b16 %v2410, %v2410
      %v2427 = vpack.c.b16 %v2411, %v2411
      %v2428 = vpack.c.b16 %v2412, %v2412
      %v2429 = vpack.c.b16 %v2413, %v2413
      %v2431 = vshrl.u32 %v2286, 16
      %v2433 = vshll.u32 %v2286, 16
      %v2435 = vrot.slane %v2433, 1
      %v2436 = vor.u32 %v2431, %v2435
      %v2438 = vshll.u32 %v2287, 16
      %v2440 = vrot.slane %v2438, 1
      %v2441 = vsel %vm732, %v2436, %v2440
      %v2442 = vshrl.u32 %v2287, 16
      %v2444 = vor.u32 %v2442, %v2440
      %v2446 = vshll.u32 %v2414, 16
      %v2448 = vrot.slane %v2446, 1
      %v2449 = vsel %vm732, %v2444, %v2448
      %v2451 = vshrl.u32 %v2288, 16
      %v2453 = vshll.u32 %v2288, 16
      %v2455 = vrot.slane %v2453, 1
      %v2456 = vor.u32 %v2451, %v2455
      %v2458 = vshll.u32 %v2289, 16
      %v2460 = vrot.slane %v2458, 1
      %v2461 = vsel %vm732, %v2456, %v2460
      %v2462 = vshrl.u32 %v2289, 16
      %v2464 = vor.u32 %v2462, %v2460
      %v2466 = vshll.u32 %v2415, 16
      %v2468 = vrot.slane %v2466, 1
      %v2469 = vsel %vm732, %v2464, %v2468
      %v2471 = vshrl.u32 %v2290, 16
      %v2473 = vshll.u32 %v2290, 16
      %v2475 = vrot.slane %v2473, 1
      %v2476 = vor.u32 %v2471, %v2475
      %v2478 = vshll.u32 %v2291, 16
      %v2480 = vrot.slane %v2478, 1
      %v2481 = vsel %vm732, %v2476, %v2480
      %v2482 = vshrl.u32 %v2291, 16
      %v2484 = vor.u32 %v2482, %v2480
      %v2486 = vshll.u32 %v2416, 16
      %v2488 = vrot.slane %v2486, 1
      %v2489 = vsel %vm732, %v2484, %v2488
      %v2491 = vshrl.u32 %v2292, 16
      %v2493 = vshll.u32 %v2292, 16
      %v2495 = vrot.slane %v2493, 1
      %v2496 = vor.u32 %v2491, %v2495
      %v2498 = vshll.u32 %v2293, 16
      %v2500 = vrot.slane %v2498, 1
      %v2501 = vsel %vm732, %v2496, %v2500
      %v2502 = vshrl.u32 %v2293, 16
      %v2504 = vor.u32 %v2502, %v2500
      %v2506 = vshll.u32 %v2417, 16
      %v2508 = vrot.slane %v2506, 1
      %v2509 = vsel %vm732, %v2504, %v2508
      %v2511 = vshrl.u32 %v2294, 16
      %v2513 = vshll.u32 %v2294, 16
      %v2515 = vrot.slane %v2513, 1
      %v2516 = vor.u32 %v2511, %v2515
      %v2518 = vshll.u32 %v2295, 16
      %v2520 = vrot.slane %v2518, 1
      %v2521 = vsel %vm732, %v2516, %v2520
      %v2522 = vshrl.u32 %v2295, 16
      %v2524 = vor.u32 %v2522, %v2520
      %v2526 = vshll.u32 %v2418, 16
      %v2528 = vrot.slane %v2526, 1
      %v2529 = vsel %vm732, %v2524, %v2528
      %v2531 = vshrl.u32 %v2296, 16
      %v2533 = vshll.u32 %v2296, 16
      %v2535 = vrot.slane %v2533, 1
      %v2536 = vor.u32 %v2531, %v2535
      %v2538 = vshll.u32 %v2297, 16
      %v2540 = vrot.slane %v2538, 1
      %v2541 = vsel %vm732, %v2536, %v2540
      %v2542 = vshrl.u32 %v2297, 16
      %v2544 = vor.u32 %v2542, %v2540
      %v2546 = vshll.u32 %v2419, 16
      %v2548 = vrot.slane %v2546, 1
      %v2549 = vsel %vm732, %v2544, %v2548
      %v2551 = vshrl.u32 %v2298, 16
      %v2553 = vshll.u32 %v2298, 16
      %v2555 = vrot.slane %v2553, 1
      %v2556 = vor.u32 %v2551, %v2555
      %v2558 = vshll.u32 %v2299, 16
      %v2560 = vrot.slane %v2558, 1
      %v2561 = vsel %vm732, %v2556, %v2560
      %v2562 = vshrl.u32 %v2299, 16
      %v2564 = vor.u32 %v2562, %v2560
      %v2566 = vshll.u32 %v2420, 16
      %v2568 = vrot.slane %v2566, 1
      %v2569 = vsel %vm732, %v2564, %v2568
      %v2571 = vshrl.u32 %v2300, 16
      %v2573 = vshll.u32 %v2300, 16
      %v2575 = vrot.slane %v2573, 1
      %v2576 = vor.u32 %v2571, %v2575
      %v2578 = vshll.u32 %v2301, 16
      %v2580 = vrot.slane %v2578, 1
      %v2581 = vsel %vm732, %v2576, %v2580
      %v2582 = vshrl.u32 %v2301, 16
      %v2584 = vor.u32 %v2582, %v2580
      %v2586 = vshll.u32 %v2421, 16
      %v2588 = vrot.slane %v2586, 1
      %v2589 = vsel %vm732, %v2584, %v2588
      %v2591 = vshrl.u32 %v2302, 16
      %v2593 = vshll.u32 %v2302, 16
      %v2595 = vrot.slane %v2593, 1
      %v2596 = vor.u32 %v2591, %v2595
      %v2598 = vshll.u32 %v2303, 16
      %v2600 = vrot.slane %v2598, 1
      %v2601 = vsel %vm732, %v2596, %v2600
      %v2602 = vshrl.u32 %v2303, 16
      %v2604 = vor.u32 %v2602, %v2600
      %v2606 = vshll.u32 %v2422, 16
      %v2608 = vrot.slane %v2606, 1
      %v2609 = vsel %vm732, %v2604, %v2608
      %v2611 = vshrl.u32 %v2304, 16
      %v2613 = vshll.u32 %v2304, 16
      %v2615 = vrot.slane %v2613, 1
      %v2616 = vor.u32 %v2611, %v2615
      %v2618 = vshll.u32 %v2305, 16
      %v2620 = vrot.slane %v2618, 1
      %v2621 = vsel %vm732, %v2616, %v2620
      %v2622 = vshrl.u32 %v2305, 16
      %v2624 = vor.u32 %v2622, %v2620
      %v2626 = vshll.u32 %v2423, 16
      %v2628 = vrot.slane %v2626, 1
      %v2629 = vsel %vm732, %v2624, %v2628
      %v2631 = vshrl.u32 %v2306, 16
      %v2633 = vshll.u32 %v2306, 16
      %v2635 = vrot.slane %v2633, 1
      %v2636 = vor.u32 %v2631, %v2635
      %v2638 = vshll.u32 %v2307, 16
      %v2640 = vrot.slane %v2638, 1
      %v2641 = vsel %vm732, %v2636, %v2640
      %v2642 = vshrl.u32 %v2307, 16
      %v2644 = vor.u32 %v2642, %v2640
      %v2646 = vshll.u32 %v2424, 16
      %v2648 = vrot.slane %v2646, 1
      %v2649 = vsel %vm732, %v2644, %v2648
      %v2651 = vshrl.u32 %v2308, 16
      %v2653 = vshll.u32 %v2308, 16
      %v2655 = vrot.slane %v2653, 1
      %v2656 = vor.u32 %v2651, %v2655
      %v2658 = vshll.u32 %v2309, 16
      %v2660 = vrot.slane %v2658, 1
      %v2661 = vsel %vm732, %v2656, %v2660
      %v2662 = vshrl.u32 %v2309, 16
      %v2664 = vor.u32 %v2662, %v2660
      %v2666 = vshll.u32 %v2425, 16
      %v2668 = vrot.slane %v2666, 1
      %v2669 = vsel %vm732, %v2664, %v2668
      %v2671 = vshrl.u32 %v2310, 16
      %v2673 = vshll.u32 %v2310, 16
      %v2675 = vrot.slane %v2673, 1
      %v2676 = vor.u32 %v2671, %v2675
      %v2678 = vshll.u32 %v2311, 16
      %v2680 = vrot.slane %v2678, 1
      %v2681 = vsel %vm732, %v2676, %v2680
      %v2682 = vshrl.u32 %v2311, 16
      %v2684 = vor.u32 %v2682, %v2680
      %v2686 = vshll.u32 %v2426, 16
      %v2688 = vrot.slane %v2686, 1
      %v2689 = vsel %vm732, %v2684, %v2688
      %v2691 = vshrl.u32 %v2312, 16
      %v2693 = vshll.u32 %v2312, 16
      %v2695 = vrot.slane %v2693, 1
      %v2696 = vor.u32 %v2691, %v2695
      %v2698 = vshll.u32 %v2313, 16
      %v2700 = vrot.slane %v2698, 1
      %v2701 = vsel %vm732, %v2696, %v2700
      %v2702 = vshrl.u32 %v2313, 16
      %v2704 = vor.u32 %v2702, %v2700
      %v2706 = vshll.u32 %v2427, 16
      %v2708 = vrot.slane %v2706, 1
      %v2709 = vsel %vm732, %v2704, %v2708
      %v2711 = vshrl.u32 %v2314, 16
      %v2713 = vshll.u32 %v2314, 16
      %v2715 = vrot.slane %v2713, 1
      %v2716 = vor.u32 %v2711, %v2715
      %v2718 = vshll.u32 %v2315, 16
      %v2720 = vrot.slane %v2718, 1
      %v2721 = vsel %vm732, %v2716, %v2720
      %v2722 = vshrl.u32 %v2315, 16
      %v2724 = vor.u32 %v2722, %v2720
      %v2726 = vshll.u32 %v2428, 16
      %v2728 = vrot.slane %v2726, 1
      %v2729 = vsel %vm732, %v2724, %v2728
      %v2731 = vshrl.u32 %v2316, 16
      %v2733 = vshll.u32 %v2316, 16
      %v2735 = vrot.slane %v2733, 1
      %v2736 = vor.u32 %v2731, %v2735
      %v2738 = vshll.u32 %v2317, 16
      %v2740 = vrot.slane %v2738, 1
      %v2741 = vsel %vm732, %v2736, %v2740
      %v2742 = vshrl.u32 %v2317, 16
      %v2744 = vor.u32 %v2742, %v2740
      %v2746 = vshll.u32 %v2429, 16
      %v2748 = vrot.slane %v2746, 1
      %v2749 = vsel %vm732, %v2744, %v2748
      %2750 = vrot.lane.b32.xlu0 %v2441, 28
      %v2751 = vpop.permute.xlu0 %2750
      %2752 = vrot.lane.b32.xlu0 %v2449, 28
      %v2753 = vpop.permute.xlu0 %2752
      %2754 = vrot.lane.b32.xlu0 %v2461, 28
      %v2755 = vpop.permute.xlu0 %2754
      %2756 = vrot.lane.b32.xlu0 %v2469, 28
      %v2757 = vpop.permute.xlu0 %2756
      %2758 = vrot.lane.b32.xlu0 %v2481, 28
      %v2759 = vpop.permute.xlu0 %2758
      %2760 = vrot.lane.b32.xlu0 %v2489, 28
      %v2761 = vpop.permute.xlu0 %2760
      %2762 = vrot.lane.b32.xlu0 %v2501, 28
      %v2763 = vpop.permute.xlu0 %2762
      %2764 = vrot.lane.b32.xlu0 %v2509, 28
      %v2765 = vpop.permute.xlu0 %2764
      %2766 = vrot.lane.b32.xlu0 %v2521, 28
      %v2767 = vpop.permute.xlu0 %2766
      %2768 = vrot.lane.b32.xlu0 %v2529, 28
      %v2769 = vpop.permute.xlu0 %2768
      %2770 = vrot.lane.b32.xlu0 %v2541, 28
      %v2771 = vpop.permute.xlu0 %2770
      %2772 = vrot.lane.b32.xlu0 %v2549, 28
      %v2773 = vpop.permute.xlu0 %2772
      %2774 = vrot.lane.b32.xlu0 %v2561, 28
      %v2775 = vpop.permute.xlu0 %2774
      %2776 = vrot.lane.b32.xlu0 %v2569, 28
      %v2777 = vpop.permute.xlu0 %2776
      %2778 = vrot.lane.b32.xlu0 %v2581, 28
      %v2779 = vpop.permute.xlu0 %2778
      %2780 = vrot.lane.b32.xlu0 %v2589, 28
      %v2781 = vpop.permute.xlu0 %2780
      %2782 = vrot.lane.b32.xlu0 %v2601, 28
      %v2783 = vpop.permute.xlu0 %2782
      %2784 = vrot.lane.b32.xlu0 %v2609, 28
      %v2785 = vpop.permute.xlu0 %2784
      %2786 = vrot.lane.b32.xlu0 %v2621, 28
      %v2787 = vpop.permute.xlu0 %2786
      %2788 = vrot.lane.b32.xlu0 %v2629, 28
      %v2789 = vpop.permute.xlu0 %2788
      %2790 = vrot.lane.b32.xlu0 %v2641, 28
      %v2791 = vpop.permute.xlu0 %2790
      %2792 = vrot.lane.b32.xlu0 %v2649, 28
      %v2793 = vpop.permute.xlu0 %2792
      %2794 = vrot.lane.b32.xlu0 %v2661, 28
      %v2795 = vpop.permute.xlu0 %2794
      %2796 = vrot.lane.b32.xlu0 %v2669, 28
      %v2797 = vpop.permute.xlu0 %2796
      %2798 = vrot.lane.b32.xlu0 %v2681, 28
      %v2799 = vpop.permute.xlu0 %2798
      %2800 = vrot.lane.b32.xlu0 %v2689, 28
      %v2801 = vpop.permute.xlu0 %2800
      %2802 = vrot.lane.b32.xlu0 %v2701, 28
      %v2803 = vpop.permute.xlu0 %2802
      %2804 = vrot.lane.b32.xlu0 %v2709, 28
      %v2805 = vpop.permute.xlu0 %2804
      %2806 = vrot.lane.b32.xlu0 %v2721, 28
      %v2807 = vpop.permute.xlu0 %2806
      %2808 = vrot.lane.b32.xlu0 %v2729, 28
      %v2809 = vpop.permute.xlu0 %2808
      %2810 = vrot.lane.b32.xlu0 %v2741, 28
      %v2811 = vpop.permute.xlu0 %2810
      %2812 = vrot.lane.b32.xlu0 %v2749, 28
      %v2813 = vpop.permute.xlu0 %2812
      %v2830 = vunpack.c.l.b16 %v508
      %v2831 = vunpack.c.l.b16 %v509
      %v2832 = vunpack.c.l.b16 %v510
      %v2833 = vunpack.c.l.b16 %v511
      %v2834 = vunpack.c.l.b16 %v512
      %v2835 = vunpack.c.l.b16 %v513
      %v2836 = vunpack.c.l.b16 %v514
      %v2837 = vunpack.c.l.b16 %v515
      %v2838 = vunpack.c.l.b16 %v516
      %v2839 = vunpack.c.l.b16 %v517
      %v2840 = vunpack.c.l.b16 %v518
      %v2841 = vunpack.c.l.b16 %v519
      %v2842 = vunpack.c.l.b16 %v520
      %v2843 = vunpack.c.l.b16 %v521
      %v2844 = vunpack.c.l.b16 %v522
      %v2845 = vunpack.c.l.b16 %v523
      %v2846 = vpack.c.b16 %v2223, %v2830
      %v2847 = vpack.c.b16 %v2227, %v2831
      %v2848 = vpack.c.b16 %v2231, %v2832
      %v2849 = vpack.c.b16 %v2235, %v2833
      %v2850 = vpack.c.b16 %v2239, %v2834
      %v2851 = vpack.c.b16 %v2243, %v2835
      %v2852 = vpack.c.b16 %v2247, %v2836
      %v2853 = vpack.c.b16 %v2251, %v2837
      %v2854 = vpack.c.b16 %v2255, %v2838
      %v2855 = vpack.c.b16 %v2259, %v2839
      %v2856 = vpack.c.b16 %v2263, %v2840
      %v2857 = vpack.c.b16 %v2267, %v2841
      %v2858 = vpack.c.b16 %v2271, %v2842
      %v2859 = vpack.c.b16 %v2275, %v2843
      %v2860 = vpack.c.b16 %v2279, %v2844
      %v2861 = vpack.c.b16 %v2283, %v2845
      %v2862 = vrot.slane %v2846, 1
      %v2863 = vrot.slane %v2287, 1
      %v2864 = vsel %vm1165, %v2862, %v2863
      %v2865 = vrot.slane %v2414, 1
      %v2866 = vsel %vm1165, %v2863, %v2865
      %v2867 = vrot.slane %v2847, 1
      %v2868 = vrot.slane %v2289, 1
      %v2869 = vsel %vm1165, %v2867, %v2868
      %v2870 = vrot.slane %v2415, 1
      %v2871 = vsel %vm1165, %v2868, %v2870
      %v2872 = vrot.slane %v2848, 1
      %v2873 = vrot.slane %v2291, 1
      %v2874 = vsel %vm1165, %v2872, %v2873
      %v2875 = vrot.slane %v2416, 1
      %v2876 = vsel %vm1165, %v2873, %v2875
      %v2877 = vrot.slane %v2849, 1
      %v2878 = vrot.slane %v2293, 1
      %v2879 = vsel %vm1165, %v2877, %v2878
      %v2880 = vrot.slane %v2417, 1
      %v2881 = vsel %vm1165, %v2878, %v2880
      %v2882 = vrot.slane %v2850, 1
      %v2883 = vrot.slane %v2295, 1
      %v2884 = vsel %vm1165, %v2882, %v2883
      %v2885 = vrot.slane %v2418, 1
      %v2886 = vsel %vm1165, %v2883, %v2885
      %v2887 = vrot.slane %v2851, 1
      %v2888 = vrot.slane %v2297, 1
      %v2889 = vsel %vm1165, %v2887, %v2888
      %v2890 = vrot.slane %v2419, 1
      %v2891 = vsel %vm1165, %v2888, %v2890
      %v2892 = vrot.slane %v2852, 1
      %v2893 = vrot.slane %v2299, 1
      %v2894 = vsel %vm1165, %v2892, %v2893
      %v2895 = vrot.slane %v2420, 1
      %v2896 = vsel %vm1165, %v2893, %v2895
      %v2897 = vrot.slane %v2853, 1
      %v2898 = vrot.slane %v2301, 1
      %v2899 = vsel %vm1165, %v2897, %v2898
      %v2900 = vrot.slane %v2421, 1
      %v2901 = vsel %vm1165, %v2898, %v2900
      %v2902 = vrot.slane %v2854, 1
      %v2903 = vrot.slane %v2303, 1
      %v2904 = vsel %vm1165, %v2902, %v2903
      %v2905 = vrot.slane %v2422, 1
      %v2906 = vsel %vm1165, %v2903, %v2905
      %v2907 = vrot.slane %v2855, 1
      %v2908 = vrot.slane %v2305, 1
      %v2909 = vsel %vm1165, %v2907, %v2908
      %v2910 = vrot.slane %v2423, 1
      %v2911 = vsel %vm1165, %v2908, %v2910
      %v2912 = vrot.slane %v2856, 1
      %v2913 = vrot.slane %v2307, 1
      %v2914 = vsel %vm1165, %v2912, %v2913
      %v2915 = vrot.slane %v2424, 1
      %v2916 = vsel %vm1165, %v2913, %v2915
      %v2917 = vrot.slane %v2857, 1
      %v2918 = vrot.slane %v2309, 1
      %v2919 = vsel %vm1165, %v2917, %v2918
      %v2920 = vrot.slane %v2425, 1
      %v2921 = vsel %vm1165, %v2918, %v2920
      %v2922 = vrot.slane %v2858, 1
      %v2923 = vrot.slane %v2311, 1
      %v2924 = vsel %vm1165, %v2922, %v2923
      %v2925 = vrot.slane %v2426, 1
      %v2926 = vsel %vm1165, %v2923, %v2925
      %v2927 = vrot.slane %v2859, 1
      %v2928 = vrot.slane %v2313, 1
      %v2929 = vsel %vm1165, %v2927, %v2928
      %v2930 = vrot.slane %v2427, 1
      %v2931 = vsel %vm1165, %v2928, %v2930
      %v2932 = vrot.slane %v2860, 1
      %v2933 = vrot.slane %v2315, 1
      %v2934 = vsel %vm1165, %v2932, %v2933
      %v2935 = vrot.slane %v2428, 1
      %v2936 = vsel %vm1165, %v2933, %v2935
      %v2937 = vrot.slane %v2861, 1
      %v2938 = vrot.slane %v2317, 1
      %v2939 = vsel %vm1165, %v2937, %v2938
      %v2940 = vrot.slane %v2429, 1
      %v2941 = vsel %vm1165, %v2938, %v2940
      %2942 = vrot.lane.b32.xlu0 %v2864, 32
      %v2943 = vpop.permute.xlu0 %2942
      %2944 = vrot.lane.b32.xlu0 %v2866, 32
      %v2945 = vpop.permute.xlu0 %2944
      %2946 = vrot.lane.b32.xlu0 %v2869, 32
      %v2947 = vpop.permute.xlu0 %2946
      %2948 = vrot.lane.b32.xlu0 %v2871, 32
      %v2949 = vpop.permute.xlu0 %2948
      %2950 = vrot.lane.b32.xlu0 %v2874, 32
      %v2951 = vpop.permute.xlu0 %2950
      %2952 = vrot.lane.b32.xlu0 %v2876, 32
      %v2953 = vpop.permute.xlu0 %2952
      %2954 = vrot.lane.b32.xlu0 %v2879, 32
      %v2955 = vpop.permute.xlu0 %2954
      %2956 = vrot.lane.b32.xlu0 %v2881, 32
      %v2957 = vpop.permute.xlu0 %2956
      %2958 = vrot.lane.b32.xlu0 %v2884, 32
      %v2959 = vpop.permute.xlu0 %2958
      %2960 = vrot.lane.b32.xlu0 %v2886, 32
      %v2961 = vpop.permute.xlu0 %2960
      %2962 = vrot.lane.b32.xlu0 %v2889, 32
      %v2963 = vpop.permute.xlu0 %2962
      %2964 = vrot.lane.b32.xlu0 %v2891, 32
      %v2965 = vpop.permute.xlu0 %2964
      %2966 = vrot.lane.b32.xlu0 %v2894, 32
      %v2967 = vpop.permute.xlu0 %2966
      %2968 = vrot.lane.b32.xlu0 %v2896, 32
      %v2969 = vpop.permute.xlu0 %2968
      %2970 = vrot.lane.b32.xlu0 %v2899, 32
      %v2971 = vpop.permute.xlu0 %2970
      %2972 = vrot.lane.b32.xlu0 %v2901, 32
      %v2973 = vpop.permute.xlu0 %2972
      %2974 = vrot.lane.b32.xlu0 %v2904, 32
      %v2975 = vpop.permute.xlu0 %2974
      %2976 = vrot.lane.b32.xlu0 %v2906, 32
      %v2977 = vpop.permute.xlu0 %2976
      %2978 = vrot.lane.b32.xlu0 %v2909, 32
      %v2979 = vpop.permute.xlu0 %2978
      %2980 = vrot.lane.b32.xlu0 %v2911, 32
      %v2981 = vpop.permute.xlu0 %2980
      %2982 = vrot.lane.b32.xlu0 %v2914, 32
      %v2983 = vpop.permute.xlu0 %2982
      %2984 = vrot.lane.b32.xlu0 %v2916, 32
      %v2985 = vpop.permute.xlu0 %2984
      %2986 = vrot.lane.b32.xlu0 %v2919, 32
      %v2987 = vpop.permute.xlu0 %2986
      %2988 = vrot.lane.b32.xlu0 %v2921, 32
      %v2989 = vpop.permute.xlu0 %2988
      %2990 = vrot.lane.b32.xlu0 %v2924, 32
      %v2991 = vpop.permute.xlu0 %2990
      %2992 = vrot.lane.b32.xlu0 %v2926, 32
      %v2993 = vpop.permute.xlu0 %2992
      %2994 = vrot.lane.b32.xlu0 %v2929, 32
      %v2995 = vpop.permute.xlu0 %2994
      %2996 = vrot.lane.b32.xlu0 %v2931, 32
      %v2997 = vpop.permute.xlu0 %2996
      %2998 = vrot.lane.b32.xlu0 %v2934, 32
      %v2999 = vpop.permute.xlu0 %2998
      %3000 = vrot.lane.b32.xlu0 %v2936, 32
      %v3001 = vpop.permute.xlu0 %3000
      %3002 = vrot.lane.b32.xlu0 %v2939, 32
      %v3003 = vpop.permute.xlu0 %3002
      %3004 = vrot.lane.b32.xlu0 %v2941, 32
      %v3005 = vpop.permute.xlu0 %3004
      %vm3006 = vcmask 31744
      %v3008 = vsel %vm3006, %v652, %v1054
      %v3010 = vsel %vm3006, %v653, %v1056
      %v3012 = vsel %vm3006, %v654, %v1058
      %v3014 = vsel %vm3006, %v655, %v1060
      %v3016 = vsel %vm3006, %v656, %v1062
      %v3018 = vsel %vm3006, %v657, %v1064
      %v3020 = vsel %vm3006, %v658, %v1066
      %v3022 = vsel %vm3006, %v659, %v1068
      %v3024 = vsel %vm3006, %v660, %v1070
      %v3026 = vsel %vm3006, %v661, %v1072
      %v3028 = vsel %vm3006, %v662, %v1074
      %v3030 = vsel %vm3006, %v663, %v1076
      %v3032 = vsel %vm3006, %v664, %v1078
      %v3034 = vsel %vm3006, %v665, %v1080
      %v3036 = vsel %vm3006, %v666, %v1082
      %v3038 = vsel %vm3006, %v667, %v1084
      %v3040 = vsel %vm3006, %v668, %v1086
      %v3042 = vsel %vm3006, %v669, %v1088
      %v3044 = vsel %vm3006, %v670, %v1090
      %v3046 = vsel %vm3006, %v671, %v1092
      %v3048 = vsel %vm3006, %v672, %v1094
      %v3050 = vsel %vm3006, %v673, %v1096
      %v3052 = vsel %vm3006, %v674, %v1098
      %v3054 = vsel %vm3006, %v675, %v1100
      %v3056 = vsel %vm3006, %v676, %v1102
      %v3058 = vsel %vm3006, %v677, %v1104
      %v3060 = vsel %vm3006, %v678, %v1106
      %v3062 = vsel %vm3006, %v679, %v1108
      %v3064 = vsel %vm3006, %v680, %v1110
      %v3066 = vsel %vm3006, %v681, %v1112
      %v3068 = vsel %vm3006, %v682, %v1114
      %v3070 = vsel %vm3006, %v683, %v1116
      %vm3071 = vcmask 64512
      %v3073 = vsel %vm3071, %v3008, %v1247
      %v3075 = vsel %vm3071, %v3010, %v1249
      %v3077 = vsel %vm3071, %v3012, %v1251
      %v3079 = vsel %vm3071, %v3014, %v1253
      %v3081 = vsel %vm3071, %v3016, %v1255
      %v3083 = vsel %vm3071, %v3018, %v1257
      %v3085 = vsel %vm3071, %v3020, %v1259
      %v3087 = vsel %vm3071, %v3022, %v1261
      %v3089 = vsel %vm3071, %v3024, %v1263
      %v3091 = vsel %vm3071, %v3026, %v1265
      %v3093 = vsel %vm3071, %v3028, %v1267
      %v3095 = vsel %vm3071, %v3030, %v1269
      %v3097 = vsel %vm3071, %v3032, %v1271
      %v3099 = vsel %vm3071, %v3034, %v1273
      %v3101 = vsel %vm3071, %v3036, %v1275
      %v3103 = vsel %vm3071, %v3038, %v1277
      %v3105 = vsel %vm3071, %v3040, %v1279
      %v3107 = vsel %vm3071, %v3042, %v1281
      %v3109 = vsel %vm3071, %v3044, %v1283
      %v3111 = vsel %vm3071, %v3046, %v1285
      %v3113 = vsel %vm3071, %v3048, %v1287
      %v3115 = vsel %vm3071, %v3050, %v1289
      %v3117 = vsel %vm3071, %v3052, %v1291
      %v3119 = vsel %vm3071, %v3054, %v1293
      %v3121 = vsel %vm3071, %v3056, %v1295
      %v3123 = vsel %vm3071, %v3058, %v1297
      %v3125 = vsel %vm3071, %v3060, %v1299
      %v3127 = vsel %vm3071, %v3062, %v1301
      %v3129 = vsel %vm3071, %v3064, %v1303
      %v3131 = vsel %vm3071, %v3066, %v1305
      %v3133 = vsel %vm3071, %v3068, %v1307
      %v3135 = vsel %vm3071, %v3070, %v1309
      %vm3136 = vcmask 97280
      %v3138 = vsel %vm3136, %v3073, %v1471
      %v3140 = vsel %vm3136, %v3075, %v1473
      %v3142 = vsel %vm3136, %v3077, %v1475
      %v3144 = vsel %vm3136, %v3079, %v1477
      %v3146 = vsel %vm3136, %v3081, %v1479
      %v3148 = vsel %vm3136, %v3083, %v1481
      %v3150 = vsel %vm3136, %v3085, %v1483
      %v3152 = vsel %vm3136, %v3087, %v1485
      %v3154 = vsel %vm3136, %v3089, %v1487
      %v3156 = vsel %vm3136, %v3091, %v1489
      %v3158 = vsel %vm3136, %v3093, %v1491
      %v3160 = vsel %vm3136, %v3095, %v1493
      %v3162 = vsel %vm3136, %v3097, %v1495
      %v3164 = vsel %vm3136, %v3099, %v1497
      %v3166 = vsel %vm3136, %v3101, %v1499
      %v3168 = vsel %vm3136, %v3103, %v1501
      %v3170 = vsel %vm3136, %v3105, %v1503
      %v3172 = vsel %vm3136, %v3107, %v1505
      %v3174 = vsel %vm3136, %v3109, %v1507
      %v3176 = vsel %vm3136, %v3111, %v1509
      %v3178 = vsel %vm3136, %v3113, %v1511
      %v3180 = vsel %vm3136, %v3115, %v1513
      %v3182 = vsel %vm3136, %v3117, %v1515
      %v3184 = vsel %vm3136, %v3119, %v1517
      %v3186 = vsel %vm3136, %v3121, %v1519
      %v3188 = vsel %vm3136, %v3123, %v1521
      %v3190 = vsel %vm3136, %v3125, %v1523
      %v3192 = vsel %vm3136, %v3127, %v1525
      %v3194 = vsel %vm3136, %v3129, %v1527
      %v3196 = vsel %vm3136, %v3131, %v1529
      %v3198 = vsel %vm3136, %v3133, %v1531
      %v3200 = vsel %vm3136, %v3135, %v1533
      %vm3201 = vcmask 130048
      %v3203 = vsel %vm3201, %v3138, %v1903
      %v3205 = vsel %vm3201, %v3140, %v1905
      %v3207 = vsel %vm3201, %v3142, %v1907
      %v3209 = vsel %vm3201, %v3144, %v1909
      %v3211 = vsel %vm3201, %v3146, %v1911
      %v3213 = vsel %vm3201, %v3148, %v1913
      %v3215 = vsel %vm3201, %v3150, %v1915
      %v3217 = vsel %vm3201, %v3152, %v1917
      %v3219 = vsel %vm3201, %v3154, %v1919
      %v3221 = vsel %vm3201, %v3156, %v1921
      %v3223 = vsel %vm3201, %v3158, %v1923
      %v3225 = vsel %vm3201, %v3160, %v1925
      %v3227 = vsel %vm3201, %v3162, %v1927
      %v3229 = vsel %vm3201, %v3164, %v1929
      %v3231 = vsel %vm3201, %v3166, %v1931
      %v3233 = vsel %vm3201, %v3168, %v1933
      %v3235 = vsel %vm3201, %v3170, %v1935
      %v3237 = vsel %vm3201, %v3172, %v1937
      %v3239 = vsel %vm3201, %v3174, %v1939
      %v3241 = vsel %vm3201, %v3176, %v1941
      %v3243 = vsel %vm3201, %v3178, %v1943
      %v3245 = vsel %vm3201, %v3180, %v1945
      %v3247 = vsel %vm3201, %v3182, %v1947
      %v3249 = vsel %vm3201, %v3184, %v1949
      %v3251 = vsel %vm3201, %v3186, %v1951
      %v3253 = vsel %vm3201, %v3188, %v1953
      %v3255 = vsel %vm3201, %v3190, %v1955
      %v3257 = vsel %vm3201, %v3192, %v1957
      %v3259 = vsel %vm3201, %v3194, %v1959
      %v3261 = vsel %vm3201, %v3196, %v1961
      %v3263 = vsel %vm3201, %v3198, %v1963
      %v3265 = vsel %vm3201, %v3200, %v1965
      %vm3266 = vcmask 162816
      %v3268 = vsel %vm3266, %v3203, %v2095
      %v3270 = vsel %vm3266, %v3205, %v2097
      %v3272 = vsel %vm3266, %v3207, %v2099
      %v3274 = vsel %vm3266, %v3209, %v2101
      %v3276 = vsel %vm3266, %v3211, %v2103
      %v3278 = vsel %vm3266, %v3213, %v2105
      %v3280 = vsel %vm3266, %v3215, %v2107
      %v3282 = vsel %vm3266, %v3217, %v2109
      %v3284 = vsel %vm3266, %v3219, %v2111
      %v3286 = vsel %vm3266, %v3221, %v2113
      %v3288 = vsel %vm3266, %v3223, %v2115
      %v3290 = vsel %vm3266, %v3225, %v2117
      %v3292 = vsel %vm3266, %v3227, %v2119
      %v3294 = vsel %vm3266, %v3229, %v2121
      %v3296 = vsel %vm3266, %v3231, %v2123
      %v3298 = vsel %vm3266, %v3233, %v2125
      %v3300 = vsel %vm3266, %v3235, %v2127
      %v3302 = vsel %vm3266, %v3237, %v2129
      %v3304 = vsel %vm3266, %v3239, %v2131
      %v3306 = vsel %vm3266, %v3241, %v2133
      %v3308 = vsel %vm3266, %v3243, %v2135
      %v3310 = vsel %vm3266, %v3245, %v2137
      %v3312 = vsel %vm3266, %v3247, %v2139
      %v3314 = vsel %vm3266, %v3249, %v2141
      %v3316 = vsel %vm3266, %v3251, %v2143
      %v3318 = vsel %vm3266, %v3253, %v2145
      %v3320 = vsel %vm3266, %v3255, %v2147
      %v3322 = vsel %vm3266, %v3257, %v2149
      %v3324 = vsel %vm3266, %v3259, %v2151
      %v3326 = vsel %vm3266, %v3261, %v2153
      %v3328 = vsel %vm3266, %v3263, %v2155
      %v3330 = vsel %vm3266, %v3265, %v2157
      %vm3331 = vcmask 195584
      %v3333 = vsel %vm3331, %v3268, %v2319
      %v3335 = vsel %vm3331, %v3270, %v2321
      %v3337 = vsel %vm3331, %v3272, %v2323
      %v3339 = vsel %vm3331, %v3274, %v2325
      %v3341 = vsel %vm3331, %v3276, %v2327
      %v3343 = vsel %vm3331, %v3278, %v2329
      %v3345 = vsel %vm3331, %v3280, %v2331
      %v3347 = vsel %vm3331, %v3282, %v2333
      %v3349 = vsel %vm3331, %v3284, %v2335
      %v3351 = vsel %vm3331, %v3286, %v2337
      %v3353 = vsel %vm3331, %v3288, %v2339
      %v3355 = vsel %vm3331, %v3290, %v2341
      %v3357 = vsel %vm3331, %v3292, %v2343
      %v3359 = vsel %vm3331, %v3294, %v2345
      %v3361 = vsel %vm3331, %v3296, %v2347
      %v3363 = vsel %vm3331, %v3298, %v2349
      %v3365 = vsel %vm3331, %v3300, %v2351
      %v3367 = vsel %vm3331, %v3302, %v2353
      %v3369 = vsel %vm3331, %v3304, %v2355
      %v3371 = vsel %vm3331, %v3306, %v2357
      %v3373 = vsel %vm3331, %v3308, %v2359
      %v3375 = vsel %vm3331, %v3310, %v2361
      %v3377 = vsel %vm3331, %v3312, %v2363
      %v3379 = vsel %vm3331, %v3314, %v2365
      %v3381 = vsel %vm3331, %v3316, %v2367
      %v3383 = vsel %vm3331, %v3318, %v2369
      %v3385 = vsel %vm3331, %v3320, %v2371
      %v3387 = vsel %vm3331, %v3322, %v2373
      %v3389 = vsel %vm3331, %v3324, %v2375
      %v3391 = vsel %vm3331, %v3326, %v2377
      %v3393 = vsel %vm3331, %v3328, %v2379
      %v3395 = vsel %vm3331, %v3330, %v2381
      %vm3396 = vcmask 228352
      %v3398 = vsel %vm3396, %v3333, %v2751
      %v3400 = vsel %vm3396, %v3335, %v2753
      %v3402 = vsel %vm3396, %v3337, %v2755
      %v3404 = vsel %vm3396, %v3339, %v2757
      %v3406 = vsel %vm3396, %v3341, %v2759
      %v3408 = vsel %vm3396, %v3343, %v2761
      %v3410 = vsel %vm3396, %v3345, %v2763
      %v3412 = vsel %vm3396, %v3347, %v2765
      %v3414 = vsel %vm3396, %v3349, %v2767
      %v3416 = vsel %vm3396, %v3351, %v2769
      %v3418 = vsel %vm3396, %v3353, %v2771
      %v3420 = vsel %vm3396, %v3355, %v2773
      %v3422 = vsel %vm3396, %v3357, %v2775
      %v3424 = vsel %vm3396, %v3359, %v2777
      %v3426 = vsel %vm3396, %v3361, %v2779
      %v3428 = vsel %vm3396, %v3363, %v2781
      %v3430 = vsel %vm3396, %v3365, %v2783
      %v3432 = vsel %vm3396, %v3367, %v2785
      %v3434 = vsel %vm3396, %v3369, %v2787
      %v3436 = vsel %vm3396, %v3371, %v2789
      %v3438 = vsel %vm3396, %v3373, %v2791
      %v3440 = vsel %vm3396, %v3375, %v2793
      %v3442 = vsel %vm3396, %v3377, %v2795
      %v3444 = vsel %vm3396, %v3379, %v2797
      %v3446 = vsel %vm3396, %v3381, %v2799
      %v3448 = vsel %vm3396, %v3383, %v2801
      %v3450 = vsel %vm3396, %v3385, %v2803
      %v3452 = vsel %vm3396, %v3387, %v2805
      %v3454 = vsel %vm3396, %v3389, %v2807
      %v3456 = vsel %vm3396, %v3391, %v2809
      %v3458 = vsel %vm3396, %v3393, %v2811
      %v3460 = vsel %vm3396, %v3395, %v2813
      %vm3461 = vcmask 261120
      %v3463 = vsel %vm3461, %v3398, %v2943
      %v3465 = vsel %vm3461, %v3400, %v2945
      %v3467 = vsel %vm3461, %v3402, %v2947
      %v3469 = vsel %vm3461, %v3404, %v2949
      %v3471 = vsel %vm3461, %v3406, %v2951
      %v3473 = vsel %vm3461, %v3408, %v2953
      %v3475 = vsel %vm3461, %v3410, %v2955
      %v3477 = vsel %vm3461, %v3412, %v2957
      %v3479 = vsel %vm3461, %v3414, %v2959
      %v3481 = vsel %vm3461, %v3416, %v2961
      %v3483 = vsel %vm3461, %v3418, %v2963
      %v3485 = vsel %vm3461, %v3420, %v2965
      %v3487 = vsel %vm3461, %v3422, %v2967
      %v3489 = vsel %vm3461, %v3424, %v2969
      %v3491 = vsel %vm3461, %v3426, %v2971
      %v3493 = vsel %vm3461, %v3428, %v2973
      %v3495 = vsel %vm3461, %v3430, %v2975
      %v3497 = vsel %vm3461, %v3432, %v2977
      %v3499 = vsel %vm3461, %v3434, %v2979
      %v3501 = vsel %vm3461, %v3436, %v2981
      %v3503 = vsel %vm3461, %v3438, %v2983
      %v3505 = vsel %vm3461, %v3440, %v2985
      %v3507 = vsel %vm3461, %v3442, %v2987
      %v3509 = vsel %vm3461, %v3444, %v2989
      %v3511 = vsel %vm3461, %v3446, %v2991
      %v3513 = vsel %vm3461, %v3448, %v2993
      %v3515 = vsel %vm3461, %v3450, %v2995
      %v3517 = vsel %vm3461, %v3452, %v2997
      %v3519 = vsel %vm3461, %v3454, %v2999
      %v3521 = vsel %vm3461, %v3456, %v3001
      %v3523 = vsel %vm3461, %v3458, %v3003
      %v3525 = vsel %vm3461, %v3460, %v3005
      %v3526 = vld [vmem:[%s1] sm:$0xf]
      %v3527 = vld [vmem:[%s1 + $0x4] sm:$0xf]
      %v3528 = vld [vmem:[%s1 + $0x8] sm:$0xf]
      %v3529 = vld [vmem:[%s1 + $0xc] sm:$0xf]
      %v3530 = vld [vmem:[%s1 + $0x10] sm:$0x3]
      %v3536 = vunpack.c.l.b16 %v3526
      %v3537 = vunpack.c.l.b16 %v3527
      %v3538 = vunpack.c.l.b16 %v3528
      %v3539 = vunpack.c.l.b16 %v3529
      %v3540 = vunpack.c.l.b16 %v3530
      %v3541 = vpack.c.b16 %v3537, %v3536
      %v3542 = vpack.c.b16 %v3539, %v3538
      %v3543 = vpack.c.b16 %v3540, %v3540
      %vm3546 = vcmask 293888
      %v3547 = vsel %vm3546, %v3463, 0
      %v3549 = vsel %vm3546, %v3465, 0
      %v3551 = vsel %vm3546, %v3467, 0
      %v3553 = vsel %vm3546, %v3469, 0
      %v3555 = vsel %vm3546, %v3471, 0
      %v3557 = vsel %vm3546, %v3473, 0
      %v3559 = vsel %vm3546, %v3475, 0
      %v3561 = vsel %vm3546, %v3477, 0
      %v3563 = vsel %vm3546, %v3479, 0
      %v3565 = vsel %vm3546, %v3481, 0
      %v3567 = vsel %vm3546, %v3483, 0
      %v3569 = vsel %vm3546, %v3485, 0
      %v3571 = vsel %vm3546, %v3487, 0
      %v3573 = vsel %vm3546, %v3489, 0
      %v3575 = vsel %vm3546, %v3491, 0
      %v3577 = vsel %vm3546, %v3493, 0
      %v3579 = vsel %vm3546, %v3495, 0
      %v3581 = vsel %vm3546, %v3497, 0
      %v3583 = vsel %vm3546, %v3499, 0
      %v3585 = vsel %vm3546, %v3501, 0
      %v3587 = vsel %vm3546, %v3503, 0
      %v3589 = vsel %vm3546, %v3505, 0
      %v3591 = vsel %vm3546, %v3507, 0
      %v3593 = vsel %vm3546, %v3509, 0
      %v3595 = vsel %vm3546, %v3511, 0
      %v3597 = vsel %vm3546, %v3513, 0
      %v3599 = vsel %vm3546, %v3515, 0
      %v3601 = vsel %vm3546, %v3517, 0
      %v3603 = vsel %vm3546, %v3519, 0
      %v3605 = vsel %vm3546, %v3521, 0
      %v3607 = vsel %vm3546, %v3523, 0
      %v3609 = vsel %vm3546, %v3525, 0
      %vm3611 = vcmask 1041408
      %v3613 = vsel %vm3611, %v3543, 0
      %3615 = vmatpush.bf16.msra.mxu0 0
      %3616 = vmatpush.bf16.msra.mxu0 0
      %3617 = vmatpush.bf16.msra.mxu0 0
      %3618 = vmatpush.bf16.msra.mxu0 0
      %3619 = vmatpush.bf16.msra.mxu0 0
      %3620 = vmatpush.bf16.msra.mxu0 %v3613
      %3621 = vmatpush.bf16.msra.mxu0 %v3542
      %3622 = vmatpush.bf16.msra.mxu0 %v3541
      %3623 = vmatmul.bf16.gmra.mxu0 %v3547
      %v3624 = vpop.f32.mrf.mxu0
      %v3625 = vadd.f32 0.0, %v3624
      %v3626 = vpop.f32.mrf.mxu0
      %v3627 = vadd.f32 0.0, %v3626
      %3628 = vmatmul.bf16.gmra.mxu0 %v3549
      %v3629 = vpop.f32.mrf.mxu0
      %v3630 = vadd.f32 0.0, %v3629
      %v3631 = vpop.f32.mrf.mxu0
      %v3632 = vadd.f32 0.0, %v3631
      %3633 = vmatmul.bf16.gmra.mxu0 %v3551
      %v3634 = vpop.f32.mrf.mxu0
      %v3635 = vadd.f32 0.0, %v3634
      %v3636 = vpop.f32.mrf.mxu0
      %v3637 = vadd.f32 0.0, %v3636
      %3638 = vmatmul.bf16.gmra.mxu0 %v3553
      %v3639 = vpop.f32.mrf.mxu0
      %v3640 = vadd.f32 0.0, %v3639
      %v3641 = vpop.f32.mrf.mxu0
      %v3642 = vadd.f32 0.0, %v3641
      %3643 = vmatmul.bf16.gmra.mxu0 %v3555
      %v3644 = vpop.f32.mrf.mxu0
      %v3645 = vadd.f32 0.0, %v3644
      %v3646 = vpop.f32.mrf.mxu0
      %v3647 = vadd.f32 0.0, %v3646
      %3648 = vmatmul.bf16.gmra.mxu0 %v3557
      %v3649 = vpop.f32.mrf.mxu0
      %v3650 = vadd.f32 0.0, %v3649
      %v3651 = vpop.f32.mrf.mxu0
      %v3652 = vadd.f32 0.0, %v3651
      %3653 = vmatmul.bf16.gmra.mxu0 %v3559
      %v3654 = vpop.f32.mrf.mxu0
      %v3655 = vadd.f32 0.0, %v3654
      %v3656 = vpop.f32.mrf.mxu0
      %v3657 = vadd.f32 0.0, %v3656
      %3658 = vmatmul.bf16.gmra.mxu0 %v3561
      %v3659 = vpop.f32.mrf.mxu0
      %v3660 = vadd.f32 0.0, %v3659
      %v3661 = vpop.f32.mrf.mxu0
      %v3662 = vadd.f32 0.0, %v3661
      %3663 = vmatmul.bf16.gmra.mxu0 %v3563
      %v3664 = vpop.f32.mrf.mxu0
      %v3665 = vadd.f32 0.0, %v3664
      %v3666 = vpop.f32.mrf.mxu0
      %v3667 = vadd.f32 0.0, %v3666
      %3668 = vmatmul.bf16.gmra.mxu0 %v3565
      %v3669 = vpop.f32.mrf.mxu0
      %v3670 = vadd.f32 0.0, %v3669
      %v3671 = vpop.f32.mrf.mxu0
      %v3672 = vadd.f32 0.0, %v3671
      %3673 = vmatmul.bf16.gmra.mxu0 %v3567
      %v3674 = vpop.f32.mrf.mxu0
      %v3675 = vadd.f32 0.0, %v3674
      %v3676 = vpop.f32.mrf.mxu0
      %v3677 = vadd.f32 0.0, %v3676
      %3678 = vmatmul.bf16.gmra.mxu0 %v3569
      %v3679 = vpop.f32.mrf.mxu0
      %v3680 = vadd.f32 0.0, %v3679
      %v3681 = vpop.f32.mrf.mxu0
      %v3682 = vadd.f32 0.0, %v3681
      %3683 = vmatmul.bf16.gmra.mxu0 %v3571
      %v3684 = vpop.f32.mrf.mxu0
      %v3685 = vadd.f32 0.0, %v3684
      %v3686 = vpop.f32.mrf.mxu0
      %v3687 = vadd.f32 0.0, %v3686
      %3688 = vmatmul.bf16.gmra.mxu0 %v3573
      %v3689 = vpop.f32.mrf.mxu0
      %v3690 = vadd.f32 0.0, %v3689
      %v3691 = vpop.f32.mrf.mxu0
      %v3692 = vadd.f32 0.0, %v3691
      %3693 = vmatmul.bf16.gmra.mxu0 %v3575
      %v3694 = vpop.f32.mrf.mxu0
      %v3695 = vadd.f32 0.0, %v3694
      %v3696 = vpop.f32.mrf.mxu0
      %v3697 = vadd.f32 0.0, %v3696
      %3698 = vmatmul.bf16.gmra.mxu0 %v3577
      %v3699 = vpop.f32.mrf.mxu0
      %v3700 = vadd.f32 0.0, %v3699
      %v3701 = vpop.f32.mrf.mxu0
      %v3702 = vadd.f32 0.0, %v3701
      %3703 = vmatmul.bf16.gmra.mxu0 %v3579
      %v3704 = vpop.f32.mrf.mxu0
      %v3705 = vadd.f32 0.0, %v3704
      %v3706 = vpop.f32.mrf.mxu0
      %v3707 = vadd.f32 0.0, %v3706
      %3708 = vmatmul.bf16.gmra.mxu0 %v3581
      %v3709 = vpop.f32.mrf.mxu0
      %v3710 = vadd.f32 0.0, %v3709
      %v3711 = vpop.f32.mrf.mxu0
      %v3712 = vadd.f32 0.0, %v3711
      %3713 = vmatmul.bf16.gmra.mxu0 %v3583
      %v3714 = vpop.f32.mrf.mxu0
      %v3715 = vadd.f32 0.0, %v3714
      %v3716 = vpop.f32.mrf.mxu0
      %v3717 = vadd.f32 0.0, %v3716
      %3718 = vmatmul.bf16.gmra.mxu0 %v3585
      %v3719 = vpop.f32.mrf.mxu0
      %v3720 = vadd.f32 0.0, %v3719
      %v3721 = vpop.f32.mrf.mxu0
      %v3722 = vadd.f32 0.0, %v3721
      %3723 = vmatmul.bf16.gmra.mxu0 %v3587
      %v3724 = vpop.f32.mrf.mxu0
      %v3725 = vadd.f32 0.0, %v3724
      %v3726 = vpop.f32.mrf.mxu0
      %v3727 = vadd.f32 0.0, %v3726
      %3728 = vmatmul.bf16.gmra.mxu0 %v3589
      %v3729 = vpop.f32.mrf.mxu0
      %v3730 = vadd.f32 0.0, %v3729
      %v3731 = vpop.f32.mrf.mxu0
      %v3732 = vadd.f32 0.0, %v3731
      %3733 = vmatmul.bf16.gmra.mxu0 %v3591
      %v3734 = vpop.f32.mrf.mxu0
      %v3735 = vadd.f32 0.0, %v3734
      %v3736 = vpop.f32.mrf.mxu0
      %v3737 = vadd.f32 0.0, %v3736
      %3738 = vmatmul.bf16.gmra.mxu0 %v3593
      %v3739 = vpop.f32.mrf.mxu0
      %v3740 = vadd.f32 0.0, %v3739
      %v3741 = vpop.f32.mrf.mxu0
      %v3742 = vadd.f32 0.0, %v3741
      %3743 = vmatmul.bf16.gmra.mxu0 %v3595
      %v3744 = vpop.f32.mrf.mxu0
      %v3745 = vadd.f32 0.0, %v3744
      %v3746 = vpop.f32.mrf.mxu0
      %v3747 = vadd.f32 0.0, %v3746
      %3748 = vmatmul.bf16.gmra.mxu0 %v3597
      %v3749 = vpop.f32.mrf.mxu0
      %v3750 = vadd.f32 0.0, %v3749
      %v3751 = vpop.f32.mrf.mxu0
      %v3752 = vadd.f32 0.0, %v3751
      %3753 = vmatmul.bf16.gmra.mxu0 %v3599
      %v3754 = vpop.f32.mrf.mxu0
      %v3755 = vadd.f32 0.0, %v3754
      %v3756 = vpop.f32.mrf.mxu0
      %v3757 = vadd.f32 0.0, %v3756
      %3758 = vmatmul.bf16.gmra.mxu0 %v3601
      %v3759 = vpop.f32.mrf.mxu0
      %v3760 = vadd.f32 0.0, %v3759
      %v3761 = vpop.f32.mrf.mxu0
      %v3762 = vadd.f32 0.0, %v3761
      %3763 = vmatmul.bf16.gmra.mxu0 %v3603
      %v3764 = vpop.f32.mrf.mxu0
      %v3765 = vadd.f32 0.0, %v3764
      %v3766 = vpop.f32.mrf.mxu0
      %v3767 = vadd.f32 0.0, %v3766
      %3768 = vmatmul.bf16.gmra.mxu0 %v3605
      %v3769 = vpop.f32.mrf.mxu0
      %v3770 = vadd.f32 0.0, %v3769
      %v3771 = vpop.f32.mrf.mxu0
      %v3772 = vadd.f32 0.0, %v3771
      %3773 = vmatmul.bf16.gmra.mxu0 %v3607
      %v3774 = vpop.f32.mrf.mxu0
      %v3775 = vadd.f32 0.0, %v3774
      %v3776 = vpop.f32.mrf.mxu0
      %v3777 = vadd.f32 0.0, %v3776
      %3778 = vmatmul.bf16.gmra.mxu0 %v3609
      %v3779 = vpop.f32.mrf.mxu0
      %v3780 = vadd.f32 0.0, %v3779
      %v3781 = vpop.f32.mrf.mxu0
      %v3782 = vadd.f32 0.0, %v3781
      %3783 = vdwg.mxu0
      %v3784 = vld [vmem:[%s2] sm:$0x1]
      %v3786 = vperm.slane %v3784, 0
      %v3788 = vmul.f32 %v3625, %v3786
      %v3789 = vmul.f32 %v3627, %v3786
      %v3790 = vmul.f32 %v3630, %v3786
      %v3791 = vmul.f32 %v3632, %v3786
      %v3792 = vmul.f32 %v3635, %v3786
      %v3793 = vmul.f32 %v3637, %v3786
      %v3794 = vmul.f32 %v3640, %v3786
      %v3795 = vmul.f32 %v3642, %v3786
      %v3796 = vmul.f32 %v3645, %v3786
      %v3797 = vmul.f32 %v3647, %v3786
      %v3798 = vmul.f32 %v3650, %v3786
      %v3799 = vmul.f32 %v3652, %v3786
      %v3800 = vmul.f32 %v3655, %v3786
      %v3801 = vmul.f32 %v3657, %v3786
      %v3802 = vmul.f32 %v3660, %v3786
      %v3803 = vmul.f32 %v3662, %v3786
      %v3804 = vmul.f32 %v3665, %v3786
      %v3805 = vmul.f32 %v3667, %v3786
      %v3806 = vmul.f32 %v3670, %v3786
      %v3807 = vmul.f32 %v3672, %v3786
      %v3808 = vmul.f32 %v3675, %v3786
      %v3809 = vmul.f32 %v3677, %v3786
      %v3810 = vmul.f32 %v3680, %v3786
      %v3811 = vmul.f32 %v3682, %v3786
      %v3812 = vmul.f32 %v3685, %v3786
      %v3813 = vmul.f32 %v3687, %v3786
      %v3814 = vmul.f32 %v3690, %v3786
      %v3815 = vmul.f32 %v3692, %v3786
      %v3816 = vmul.f32 %v3695, %v3786
      %v3817 = vmul.f32 %v3697, %v3786
      %v3818 = vmul.f32 %v3700, %v3786
      %v3819 = vmul.f32 %v3702, %v3786
      %v3820 = vmul.f32 %v3705, %v3786
      %v3821 = vmul.f32 %v3707, %v3786
      %v3822 = vmul.f32 %v3710, %v3786
      %v3823 = vmul.f32 %v3712, %v3786
      %v3824 = vmul.f32 %v3715, %v3786
      %v3825 = vmul.f32 %v3717, %v3786
      %v3826 = vmul.f32 %v3720, %v3786
      %v3827 = vmul.f32 %v3722, %v3786
      %v3828 = vmul.f32 %v3725, %v3786
      %v3829 = vmul.f32 %v3727, %v3786
      %v3830 = vmul.f32 %v3730, %v3786
      %v3831 = vmul.f32 %v3732, %v3786
      %v3832 = vmul.f32 %v3735, %v3786
      %v3833 = vmul.f32 %v3737, %v3786
      %v3834 = vmul.f32 %v3740, %v3786
      %v3835 = vmul.f32 %v3742, %v3786
      %v3836 = vmul.f32 %v3745, %v3786
      %v3837 = vmul.f32 %v3747, %v3786
      %v3838 = vmul.f32 %v3750, %v3786
      %v3839 = vmul.f32 %v3752, %v3786
      %v3840 = vmul.f32 %v3755, %v3786
      %v3841 = vmul.f32 %v3757, %v3786
      %v3842 = vmul.f32 %v3760, %v3786
      %v3843 = vmul.f32 %v3762, %v3786
      %v3844 = vmul.f32 %v3765, %v3786
      %v3845 = vmul.f32 %v3767, %v3786
      %v3846 = vmul.f32 %v3770, %v3786
      %v3847 = vmul.f32 %v3772, %v3786
      %v3848 = vmul.f32 %v3775, %v3786
      %v3849 = vmul.f32 %v3777, %v3786
      %v3850 = vmul.f32 %v3780, %v3786
      %v3851 = vmul.f32 %v3782, %v3786
      %v3852 = vld [vmem:[%s3] sm:$0x1]
      %v3854 = vperm.slane %v3852, 0
      %v3856 = vadd.f32 %v3788, %v3854
      %v3857 = vadd.f32 %v3789, %v3854
      %v3858 = vadd.f32 %v3790, %v3854
      %v3859 = vadd.f32 %v3791, %v3854
      %v3860 = vadd.f32 %v3792, %v3854
      %v3861 = vadd.f32 %v3793, %v3854
      %v3862 = vadd.f32 %v3794, %v3854
      %v3863 = vadd.f32 %v3795, %v3854
      %v3864 = vadd.f32 %v3796, %v3854
      %v3865 = vadd.f32 %v3797, %v3854
      %v3866 = vadd.f32 %v3798, %v3854
      %v3867 = vadd.f32 %v3799, %v3854
      %v3868 = vadd.f32 %v3800, %v3854
      %v3869 = vadd.f32 %v3801, %v3854
      %v3870 = vadd.f32 %v3802, %v3854
      %v3871 = vadd.f32 %v3803, %v3854
      %v3872 = vadd.f32 %v3804, %v3854
      %v3873 = vadd.f32 %v3805, %v3854
      %v3874 = vadd.f32 %v3806, %v3854
      %v3875 = vadd.f32 %v3807, %v3854
      %v3876 = vadd.f32 %v3808, %v3854
      %v3877 = vadd.f32 %v3809, %v3854
      %v3878 = vadd.f32 %v3810, %v3854
      %v3879 = vadd.f32 %v3811, %v3854
      %v3880 = vadd.f32 %v3812, %v3854
      %v3881 = vadd.f32 %v3813, %v3854
      %v3882 = vadd.f32 %v3814, %v3854
      %v3883 = vadd.f32 %v3815, %v3854
      %v3884 = vadd.f32 %v3816, %v3854
      %v3885 = vadd.f32 %v3817, %v3854
      %v3886 = vadd.f32 %v3818, %v3854
      %v3887 = vadd.f32 %v3819, %v3854
      %v3888 = vadd.f32 %v3820, %v3854
      %v3889 = vadd.f32 %v3821, %v3854
      %v3890 = vadd.f32 %v3822, %v3854
      %v3891 = vadd.f32 %v3823, %v3854
      %v3892 = vadd.f32 %v3824, %v3854
      %v3893 = vadd.f32 %v3825, %v3854
      %v3894 = vadd.f32 %v3826, %v3854
      %v3895 = vadd.f32 %v3827, %v3854
      %v3896 = vadd.f32 %v3828, %v3854
      %v3897 = vadd.f32 %v3829, %v3854
      %v3898 = vadd.f32 %v3830, %v3854
      %v3899 = vadd.f32 %v3831, %v3854
      %v3900 = vadd.f32 %v3832, %v3854
      %v3901 = vadd.f32 %v3833, %v3854
      %v3902 = vadd.f32 %v3834, %v3854
      %v3903 = vadd.f32 %v3835, %v3854
      %v3904 = vadd.f32 %v3836, %v3854
      %v3905 = vadd.f32 %v3837, %v3854
      %v3906 = vadd.f32 %v3838, %v3854
      %v3907 = vadd.f32 %v3839, %v3854
      %v3908 = vadd.f32 %v3840, %v3854
      %v3909 = vadd.f32 %v3841, %v3854
      %v3910 = vadd.f32 %v3842, %v3854
      %v3911 = vadd.f32 %v3843, %v3854
      %v3912 = vadd.f32 %v3844, %v3854
      %v3913 = vadd.f32 %v3845, %v3854
      %v3914 = vadd.f32 %v3846, %v3854
      %v3915 = vadd.f32 %v3847, %v3854
      %v3916 = vadd.f32 %v3848, %v3854
      %v3917 = vadd.f32 %v3849, %v3854
      %v3918 = vadd.f32 %v3850, %v3854
      %v3919 = vadd.f32 %v3851, %v3854
      %v3920 = vmax.f32 %v3856, 0.0
      %v3921 = vmax.f32 %v3857, 0.0
      %v3922 = vmax.f32 %v3858, 0.0
      %v3923 = vmax.f32 %v3859, 0.0
      %v3924 = vmax.f32 %v3860, 0.0
      %v3925 = vmax.f32 %v3861, 0.0
      %v3926 = vmax.f32 %v3862, 0.0
      %v3927 = vmax.f32 %v3863, 0.0
      %v3928 = vmax.f32 %v3864, 0.0
      %v3929 = vmax.f32 %v3865, 0.0
      %v3930 = vmax.f32 %v3866, 0.0
      %v3931 = vmax.f32 %v3867, 0.0
      %v3932 = vmax.f32 %v3868, 0.0
      %v3933 = vmax.f32 %v3869, 0.0
      %v3934 = vmax.f32 %v3870, 0.0
      %v3935 = vmax.f32 %v3871, 0.0
      %v3936 = vmax.f32 %v3872, 0.0
      %v3937 = vmax.f32 %v3873, 0.0
      %v3938 = vmax.f32 %v3874, 0.0
      %v3939 = vmax.f32 %v3875, 0.0
      %v3940 = vmax.f32 %v3876, 0.0
      %v3941 = vmax.f32 %v3877, 0.0
      %v3942 = vmax.f32 %v3878, 0.0
      %v3943 = vmax.f32 %v3879, 0.0
      %v3944 = vmax.f32 %v3880, 0.0
      %v3945 = vmax.f32 %v3881, 0.0
      %v3946 = vmax.f32 %v3882, 0.0
      %v3947 = vmax.f32 %v3883, 0.0
      %v3948 = vmax.f32 %v3884, 0.0
      %v3949 = vmax.f32 %v3885, 0.0
      %v3950 = vmax.f32 %v3886, 0.0
      %v3951 = vmax.f32 %v3887, 0.0
      %v3952 = vmax.f32 %v3888, 0.0
      %v3953 = vmax.f32 %v3889, 0.0
      %v3954 = vmax.f32 %v3890, 0.0
      %v3955 = vmax.f32 %v3891, 0.0
      %v3956 = vmax.f32 %v3892, 0.0
      %v3957 = vmax.f32 %v3893, 0.0
      %v3958 = vmax.f32 %v3894, 0.0
      %v3959 = vmax.f32 %v3895, 0.0
      %v3960 = vmax.f32 %v3896, 0.0
      %v3961 = vmax.f32 %v3897, 0.0
      %v3962 = vmax.f32 %v3898, 0.0
      %v3963 = vmax.f32 %v3899, 0.0
      %v3964 = vmax.f32 %v3900, 0.0
      %v3965 = vmax.f32 %v3901, 0.0
      %v3966 = vmax.f32 %v3902, 0.0
      %v3967 = vmax.f32 %v3903, 0.0
      %v3968 = vmax.f32 %v3904, 0.0
      %v3969 = vmax.f32 %v3905, 0.0
      %v3970 = vmax.f32 %v3906, 0.0
      %v3971 = vmax.f32 %v3907, 0.0
      %v3972 = vmax.f32 %v3908, 0.0
      %v3973 = vmax.f32 %v3909, 0.0
      %v3974 = vmax.f32 %v3910, 0.0
      %v3975 = vmax.f32 %v3911, 0.0
      %v3976 = vmax.f32 %v3912, 0.0
      %v3977 = vmax.f32 %v3913, 0.0
      %v3978 = vmax.f32 %v3914, 0.0
      %v3979 = vmax.f32 %v3915, 0.0
      %v3980 = vmax.f32 %v3916, 0.0
      %v3981 = vmax.f32 %v3917, 0.0
      %v3982 = vmax.f32 %v3918, 0.0
      %v3983 = vmax.f32 %v3919, 0.0
      %v4048 = vrot.slane %v3920, 2
      %v4049 = vrot.slane %v3920, 4
      %v4050 = vrot.slane %v3920, 6
      %v4051 = vrot.slane %v3921, 2
      %v4052 = vrot.slane %v3921, 4
      %v4053 = vrot.slane %v3921, 6
      %v4054 = vrot.slane %v3922, 2
      %v4055 = vrot.slane %v3922, 4
      %v4056 = vrot.slane %v3922, 6
      %v4057 = vrot.slane %v3923, 2
      %v4058 = vrot.slane %v3923, 4
      %v4059 = vrot.slane %v3923, 6
      %v4060 = vrot.slane %v3924, 2
      %v4061 = vrot.slane %v3924, 4
      %v4062 = vrot.slane %v3924, 6
      %v4063 = vrot.slane %v3925, 2
      %v4064 = vrot.slane %v3925, 4
      %v4065 = vrot.slane %v3925, 6
      %v4066 = vrot.slane %v3926, 2
      %v4067 = vrot.slane %v3926, 4
      %v4068 = vrot.slane %v3926, 6
      %v4069 = vrot.slane %v3927, 2
      %v4070 = vrot.slane %v3927, 4
      %v4071 = vrot.slane %v3927, 6
      %v4072 = vrot.slane %v3928, 2
      %v4073 = vrot.slane %v3928, 4
      %v4074 = vrot.slane %v3928, 6
      %v4075 = vrot.slane %v3929, 2
      %v4076 = vrot.slane %v3929, 4
      %v4077 = vrot.slane %v3929, 6
      %v4078 = vrot.slane %v3930, 2
      %v4079 = vrot.slane %v3930, 4
      %v4080 = vrot.slane %v3930, 6
      %v4081 = vrot.slane %v3931, 2
      %v4082 = vrot.slane %v3931, 4
      %v4083 = vrot.slane %v3931, 6
      %v4084 = vrot.slane %v3932, 2
      %v4085 = vrot.slane %v3932, 4
      %v4086 = vrot.slane %v3932, 6
      %v4087 = vrot.slane %v3933, 2
      %v4088 = vrot.slane %v3933, 4
      %v4089 = vrot.slane %v3933, 6
      %v4090 = vrot.slane %v3934, 2
      %v4091 = vrot.slane %v3934, 4
      %v4092 = vrot.slane %v3934, 6
      %v4093 = vrot.slane %v3935, 2
      %v4094 = vrot.slane %v3935, 4
      %v4095 = vrot.slane %v3935, 6
      %v4096 = vrot.slane %v3936, 2
      %v4097 = vrot.slane %v3936, 4
      %v4098 = vrot.slane %v3936, 6
      %v4099 = vrot.slane %v3937, 2
      %v4100 = vrot.slane %v3937, 4
      %v4101 = vrot.slane %v3937, 6
      %v4102 = vrot.slane %v3938, 2
      %v4103 = vrot.slane %v3938, 4
      %v4104 = vrot.slane %v3938, 6
      %v4105 = vrot.slane %v3939, 2
      %v4106 = vrot.slane %v3939, 4
      %v4107 = vrot.slane %v3939, 6
      %v4108 = vrot.slane %v3940, 2
      %v4109 = vrot.slane %v3940, 4
      %v4110 = vrot.slane %v3940, 6
      %v4111 = vrot.slane %v3941, 2
      %v4112 = vrot.slane %v3941, 4
      %v4113 = vrot.slane %v3941, 6
      %v4114 = vrot.slane %v3942, 2
      %v4115 = vrot.slane %v3942, 4
      %v4116 = vrot.slane %v3942, 6
      %v4117 = vrot.slane %v3943, 2
      %v4118 = vrot.slane %v3943, 4
      %v4119 = vrot.slane %v3943, 6
      %v4120 = vrot.slane %v3944, 2
      %v4121 = vrot.slane %v3944, 4
      %v4122 = vrot.slane %v3944, 6
      %v4123 = vrot.slane %v3945, 2
      %v4124 = vrot.slane %v3945, 4
      %v4125 = vrot.slane %v3945, 6
      %v4126 = vrot.slane %v3946, 2
      %v4127 = vrot.slane %v3946, 4
      %v4128 = vrot.slane %v3946, 6
      %v4129 = vrot.slane %v3947, 2
      %v4130 = vrot.slane %v3947, 4
      %v4131 = vrot.slane %v3947, 6
      %v4132 = vrot.slane %v3948, 2
      %v4133 = vrot.slane %v3948, 4
      %v4134 = vrot.slane %v3948, 6
      %v4135 = vrot.slane %v3949, 2
      %v4136 = vrot.slane %v3949, 4
      %v4137 = vrot.slane %v3949, 6
      %v4138 = vrot.slane %v3950, 2
      %v4139 = vrot.slane %v3950, 4
      %v4140 = vrot.slane %v3950, 6
      %v4141 = vrot.slane %v3951, 2
      %v4142 = vrot.slane %v3951, 4
      %v4143 = vrot.slane %v3951, 6
      %v4144 = vrot.slane %v3952, 2
      %v4145 = vrot.slane %v3952, 4
      %v4146 = vrot.slane %v3952, 6
      %v4147 = vrot.slane %v3953, 2
      %v4148 = vrot.slane %v3953, 4
      %v4149 = vrot.slane %v3953, 6
      %v4150 = vrot.slane %v3954, 2
      %v4151 = vrot.slane %v3954, 4
      %v4152 = vrot.slane %v3954, 6
      %v4153 = vrot.slane %v3955, 2
      %v4154 = vrot.slane %v3955, 4
      %v4155 = vrot.slane %v3955, 6
      %v4156 = vrot.slane %v3956, 2
      %v4157 = vrot.slane %v3956, 4
      %v4158 = vrot.slane %v3956, 6
      %v4159 = vrot.slane %v3957, 2
      %v4160 = vrot.slane %v3957, 4
      %v4161 = vrot.slane %v3957, 6
      %v4162 = vrot.slane %v3958, 2
      %v4163 = vrot.slane %v3958, 4
      %v4164 = vrot.slane %v3958, 6
      %v4165 = vrot.slane %v3959, 2
      %v4166 = vrot.slane %v3959, 4
      %v4167 = vrot.slane %v3959, 6
      %v4168 = vrot.slane %v3960, 2
      %v4169 = vrot.slane %v3960, 4
      %v4170 = vrot.slane %v3960, 6
      %v4171 = vrot.slane %v3961, 2
      %v4172 = vrot.slane %v3961, 4
      %v4173 = vrot.slane %v3961, 6
      %v4174 = vrot.slane %v3962, 2
      %v4175 = vrot.slane %v3962, 4
      %v4176 = vrot.slane %v3962, 6
      %v4177 = vrot.slane %v3963, 2
      %v4178 = vrot.slane %v3963, 4
      %v4179 = vrot.slane %v3963, 6
      %v4180 = vrot.slane %v3964, 2
      %v4181 = vrot.slane %v3964, 4
      %v4182 = vrot.slane %v3964, 6
      %v4183 = vrot.slane %v3965, 2
      %v4184 = vrot.slane %v3965, 4
      %v4185 = vrot.slane %v3965, 6
      %v4186 = vrot.slane %v3966, 2
      %v4187 = vrot.slane %v3966, 4
      %v4188 = vrot.slane %v3966, 6
      %v4189 = vrot.slane %v3967, 2
      %v4190 = vrot.slane %v3967, 4
      %v4191 = vrot.slane %v3967, 6
      %v4192 = vrot.slane %v3968, 2
      %v4193 = vrot.slane %v3968, 4
      %v4194 = vrot.slane %v3968, 6
      %v4195 = vrot.slane %v3969, 2
      %v4196 = vrot.slane %v3969, 4
      %v4197 = vrot.slane %v3969, 6
      %v4198 = vrot.slane %v3970, 2
      %v4199 = vrot.slane %v3970, 4
      %v4200 = vrot.slane %v3970, 6
      %v4201 = vrot.slane %v3971, 2
      %v4202 = vrot.slane %v3971, 4
      %v4203 = vrot.slane %v3971, 6
      %v4204 = vrot.slane %v3972, 2
      %v4205 = vrot.slane %v3972, 4
      %v4206 = vrot.slane %v3972, 6
      %v4207 = vrot.slane %v3973, 2
      %v4208 = vrot.slane %v3973, 4
      %v4209 = vrot.slane %v3973, 6
      %v4210 = vrot.slane %v3974, 2
      %v4211 = vrot.slane %v3974, 4
      %v4212 = vrot.slane %v3974, 6
      %v4213 = vrot.slane %v3975, 2
      %v4214 = vrot.slane %v3975, 4
      %v4215 = vrot.slane %v3975, 6
      %v4216 = vrot.slane %v3976, 2
      %v4217 = vrot.slane %v3976, 4
      %v4218 = vrot.slane %v3976, 6
      %v4219 = vrot.slane %v3977, 2
      %v4220 = vrot.slane %v3977, 4
      %v4221 = vrot.slane %v3977, 6
      %v4222 = vrot.slane %v3978, 2
      %v4223 = vrot.slane %v3978, 4
      %v4224 = vrot.slane %v3978, 6
      %v4225 = vrot.slane %v3979, 2
      %v4226 = vrot.slane %v3979, 4
      %v4227 = vrot.slane %v3979, 6
      %v4228 = vrot.slane %v3980, 2
      %v4229 = vrot.slane %v3980, 4
      %v4230 = vrot.slane %v3980, 6
      %v4231 = vrot.slane %v3981, 2
      %v4232 = vrot.slane %v3981, 4
      %v4233 = vrot.slane %v3981, 6
      %v4234 = vrot.slane %v3982, 2
      %v4235 = vrot.slane %v3982, 4
      %v4236 = vrot.slane %v3982, 6
      %v4237 = vrot.slane %v3983, 2
      %v4238 = vrot.slane %v3983, 4
      %v4239 = vrot.slane %v3983, 6
      %vm4432 = vcmask 58368
      %v4433 = vsel %vm4432, %v3920, -inf
      %v4434 = vrot.slane %v4433, 4
      %v4435 = vmax.f32 %v4433, %v4434
      %v4436 = vrot.slane %v4435, 2
      %v4437 = vmax.f32 %v4435, %v4436
      %v4438 = vrot.slane %v4437, 1
      %v4439 = vmax.f32 %v4437, %v4438
      %v4440 = vsel %vm4432, %v4048, -inf
      %v4441 = vrot.slane %v4440, 4
      %v4442 = vmax.f32 %v4440, %v4441
      %v4443 = vrot.slane %v4442, 2
      %v4444 = vmax.f32 %v4442, %v4443
      %v4445 = vrot.slane %v4444, 1
      %v4446 = vmax.f32 %v4444, %v4445
      %v4447 = vsel %vm4432, %v4049, -inf
      %v4448 = vrot.slane %v4447, 4
      %v4449 = vmax.f32 %v4447, %v4448
      %v4450 = vrot.slane %v4449, 2
      %v4451 = vmax.f32 %v4449, %v4450
      %v4452 = vrot.slane %v4451, 1
      %v4453 = vmax.f32 %v4451, %v4452
      %v4454 = vsel %vm4432, %v4050, -inf
      %v4455 = vrot.slane %v4454, 4
      %v4456 = vmax.f32 %v4454, %v4455
      %v4457 = vrot.slane %v4456, 2
      %v4458 = vmax.f32 %v4456, %v4457
      %v4459 = vrot.slane %v4458, 1
      %v4460 = vmax.f32 %v4458, %v4459
      %v4461 = vsel %vm4432, %v3921, -inf
      %v4462 = vrot.slane %v4461, 4
      %v4463 = vmax.f32 %v4461, %v4462
      %v4464 = vrot.slane %v4463, 2
      %v4465 = vmax.f32 %v4463, %v4464
      %v4466 = vrot.slane %v4465, 1
      %v4467 = vmax.f32 %v4465, %v4466
      %v4468 = vsel %vm4432, %v4051, -inf
      %v4469 = vrot.slane %v4468, 4
      %v4470 = vmax.f32 %v4468, %v4469
      %v4471 = vrot.slane %v4470, 2
      %v4472 = vmax.f32 %v4470, %v4471
      %v4473 = vrot.slane %v4472, 1
      %v4474 = vmax.f32 %v4472, %v4473
      %v4475 = vsel %vm4432, %v4052, -inf
      %v4476 = vrot.slane %v4475, 4
      %v4477 = vmax.f32 %v4475, %v4476
      %v4478 = vrot.slane %v4477, 2
      %v4479 = vmax.f32 %v4477, %v4478
      %v4480 = vrot.slane %v4479, 1
      %v4481 = vmax.f32 %v4479, %v4480
      %v4482 = vsel %vm4432, %v4053, -inf
      %v4483 = vrot.slane %v4482, 4
      %v4484 = vmax.f32 %v4482, %v4483
      %v4485 = vrot.slane %v4484, 2
      %v4486 = vmax.f32 %v4484, %v4485
      %v4487 = vrot.slane %v4486, 1
      %v4488 = vmax.f32 %v4486, %v4487
      %v4489 = vsel %vm4432, %v3922, -inf
      %v4490 = vrot.slane %v4489, 4
      %v4491 = vmax.f32 %v4489, %v4490
      %v4492 = vrot.slane %v4491, 2
      %v4493 = vmax.f32 %v4491, %v4492
      %v4494 = vrot.slane %v4493, 1
      %v4495 = vmax.f32 %v4493, %v4494
      %v4496 = vsel %vm4432, %v4054, -inf
      %v4497 = vrot.slane %v4496, 4
      %v4498 = vmax.f32 %v4496, %v4497
      %v4499 = vrot.slane %v4498, 2
      %v4500 = vmax.f32 %v4498, %v4499
      %v4501 = vrot.slane %v4500, 1
      %v4502 = vmax.f32 %v4500, %v4501
      %v4503 = vsel %vm4432, %v4055, -inf
      %v4504 = vrot.slane %v4503, 4
      %v4505 = vmax.f32 %v4503, %v4504
      %v4506 = vrot.slane %v4505, 2
      %v4507 = vmax.f32 %v4505, %v4506
      %v4508 = vrot.slane %v4507, 1
      %v4509 = vmax.f32 %v4507, %v4508
      %v4510 = vsel %vm4432, %v4056, -inf
      %v4511 = vrot.slane %v4510, 4
      %v4512 = vmax.f32 %v4510, %v4511
      %v4513 = vrot.slane %v4512, 2
      %v4514 = vmax.f32 %v4512, %v4513
      %v4515 = vrot.slane %v4514, 1
      %v4516 = vmax.f32 %v4514, %v4515
      %v4517 = vsel %vm4432, %v3923, -inf
      %v4518 = vrot.slane %v4517, 4
      %v4519 = vmax.f32 %v4517, %v4518
      %v4520 = vrot.slane %v4519, 2
      %v4521 = vmax.f32 %v4519, %v4520
      %v4522 = vrot.slane %v4521, 1
      %v4523 = vmax.f32 %v4521, %v4522
      %v4524 = vsel %vm4432, %v4057, -inf
      %v4525 = vrot.slane %v4524, 4
      %v4526 = vmax.f32 %v4524, %v4525
      %v4527 = vrot.slane %v4526, 2
      %v4528 = vmax.f32 %v4526, %v4527
      %v4529 = vrot.slane %v4528, 1
      %v4530 = vmax.f32 %v4528, %v4529
      %v4531 = vsel %vm4432, %v4058, -inf
      %v4532 = vrot.slane %v4531, 4
      %v4533 = vmax.f32 %v4531, %v4532
      %v4534 = vrot.slane %v4533, 2
      %v4535 = vmax.f32 %v4533, %v4534
      %v4536 = vrot.slane %v4535, 1
      %v4537 = vmax.f32 %v4535, %v4536
      %v4538 = vsel %vm4432, %v4059, -inf
      %v4539 = vrot.slane %v4538, 4
      %v4540 = vmax.f32 %v4538, %v4539
      %v4541 = vrot.slane %v4540, 2
      %v4542 = vmax.f32 %v4540, %v4541
      %v4543 = vrot.slane %v4542, 1
      %v4544 = vmax.f32 %v4542, %v4543
      %v4545 = vsel %vm4432, %v3924, -inf
      %v4546 = vrot.slane %v4545, 4
      %v4547 = vmax.f32 %v4545, %v4546
      %v4548 = vrot.slane %v4547, 2
      %v4549 = vmax.f32 %v4547, %v4548
      %v4550 = vrot.slane %v4549, 1
      %v4551 = vmax.f32 %v4549, %v4550
      %v4552 = vsel %vm4432, %v4060, -inf
      %v4553 = vrot.slane %v4552, 4
      %v4554 = vmax.f32 %v4552, %v4553
      %v4555 = vrot.slane %v4554, 2
      %v4556 = vmax.f32 %v4554, %v4555
      %v4557 = vrot.slane %v4556, 1
      %v4558 = vmax.f32 %v4556, %v4557
      %v4559 = vsel %vm4432, %v4061, -inf
      %v4560 = vrot.slane %v4559, 4
      %v4561 = vmax.f32 %v4559, %v4560
      %v4562 = vrot.slane %v4561, 2
      %v4563 = vmax.f32 %v4561, %v4562
      %v4564 = vrot.slane %v4563, 1
      %v4565 = vmax.f32 %v4563, %v4564
      %v4566 = vsel %vm4432, %v4062, -inf
      %v4567 = vrot.slane %v4566, 4
      %v4568 = vmax.f32 %v4566, %v4567
      %v4569 = vrot.slane %v4568, 2
      %v4570 = vmax.f32 %v4568, %v4569
      %v4571 = vrot.slane %v4570, 1
      %v4572 = vmax.f32 %v4570, %v4571
      %v4573 = vsel %vm4432, %v3925, -inf
      %v4574 = vrot.slane %v4573, 4
      %v4575 = vmax.f32 %v4573, %v4574
      %v4576 = vrot.slane %v4575, 2
      %v4577 = vmax.f32 %v4575, %v4576
      %v4578 = vrot.slane %v4577, 1
      %v4579 = vmax.f32 %v4577, %v4578
      %v4580 = vsel %vm4432, %v4063, -inf
      %v4581 = vrot.slane %v4580, 4
      %v4582 = vmax.f32 %v4580, %v4581
      %v4583 = vrot.slane %v4582, 2
      %v4584 = vmax.f32 %v4582, %v4583
      %v4585 = vrot.slane %v4584, 1
      %v4586 = vmax.f32 %v4584, %v4585
      %v4587 = vsel %vm4432, %v4064, -inf
      %v4588 = vrot.slane %v4587, 4
      %v4589 = vmax.f32 %v4587, %v4588
      %v4590 = vrot.slane %v4589, 2
      %v4591 = vmax.f32 %v4589, %v4590
      %v4592 = vrot.slane %v4591, 1
      %v4593 = vmax.f32 %v4591, %v4592
      %v4594 = vsel %vm4432, %v4065, -inf
      %v4595 = vrot.slane %v4594, 4
      %v4596 = vmax.f32 %v4594, %v4595
      %v4597 = vrot.slane %v4596, 2
      %v4598 = vmax.f32 %v4596, %v4597
      %v4599 = vrot.slane %v4598, 1
      %v4600 = vmax.f32 %v4598, %v4599
      %v4601 = vsel %vm4432, %v3926, -inf
      %v4602 = vrot.slane %v4601, 4
      %v4603 = vmax.f32 %v4601, %v4602
      %v4604 = vrot.slane %v4603, 2
      %v4605 = vmax.f32 %v4603, %v4604
      %v4606 = vrot.slane %v4605, 1
      %v4607 = vmax.f32 %v4605, %v4606
      %v4608 = vsel %vm4432, %v4066, -inf
      %v4609 = vrot.slane %v4608, 4
      %v4610 = vmax.f32 %v4608, %v4609
      %v4611 = vrot.slane %v4610, 2
      %v4612 = vmax.f32 %v4610, %v4611
      %v4613 = vrot.slane %v4612, 1
      %v4614 = vmax.f32 %v4612, %v4613
      %v4615 = vsel %vm4432, %v4067, -inf
      %v4616 = vrot.slane %v4615, 4
      %v4617 = vmax.f32 %v4615, %v4616
      %v4618 = vrot.slane %v4617, 2
      %v4619 = vmax.f32 %v4617, %v4618
      %v4620 = vrot.slane %v4619, 1
      %v4621 = vmax.f32 %v4619, %v4620
      %v4622 = vsel %vm4432, %v4068, -inf
      %v4623 = vrot.slane %v4622, 4
      %v4624 = vmax.f32 %v4622, %v4623
      %v4625 = vrot.slane %v4624, 2
      %v4626 = vmax.f32 %v4624, %v4625
      %v4627 = vrot.slane %v4626, 1
      %v4628 = vmax.f32 %v4626, %v4627
      %v4629 = vsel %vm4432, %v3927, -inf
      %v4630 = vrot.slane %v4629, 4
      %v4631 = vmax.f32 %v4629, %v4630
      %v4632 = vrot.slane %v4631, 2
      %v4633 = vmax.f32 %v4631, %v4632
      %v4634 = vrot.slane %v4633, 1
      %v4635 = vmax.f32 %v4633, %v4634
      %v4636 = vsel %vm4432, %v4069, -inf
      %v4637 = vrot.slane %v4636, 4
      %v4638 = vmax.f32 %v4636, %v4637
      %v4639 = vrot.slane %v4638, 2
      %v4640 = vmax.f32 %v4638, %v4639
      %v4641 = vrot.slane %v4640, 1
      %v4642 = vmax.f32 %v4640, %v4641
      %v4643 = vsel %vm4432, %v4070, -inf
      %v4644 = vrot.slane %v4643, 4
      %v4645 = vmax.f32 %v4643, %v4644
      %v4646 = vrot.slane %v4645, 2
      %v4647 = vmax.f32 %v4645, %v4646
      %v4648 = vrot.slane %v4647, 1
      %v4649 = vmax.f32 %v4647, %v4648
      %v4650 = vsel %vm4432, %v4071, -inf
      %v4651 = vrot.slane %v4650, 4
      %v4652 = vmax.f32 %v4650, %v4651
      %v4653 = vrot.slane %v4652, 2
      %v4654 = vmax.f32 %v4652, %v4653
      %v4655 = vrot.slane %v4654, 1
      %v4656 = vmax.f32 %v4654, %v4655
      %v4657 = vsel %vm4432, %v3928, -inf
      %v4658 = vrot.slane %v4657, 4
      %v4659 = vmax.f32 %v4657, %v4658
      %v4660 = vrot.slane %v4659, 2
      %v4661 = vmax.f32 %v4659, %v4660
      %v4662 = vrot.slane %v4661, 1
      %v4663 = vmax.f32 %v4661, %v4662
      %v4664 = vsel %vm4432, %v4072, -inf
      %v4665 = vrot.slane %v4664, 4
      %v4666 = vmax.f32 %v4664, %v4665
      %v4667 = vrot.slane %v4666, 2
      %v4668 = vmax.f32 %v4666, %v4667
      %v4669 = vrot.slane %v4668, 1
      %v4670 = vmax.f32 %v4668, %v4669
      %v4671 = vsel %vm4432, %v4073, -inf
      %v4672 = vrot.slane %v4671, 4
      %v4673 = vmax.f32 %v4671, %v4672
      %v4674 = vrot.slane %v4673, 2
      %v4675 = vmax.f32 %v4673, %v4674
      %v4676 = vrot.slane %v4675, 1
      %v4677 = vmax.f32 %v4675, %v4676
      %v4678 = vsel %vm4432, %v4074, -inf
      %v4679 = vrot.slane %v4678, 4
      %v4680 = vmax.f32 %v4678, %v4679
      %v4681 = vrot.slane %v4680, 2
      %v4682 = vmax.f32 %v4680, %v4681
      %v4683 = vrot.slane %v4682, 1
      %v4684 = vmax.f32 %v4682, %v4683
      %v4685 = vsel %vm4432, %v3929, -inf
      %v4686 = vrot.slane %v4685, 4
      %v4687 = vmax.f32 %v4685, %v4686
      %v4688 = vrot.slane %v4687, 2
      %v4689 = vmax.f32 %v4687, %v4688
      %v4690 = vrot.slane %v4689, 1
      %v4691 = vmax.f32 %v4689, %v4690
      %v4692 = vsel %vm4432, %v4075, -inf
      %v4693 = vrot.slane %v4692, 4
      %v4694 = vmax.f32 %v4692, %v4693
      %v4695 = vrot.slane %v4694, 2
      %v4696 = vmax.f32 %v4694, %v4695
      %v4697 = vrot.slane %v4696, 1
      %v4698 = vmax.f32 %v4696, %v4697
      %v4699 = vsel %vm4432, %v4076, -inf
      %v4700 = vrot.slane %v4699, 4
      %v4701 = vmax.f32 %v4699, %v4700
      %v4702 = vrot.slane %v4701, 2
      %v4703 = vmax.f32 %v4701, %v4702
      %v4704 = vrot.slane %v4703, 1
      %v4705 = vmax.f32 %v4703, %v4704
      %v4706 = vsel %vm4432, %v4077, -inf
      %v4707 = vrot.slane %v4706, 4
      %v4708 = vmax.f32 %v4706, %v4707
      %v4709 = vrot.slane %v4708, 2
      %v4710 = vmax.f32 %v4708, %v4709
      %v4711 = vrot.slane %v4710, 1
      %v4712 = vmax.f32 %v4710, %v4711
      %v4713 = vsel %vm4432, %v3930, -inf
      %v4714 = vrot.slane %v4713, 4
      %v4715 = vmax.f32 %v4713, %v4714
      %v4716 = vrot.slane %v4715, 2
      %v4717 = vmax.f32 %v4715, %v4716
      %v4718 = vrot.slane %v4717, 1
      %v4719 = vmax.f32 %v4717, %v4718
      %v4720 = vsel %vm4432, %v4078, -inf
      %v4721 = vrot.slane %v4720, 4
      %v4722 = vmax.f32 %v4720, %v4721
      %v4723 = vrot.slane %v4722, 2
      %v4724 = vmax.f32 %v4722, %v4723
      %v4725 = vrot.slane %v4724, 1
      %v4726 = vmax.f32 %v4724, %v4725
      %v4727 = vsel %vm4432, %v4079, -inf
      %v4728 = vrot.slane %v4727, 4
      %v4729 = vmax.f32 %v4727, %v4728
      %v4730 = vrot.slane %v4729, 2
      %v4731 = vmax.f32 %v4729, %v4730
      %v4732 = vrot.slane %v4731, 1
      %v4733 = vmax.f32 %v4731, %v4732
      %v4734 = vsel %vm4432, %v4080, -inf
      %v4735 = vrot.slane %v4734, 4
      %v4736 = vmax.f32 %v4734, %v4735
      %v4737 = vrot.slane %v4736, 2
      %v4738 = vmax.f32 %v4736, %v4737
      %v4739 = vrot.slane %v4738, 1
      %v4740 = vmax.f32 %v4738, %v4739
      %v4741 = vsel %vm4432, %v3931, -inf
      %v4742 = vrot.slane %v4741, 4
      %v4743 = vmax.f32 %v4741, %v4742
      %v4744 = vrot.slane %v4743, 2
      %v4745 = vmax.f32 %v4743, %v4744
      %v4746 = vrot.slane %v4745, 1
      %v4747 = vmax.f32 %v4745, %v4746
      %v4748 = vsel %vm4432, %v4081, -inf
      %v4749 = vrot.slane %v4748, 4
      %v4750 = vmax.f32 %v4748, %v4749
      %v4751 = vrot.slane %v4750, 2
      %v4752 = vmax.f32 %v4750, %v4751
      %v4753 = vrot.slane %v4752, 1
      %v4754 = vmax.f32 %v4752, %v4753
      %v4755 = vsel %vm4432, %v4082, -inf
      %v4756 = vrot.slane %v4755, 4
      %v4757 = vmax.f32 %v4755, %v4756
      %v4758 = vrot.slane %v4757, 2
      %v4759 = vmax.f32 %v4757, %v4758
      %v4760 = vrot.slane %v4759, 1
      %v4761 = vmax.f32 %v4759, %v4760
      %v4762 = vsel %vm4432, %v4083, -inf
      %v4763 = vrot.slane %v4762, 4
      %v4764 = vmax.f32 %v4762, %v4763
      %v4765 = vrot.slane %v4764, 2
      %v4766 = vmax.f32 %v4764, %v4765
      %v4767 = vrot.slane %v4766, 1
      %v4768 = vmax.f32 %v4766, %v4767
      %v4769 = vsel %vm4432, %v3932, -inf
      %v4770 = vrot.slane %v4769, 4
      %v4771 = vmax.f32 %v4769, %v4770
      %v4772 = vrot.slane %v4771, 2
      %v4773 = vmax.f32 %v4771, %v4772
      %v4774 = vrot.slane %v4773, 1
      %v4775 = vmax.f32 %v4773, %v4774
      %v4776 = vsel %vm4432, %v4084, -inf
      %v4777 = vrot.slane %v4776, 4
      %v4778 = vmax.f32 %v4776, %v4777
      %v4779 = vrot.slane %v4778, 2
      %v4780 = vmax.f32 %v4778, %v4779
      %v4781 = vrot.slane %v4780, 1
      %v4782 = vmax.f32 %v4780, %v4781
      %v4783 = vsel %vm4432, %v4085, -inf
      %v4784 = vrot.slane %v4783, 4
      %v4785 = vmax.f32 %v4783, %v4784
      %v4786 = vrot.slane %v4785, 2
      %v4787 = vmax.f32 %v4785, %v4786
      %v4788 = vrot.slane %v4787, 1
      %v4789 = vmax.f32 %v4787, %v4788
      %v4790 = vsel %vm4432, %v4086, -inf
      %v4791 = vrot.slane %v4790, 4
      %v4792 = vmax.f32 %v4790, %v4791
      %v4793 = vrot.slane %v4792, 2
      %v4794 = vmax.f32 %v4792, %v4793
      %v4795 = vrot.slane %v4794, 1
      %v4796 = vmax.f32 %v4794, %v4795
      %v4797 = vsel %vm4432, %v3933, -inf
      %v4798 = vrot.slane %v4797, 4
      %v4799 = vmax.f32 %v4797, %v4798
      %v4800 = vrot.slane %v4799, 2
      %v4801 = vmax.f32 %v4799, %v4800
      %v4802 = vrot.slane %v4801, 1
      %v4803 = vmax.f32 %v4801, %v4802
      %v4804 = vsel %vm4432, %v4087, -inf
      %v4805 = vrot.slane %v4804, 4
      %v4806 = vmax.f32 %v4804, %v4805
      %v4807 = vrot.slane %v4806, 2
      %v4808 = vmax.f32 %v4806, %v4807
      %v4809 = vrot.slane %v4808, 1
      %v4810 = vmax.f32 %v4808, %v4809
      %v4811 = vsel %vm4432, %v4088, -inf
      %v4812 = vrot.slane %v4811, 4
      %v4813 = vmax.f32 %v4811, %v4812
      %v4814 = vrot.slane %v4813, 2
      %v4815 = vmax.f32 %v4813, %v4814
      %v4816 = vrot.slane %v4815, 1
      %v4817 = vmax.f32 %v4815, %v4816
      %v4818 = vsel %vm4432, %v4089, -inf
      %v4819 = vrot.slane %v4818, 4
      %v4820 = vmax.f32 %v4818, %v4819
      %v4821 = vrot.slane %v4820, 2
      %v4822 = vmax.f32 %v4820, %v4821
      %v4823 = vrot.slane %v4822, 1
      %v4824 = vmax.f32 %v4822, %v4823
      %v4825 = vsel %vm4432, %v3934, -inf
      %v4826 = vrot.slane %v4825, 4
      %v4827 = vmax.f32 %v4825, %v4826
      %v4828 = vrot.slane %v4827, 2
      %v4829 = vmax.f32 %v4827, %v4828
      %v4830 = vrot.slane %v4829, 1
      %v4831 = vmax.f32 %v4829, %v4830
      %v4832 = vsel %vm4432, %v4090, -inf
      %v4833 = vrot.slane %v4832, 4
      %v4834 = vmax.f32 %v4832, %v4833
      %v4835 = vrot.slane %v4834, 2
      %v4836 = vmax.f32 %v4834, %v4835
      %v4837 = vrot.slane %v4836, 1
      %v4838 = vmax.f32 %v4836, %v4837
      %v4839 = vsel %vm4432, %v4091, -inf
      %v4840 = vrot.slane %v4839, 4
      %v4841 = vmax.f32 %v4839, %v4840
      %v4842 = vrot.slane %v4841, 2
      %v4843 = vmax.f32 %v4841, %v4842
      %v4844 = vrot.slane %v4843, 1
      %v4845 = vmax.f32 %v4843, %v4844
      %v4846 = vsel %vm4432, %v4092, -inf
      %v4847 = vrot.slane %v4846, 4
      %v4848 = vmax.f32 %v4846, %v4847
      %v4849 = vrot.slane %v4848, 2
      %v4850 = vmax.f32 %v4848, %v4849
      %v4851 = vrot.slane %v4850, 1
      %v4852 = vmax.f32 %v4850, %v4851
      %v4853 = vsel %vm4432, %v3935, -inf
      %v4854 = vrot.slane %v4853, 4
      %v4855 = vmax.f32 %v4853, %v4854
      %v4856 = vrot.slane %v4855, 2
      %v4857 = vmax.f32 %v4855, %v4856
      %v4858 = vrot.slane %v4857, 1
      %v4859 = vmax.f32 %v4857, %v4858
      %v4860 = vsel %vm4432, %v4093, -inf
      %v4861 = vrot.slane %v4860, 4
      %v4862 = vmax.f32 %v4860, %v4861
      %v4863 = vrot.slane %v4862, 2
      %v4864 = vmax.f32 %v4862, %v4863
      %v4865 = vrot.slane %v4864, 1
      %v4866 = vmax.f32 %v4864, %v4865
      %v4867 = vsel %vm4432, %v4094, -inf
      %v4868 = vrot.slane %v4867, 4
      %v4869 = vmax.f32 %v4867, %v4868
      %v4870 = vrot.slane %v4869, 2
      %v4871 = vmax.f32 %v4869, %v4870
      %v4872 = vrot.slane %v4871, 1
      %v4873 = vmax.f32 %v4871, %v4872
      %v4874 = vsel %vm4432, %v4095, -inf
      %v4875 = vrot.slane %v4874, 4
      %v4876 = vmax.f32 %v4874, %v4875
      %v4877 = vrot.slane %v4876, 2
      %v4878 = vmax.f32 %v4876, %v4877
      %v4879 = vrot.slane %v4878, 1
      %v4880 = vmax.f32 %v4878, %v4879
      %v4881 = vsel %vm4432, %v3936, -inf
      %v4882 = vrot.slane %v4881, 4
      %v4883 = vmax.f32 %v4881, %v4882
      %v4884 = vrot.slane %v4883, 2
      %v4885 = vmax.f32 %v4883, %v4884
      %v4886 = vrot.slane %v4885, 1
      %v4887 = vmax.f32 %v4885, %v4886
      %v4888 = vsel %vm4432, %v4096, -inf
      %v4889 = vrot.slane %v4888, 4
      %v4890 = vmax.f32 %v4888, %v4889
      %v4891 = vrot.slane %v4890, 2
      %v4892 = vmax.f32 %v4890, %v4891
      %v4893 = vrot.slane %v4892, 1
      %v4894 = vmax.f32 %v4892, %v4893
      %v4895 = vsel %vm4432, %v4097, -inf
      %v4896 = vrot.slane %v4895, 4
      %v4897 = vmax.f32 %v4895, %v4896
      %v4898 = vrot.slane %v4897, 2
      %v4899 = vmax.f32 %v4897, %v4898
      %v4900 = vrot.slane %v4899, 1
      %v4901 = vmax.f32 %v4899, %v4900
      %v4902 = vsel %vm4432, %v4098, -inf
      %v4903 = vrot.slane %v4902, 4
      %v4904 = vmax.f32 %v4902, %v4903
      %v4905 = vrot.slane %v4904, 2
      %v4906 = vmax.f32 %v4904, %v4905
      %v4907 = vrot.slane %v4906, 1
      %v4908 = vmax.f32 %v4906, %v4907
      %v4909 = vsel %vm4432, %v3937, -inf
      %v4910 = vrot.slane %v4909, 4
      %v4911 = vmax.f32 %v4909, %v4910
      %v4912 = vrot.slane %v4911, 2
      %v4913 = vmax.f32 %v4911, %v4912
      %v4914 = vrot.slane %v4913, 1
      %v4915 = vmax.f32 %v4913, %v4914
      %v4916 = vsel %vm4432, %v4099, -inf
      %v4917 = vrot.slane %v4916, 4
      %v4918 = vmax.f32 %v4916, %v4917
      %v4919 = vrot.slane %v4918, 2
      %v4920 = vmax.f32 %v4918, %v4919
      %v4921 = vrot.slane %v4920, 1
      %v4922 = vmax.f32 %v4920, %v4921
      %v4923 = vsel %vm4432, %v4100, -inf
      %v4924 = vrot.slane %v4923, 4
      %v4925 = vmax.f32 %v4923, %v4924
      %v4926 = vrot.slane %v4925, 2
      %v4927 = vmax.f32 %v4925, %v4926
      %v4928 = vrot.slane %v4927, 1
      %v4929 = vmax.f32 %v4927, %v4928
      %v4930 = vsel %vm4432, %v4101, -inf
      %v4931 = vrot.slane %v4930, 4
      %v4932 = vmax.f32 %v4930, %v4931
      %v4933 = vrot.slane %v4932, 2
      %v4934 = vmax.f32 %v4932, %v4933
      %v4935 = vrot.slane %v4934, 1
      %v4936 = vmax.f32 %v4934, %v4935
      %v4937 = vsel %vm4432, %v3938, -inf
      %v4938 = vrot.slane %v4937, 4
      %v4939 = vmax.f32 %v4937, %v4938
      %v4940 = vrot.slane %v4939, 2
      %v4941 = vmax.f32 %v4939, %v4940
      %v4942 = vrot.slane %v4941, 1
      %v4943 = vmax.f32 %v4941, %v4942
      %v4944 = vsel %vm4432, %v4102, -inf
      %v4945 = vrot.slane %v4944, 4
      %v4946 = vmax.f32 %v4944, %v4945
      %v4947 = vrot.slane %v4946, 2
      %v4948 = vmax.f32 %v4946, %v4947
      %v4949 = vrot.slane %v4948, 1
      %v4950 = vmax.f32 %v4948, %v4949
      %v4951 = vsel %vm4432, %v4103, -inf
      %v4952 = vrot.slane %v4951, 4
      %v4953 = vmax.f32 %v4951, %v4952
      %v4954 = vrot.slane %v4953, 2
      %v4955 = vmax.f32 %v4953, %v4954
      %v4956 = vrot.slane %v4955, 1
      %v4957 = vmax.f32 %v4955, %v4956
      %v4958 = vsel %vm4432, %v4104, -inf
      %v4959 = vrot.slane %v4958, 4
      %v4960 = vmax.f32 %v4958, %v4959
      %v4961 = vrot.slane %v4960, 2
      %v4962 = vmax.f32 %v4960, %v4961
      %v4963 = vrot.slane %v4962, 1
      %v4964 = vmax.f32 %v4962, %v4963
      %v4965 = vsel %vm4432, %v3939, -inf
      %v4966 = vrot.slane %v4965, 4
      %v4967 = vmax.f32 %v4965, %v4966
      %v4968 = vrot.slane %v4967, 2
      %v4969 = vmax.f32 %v4967, %v4968
      %v4970 = vrot.slane %v4969, 1
      %v4971 = vmax.f32 %v4969, %v4970
      %v4972 = vsel %vm4432, %v4105, -inf
      %v4973 = vrot.slane %v4972, 4
      %v4974 = vmax.f32 %v4972, %v4973
      %v4975 = vrot.slane %v4974, 2
      %v4976 = vmax.f32 %v4974, %v4975
      %v4977 = vrot.slane %v4976, 1
      %v4978 = vmax.f32 %v4976, %v4977
      %v4979 = vsel %vm4432, %v4106, -inf
      %v4980 = vrot.slane %v4979, 4
      %v4981 = vmax.f32 %v4979, %v4980
      %v4982 = vrot.slane %v4981, 2
      %v4983 = vmax.f32 %v4981, %v4982
      %v4984 = vrot.slane %v4983, 1
      %v4985 = vmax.f32 %v4983, %v4984
      %v4986 = vsel %vm4432, %v4107, -inf
      %v4987 = vrot.slane %v4986, 4
      %v4988 = vmax.f32 %v4986, %v4987
      %v4989 = vrot.slane %v4988, 2
      %v4990 = vmax.f32 %v4988, %v4989
      %v4991 = vrot.slane %v4990, 1
      %v4992 = vmax.f32 %v4990, %v4991
      %v4993 = vsel %vm4432, %v3940, -inf
      %v4994 = vrot.slane %v4993, 4
      %v4995 = vmax.f32 %v4993, %v4994
      %v4996 = vrot.slane %v4995, 2
      %v4997 = vmax.f32 %v4995, %v4996
      %v4998 = vrot.slane %v4997, 1
      %v4999 = vmax.f32 %v4997, %v4998
      %v5000 = vsel %vm4432, %v4108, -inf
      %v5001 = vrot.slane %v5000, 4
      %v5002 = vmax.f32 %v5000, %v5001
      %v5003 = vrot.slane %v5002, 2
      %v5004 = vmax.f32 %v5002, %v5003
      %v5005 = vrot.slane %v5004, 1
      %v5006 = vmax.f32 %v5004, %v5005
      %v5007 = vsel %vm4432, %v4109, -inf
      %v5008 = vrot.slane %v5007, 4
      %v5009 = vmax.f32 %v5007, %v5008
      %v5010 = vrot.slane %v5009, 2
      %v5011 = vmax.f32 %v5009, %v5010
      %v5012 = vrot.slane %v5011, 1
      %v5013 = vmax.f32 %v5011, %v5012
      %v5014 = vsel %vm4432, %v4110, -inf
      %v5015 = vrot.slane %v5014, 4
      %v5016 = vmax.f32 %v5014, %v5015
      %v5017 = vrot.slane %v5016, 2
      %v5018 = vmax.f32 %v5016, %v5017
      %v5019 = vrot.slane %v5018, 1
      %v5020 = vmax.f32 %v5018, %v5019
      %v5021 = vsel %vm4432, %v3941, -inf
      %v5022 = vrot.slane %v5021, 4
      %v5023 = vmax.f32 %v5021, %v5022
      %v5024 = vrot.slane %v5023, 2
      %v5025 = vmax.f32 %v5023, %v5024
      %v5026 = vrot.slane %v5025, 1
      %v5027 = vmax.f32 %v5025, %v5026
      %v5028 = vsel %vm4432, %v4111, -inf
      %v5029 = vrot.slane %v5028, 4
      %v5030 = vmax.f32 %v5028, %v5029
      %v5031 = vrot.slane %v5030, 2
      %v5032 = vmax.f32 %v5030, %v5031
      %v5033 = vrot.slane %v5032, 1
      %v5034 = vmax.f32 %v5032, %v5033
      %v5035 = vsel %vm4432, %v4112, -inf
      %v5036 = vrot.slane %v5035, 4
      %v5037 = vmax.f32 %v5035, %v5036
      %v5038 = vrot.slane %v5037, 2
      %v5039 = vmax.f32 %v5037, %v5038
      %v5040 = vrot.slane %v5039, 1
      %v5041 = vmax.f32 %v5039, %v5040
      %v5042 = vsel %vm4432, %v4113, -inf
      %v5043 = vrot.slane %v5042, 4
      %v5044 = vmax.f32 %v5042, %v5043
      %v5045 = vrot.slane %v5044, 2
      %v5046 = vmax.f32 %v5044, %v5045
      %v5047 = vrot.slane %v5046, 1
      %v5048 = vmax.f32 %v5046, %v5047
      %v5049 = vsel %vm4432, %v3942, -inf
      %v5050 = vrot.slane %v5049, 4
      %v5051 = vmax.f32 %v5049, %v5050
      %v5052 = vrot.slane %v5051, 2
      %v5053 = vmax.f32 %v5051, %v5052
      %v5054 = vrot.slane %v5053, 1
      %v5055 = vmax.f32 %v5053, %v5054
      %v5056 = vsel %vm4432, %v4114, -inf
      %v5057 = vrot.slane %v5056, 4
      %v5058 = vmax.f32 %v5056, %v5057
      %v5059 = vrot.slane %v5058, 2
      %v5060 = vmax.f32 %v5058, %v5059
      %v5061 = vrot.slane %v5060, 1
      %v5062 = vmax.f32 %v5060, %v5061
      %v5063 = vsel %vm4432, %v4115, -inf
      %v5064 = vrot.slane %v5063, 4
      %v5065 = vmax.f32 %v5063, %v5064
      %v5066 = vrot.slane %v5065, 2
      %v5067 = vmax.f32 %v5065, %v5066
      %v5068 = vrot.slane %v5067, 1
      %v5069 = vmax.f32 %v5067, %v5068
      %v5070 = vsel %vm4432, %v4116, -inf
      %v5071 = vrot.slane %v5070, 4
      %v5072 = vmax.f32 %v5070, %v5071
      %v5073 = vrot.slane %v5072, 2
      %v5074 = vmax.f32 %v5072, %v5073
      %v5075 = vrot.slane %v5074, 1
      %v5076 = vmax.f32 %v5074, %v5075
      %v5077 = vsel %vm4432, %v3943, -inf
      %v5078 = vrot.slane %v5077, 4
      %v5079 = vmax.f32 %v5077, %v5078
      %v5080 = vrot.slane %v5079, 2
      %v5081 = vmax.f32 %v5079, %v5080
      %v5082 = vrot.slane %v5081, 1
      %v5083 = vmax.f32 %v5081, %v5082
      %v5084 = vsel %vm4432, %v4117, -inf
      %v5085 = vrot.slane %v5084, 4
      %v5086 = vmax.f32 %v5084, %v5085
      %v5087 = vrot.slane %v5086, 2
      %v5088 = vmax.f32 %v5086, %v5087
      %v5089 = vrot.slane %v5088, 1
      %v5090 = vmax.f32 %v5088, %v5089
      %v5091 = vsel %vm4432, %v4118, -inf
      %v5092 = vrot.slane %v5091, 4
      %v5093 = vmax.f32 %v5091, %v5092
      %v5094 = vrot.slane %v5093, 2
      %v5095 = vmax.f32 %v5093, %v5094
      %v5096 = vrot.slane %v5095, 1
      %v5097 = vmax.f32 %v5095, %v5096
      %v5098 = vsel %vm4432, %v4119, -inf
      %v5099 = vrot.slane %v5098, 4
      %v5100 = vmax.f32 %v5098, %v5099
      %v5101 = vrot.slane %v5100, 2
      %v5102 = vmax.f32 %v5100, %v5101
      %v5103 = vrot.slane %v5102, 1
      %v5104 = vmax.f32 %v5102, %v5103
      %v5105 = vsel %vm4432, %v3944, -inf
      %v5106 = vrot.slane %v5105, 4
      %v5107 = vmax.f32 %v5105, %v5106
      %v5108 = vrot.slane %v5107, 2
      %v5109 = vmax.f32 %v5107, %v5108
      %v5110 = vrot.slane %v5109, 1
      %v5111 = vmax.f32 %v5109, %v5110
      %v5112 = vsel %vm4432, %v4120, -inf
      %v5113 = vrot.slane %v5112, 4
      %v5114 = vmax.f32 %v5112, %v5113
      %v5115 = vrot.slane %v5114, 2
      %v5116 = vmax.f32 %v5114, %v5115
      %v5117 = vrot.slane %v5116, 1
      %v5118 = vmax.f32 %v5116, %v5117
      %v5119 = vsel %vm4432, %v4121, -inf
      %v5120 = vrot.slane %v5119, 4
      %v5121 = vmax.f32 %v5119, %v5120
      %v5122 = vrot.slane %v5121, 2
      %v5123 = vmax.f32 %v5121, %v5122
      %v5124 = vrot.slane %v5123, 1
      %v5125 = vmax.f32 %v5123, %v5124
      %v5126 = vsel %vm4432, %v4122, -inf
      %v5127 = vrot.slane %v5126, 4
      %v5128 = vmax.f32 %v5126, %v5127
      %v5129 = vrot.slane %v5128, 2
      %v5130 = vmax.f32 %v5128, %v5129
      %v5131 = vrot.slane %v5130, 1
      %v5132 = vmax.f32 %v5130, %v5131
      %v5133 = vsel %vm4432, %v3945, -inf
      %v5134 = vrot.slane %v5133, 4
      %v5135 = vmax.f32 %v5133, %v5134
      %v5136 = vrot.slane %v5135, 2
      %v5137 = vmax.f32 %v5135, %v5136
      %v5138 = vrot.slane %v5137, 1
      %v5139 = vmax.f32 %v5137, %v5138
      %v5140 = vsel %vm4432, %v4123, -inf
      %v5141 = vrot.slane %v5140, 4
      %v5142 = vmax.f32 %v5140, %v5141
      %v5143 = vrot.slane %v5142, 2
      %v5144 = vmax.f32 %v5142, %v5143
      %v5145 = vrot.slane %v5144, 1
      %v5146 = vmax.f32 %v5144, %v5145
      %v5147 = vsel %vm4432, %v4124, -inf
      %v5148 = vrot.slane %v5147, 4
      %v5149 = vmax.f32 %v5147, %v5148
      %v5150 = vrot.slane %v5149, 2
      %v5151 = vmax.f32 %v5149, %v5150
      %v5152 = vrot.slane %v5151, 1
      %v5153 = vmax.f32 %v5151, %v5152
      %v5154 = vsel %vm4432, %v4125, -inf
      %v5155 = vrot.slane %v5154, 4
      %v5156 = vmax.f32 %v5154, %v5155
      %v5157 = vrot.slane %v5156, 2
      %v5158 = vmax.f32 %v5156, %v5157
      %v5159 = vrot.slane %v5158, 1
      %v5160 = vmax.f32 %v5158, %v5159
      %v5161 = vsel %vm4432, %v3946, -inf
      %v5162 = vrot.slane %v5161, 4
      %v5163 = vmax.f32 %v5161, %v5162
      %v5164 = vrot.slane %v5163, 2
      %v5165 = vmax.f32 %v5163, %v5164
      %v5166 = vrot.slane %v5165, 1
      %v5167 = vmax.f32 %v5165, %v5166
      %v5168 = vsel %vm4432, %v4126, -inf
      %v5169 = vrot.slane %v5168, 4
      %v5170 = vmax.f32 %v5168, %v5169
      %v5171 = vrot.slane %v5170, 2
      %v5172 = vmax.f32 %v5170, %v5171
      %v5173 = vrot.slane %v5172, 1
      %v5174 = vmax.f32 %v5172, %v5173
      %v5175 = vsel %vm4432, %v4127, -inf
      %v5176 = vrot.slane %v5175, 4
      %v5177 = vmax.f32 %v5175, %v5176
      %v5178 = vrot.slane %v5177, 2
      %v5179 = vmax.f32 %v5177, %v5178
      %v5180 = vrot.slane %v5179, 1
      %v5181 = vmax.f32 %v5179, %v5180
      %v5182 = vsel %vm4432, %v4128, -inf
      %v5183 = vrot.slane %v5182, 4
      %v5184 = vmax.f32 %v5182, %v5183
      %v5185 = vrot.slane %v5184, 2
      %v5186 = vmax.f32 %v5184, %v5185
      %v5187 = vrot.slane %v5186, 1
      %v5188 = vmax.f32 %v5186, %v5187
      %v5189 = vsel %vm4432, %v3947, -inf
      %v5190 = vrot.slane %v5189, 4
      %v5191 = vmax.f32 %v5189, %v5190
      %v5192 = vrot.slane %v5191, 2
      %v5193 = vmax.f32 %v5191, %v5192
      %v5194 = vrot.slane %v5193, 1
      %v5195 = vmax.f32 %v5193, %v5194
      %v5196 = vsel %vm4432, %v4129, -inf
      %v5197 = vrot.slane %v5196, 4
      %v5198 = vmax.f32 %v5196, %v5197
      %v5199 = vrot.slane %v5198, 2
      %v5200 = vmax.f32 %v5198, %v5199
      %v5201 = vrot.slane %v5200, 1
      %v5202 = vmax.f32 %v5200, %v5201
      %v5203 = vsel %vm4432, %v4130, -inf
      %v5204 = vrot.slane %v5203, 4
      %v5205 = vmax.f32 %v5203, %v5204
      %v5206 = vrot.slane %v5205, 2
      %v5207 = vmax.f32 %v5205, %v5206
      %v5208 = vrot.slane %v5207, 1
      %v5209 = vmax.f32 %v5207, %v5208
      %v5210 = vsel %vm4432, %v4131, -inf
      %v5211 = vrot.slane %v5210, 4
      %v5212 = vmax.f32 %v5210, %v5211
      %v5213 = vrot.slane %v5212, 2
      %v5214 = vmax.f32 %v5212, %v5213
      %v5215 = vrot.slane %v5214, 1
      %v5216 = vmax.f32 %v5214, %v5215
      %v5217 = vsel %vm4432, %v3948, -inf
      %v5218 = vrot.slane %v5217, 4
      %v5219 = vmax.f32 %v5217, %v5218
      %v5220 = vrot.slane %v5219, 2
      %v5221 = vmax.f32 %v5219, %v5220
      %v5222 = vrot.slane %v5221, 1
      %v5223 = vmax.f32 %v5221, %v5222
      %v5224 = vsel %vm4432, %v4132, -inf
      %v5225 = vrot.slane %v5224, 4
      %v5226 = vmax.f32 %v5224, %v5225
      %v5227 = vrot.slane %v5226, 2
      %v5228 = vmax.f32 %v5226, %v5227
      %v5229 = vrot.slane %v5228, 1
      %v5230 = vmax.f32 %v5228, %v5229
      %v5231 = vsel %vm4432, %v4133, -inf
      %v5232 = vrot.slane %v5231, 4
      %v5233 = vmax.f32 %v5231, %v5232
      %v5234 = vrot.slane %v5233, 2
      %v5235 = vmax.f32 %v5233, %v5234
      %v5236 = vrot.slane %v5235, 1
      %v5237 = vmax.f32 %v5235, %v5236
      %v5238 = vsel %vm4432, %v4134, -inf
      %v5239 = vrot.slane %v5238, 4
      %v5240 = vmax.f32 %v5238, %v5239
      %v5241 = vrot.slane %v5240, 2
      %v5242 = vmax.f32 %v5240, %v5241
      %v5243 = vrot.slane %v5242, 1
      %v5244 = vmax.f32 %v5242, %v5243
      %v5245 = vsel %vm4432, %v3949, -inf
      %v5246 = vrot.slane %v5245, 4
      %v5247 = vmax.f32 %v5245, %v5246
      %v5248 = vrot.slane %v5247, 2
      %v5249 = vmax.f32 %v5247, %v5248
      %v5250 = vrot.slane %v5249, 1
      %v5251 = vmax.f32 %v5249, %v5250
      %v5252 = vsel %vm4432, %v4135, -inf
      %v5253 = vrot.slane %v5252, 4
      %v5254 = vmax.f32 %v5252, %v5253
      %v5255 = vrot.slane %v5254, 2
      %v5256 = vmax.f32 %v5254, %v5255
      %v5257 = vrot.slane %v5256, 1
      %v5258 = vmax.f32 %v5256, %v5257
      %v5259 = vsel %vm4432, %v4136, -inf
      %v5260 = vrot.slane %v5259, 4
      %v5261 = vmax.f32 %v5259, %v5260
      %v5262 = vrot.slane %v5261, 2
      %v5263 = vmax.f32 %v5261, %v5262
      %v5264 = vrot.slane %v5263, 1
      %v5265 = vmax.f32 %v5263, %v5264
      %v5266 = vsel %vm4432, %v4137, -inf
      %v5267 = vrot.slane %v5266, 4
      %v5268 = vmax.f32 %v5266, %v5267
      %v5269 = vrot.slane %v5268, 2
      %v5270 = vmax.f32 %v5268, %v5269
      %v5271 = vrot.slane %v5270, 1
      %v5272 = vmax.f32 %v5270, %v5271
      %v5273 = vsel %vm4432, %v3950, -inf
      %v5274 = vrot.slane %v5273, 4
      %v5275 = vmax.f32 %v5273, %v5274
      %v5276 = vrot.slane %v5275, 2
      %v5277 = vmax.f32 %v5275, %v5276
      %v5278 = vrot.slane %v5277, 1
      %v5279 = vmax.f32 %v5277, %v5278
      %v5280 = vsel %vm4432, %v4138, -inf
      %v5281 = vrot.slane %v5280, 4
      %v5282 = vmax.f32 %v5280, %v5281
      %v5283 = vrot.slane %v5282, 2
      %v5284 = vmax.f32 %v5282, %v5283
      %v5285 = vrot.slane %v5284, 1
      %v5286 = vmax.f32 %v5284, %v5285
      %v5287 = vsel %vm4432, %v4139, -inf
      %v5288 = vrot.slane %v5287, 4
      %v5289 = vmax.f32 %v5287, %v5288
      %v5290 = vrot.slane %v5289, 2
      %v5291 = vmax.f32 %v5289, %v5290
      %v5292 = vrot.slane %v5291, 1
      %v5293 = vmax.f32 %v5291, %v5292
      %v5294 = vsel %vm4432, %v4140, -inf
      %v5295 = vrot.slane %v5294, 4
      %v5296 = vmax.f32 %v5294, %v5295
      %v5297 = vrot.slane %v5296, 2
      %v5298 = vmax.f32 %v5296, %v5297
      %v5299 = vrot.slane %v5298, 1
      %v5300 = vmax.f32 %v5298, %v5299
      %v5301 = vsel %vm4432, %v3951, -inf
      %v5302 = vrot.slane %v5301, 4
      %v5303 = vmax.f32 %v5301, %v5302
      %v5304 = vrot.slane %v5303, 2
      %v5305 = vmax.f32 %v5303, %v5304
      %v5306 = vrot.slane %v5305, 1
      %v5307 = vmax.f32 %v5305, %v5306
      %v5308 = vsel %vm4432, %v4141, -inf
      %v5309 = vrot.slane %v5308, 4
      %v5310 = vmax.f32 %v5308, %v5309
      %v5311 = vrot.slane %v5310, 2
      %v5312 = vmax.f32 %v5310, %v5311
      %v5313 = vrot.slane %v5312, 1
      %v5314 = vmax.f32 %v5312, %v5313
      %v5315 = vsel %vm4432, %v4142, -inf
      %v5316 = vrot.slane %v5315, 4
      %v5317 = vmax.f32 %v5315, %v5316
      %v5318 = vrot.slane %v5317, 2
      %v5319 = vmax.f32 %v5317, %v5318
      %v5320 = vrot.slane %v5319, 1
      %v5321 = vmax.f32 %v5319, %v5320
      %v5322 = vsel %vm4432, %v4143, -inf
      %v5323 = vrot.slane %v5322, 4
      %v5324 = vmax.f32 %v5322, %v5323
      %v5325 = vrot.slane %v5324, 2
      %v5326 = vmax.f32 %v5324, %v5325
      %v5327 = vrot.slane %v5326, 1
      %v5328 = vmax.f32 %v5326, %v5327
      %v5329 = vsel %vm4432, %v3952, -inf
      %v5330 = vrot.slane %v5329, 4
      %v5331 = vmax.f32 %v5329, %v5330
      %v5332 = vrot.slane %v5331, 2
      %v5333 = vmax.f32 %v5331, %v5332
      %v5334 = vrot.slane %v5333, 1
      %v5335 = vmax.f32 %v5333, %v5334
      %v5336 = vsel %vm4432, %v4144, -inf
      %v5337 = vrot.slane %v5336, 4
      %v5338 = vmax.f32 %v5336, %v5337
      %v5339 = vrot.slane %v5338, 2
      %v5340 = vmax.f32 %v5338, %v5339
      %v5341 = vrot.slane %v5340, 1
      %v5342 = vmax.f32 %v5340, %v5341
      %v5343 = vsel %vm4432, %v4145, -inf
      %v5344 = vrot.slane %v5343, 4
      %v5345 = vmax.f32 %v5343, %v5344
      %v5346 = vrot.slane %v5345, 2
      %v5347 = vmax.f32 %v5345, %v5346
      %v5348 = vrot.slane %v5347, 1
      %v5349 = vmax.f32 %v5347, %v5348
      %v5350 = vsel %vm4432, %v4146, -inf
      %v5351 = vrot.slane %v5350, 4
      %v5352 = vmax.f32 %v5350, %v5351
      %v5353 = vrot.slane %v5352, 2
      %v5354 = vmax.f32 %v5352, %v5353
      %v5355 = vrot.slane %v5354, 1
      %v5356 = vmax.f32 %v5354, %v5355
      %v5357 = vsel %vm4432, %v3953, -inf
      %v5358 = vrot.slane %v5357, 4
      %v5359 = vmax.f32 %v5357, %v5358
      %v5360 = vrot.slane %v5359, 2
      %v5361 = vmax.f32 %v5359, %v5360
      %v5362 = vrot.slane %v5361, 1
      %v5363 = vmax.f32 %v5361, %v5362
      %v5364 = vsel %vm4432, %v4147, -inf
      %v5365 = vrot.slane %v5364, 4
      %v5366 = vmax.f32 %v5364, %v5365
      %v5367 = vrot.slane %v5366, 2
      %v5368 = vmax.f32 %v5366, %v5367
      %v5369 = vrot.slane %v5368, 1
      %v5370 = vmax.f32 %v5368, %v5369
      %v5371 = vsel %vm4432, %v4148, -inf
      %v5372 = vrot.slane %v5371, 4
      %v5373 = vmax.f32 %v5371, %v5372
      %v5374 = vrot.slane %v5373, 2
      %v5375 = vmax.f32 %v5373, %v5374
      %v5376 = vrot.slane %v5375, 1
      %v5377 = vmax.f32 %v5375, %v5376
      %v5378 = vsel %vm4432, %v4149, -inf
      %v5379 = vrot.slane %v5378, 4
      %v5380 = vmax.f32 %v5378, %v5379
      %v5381 = vrot.slane %v5380, 2
      %v5382 = vmax.f32 %v5380, %v5381
      %v5383 = vrot.slane %v5382, 1
      %v5384 = vmax.f32 %v5382, %v5383
      %v5385 = vsel %vm4432, %v3954, -inf
      %v5386 = vrot.slane %v5385, 4
      %v5387 = vmax.f32 %v5385, %v5386
      %v5388 = vrot.slane %v5387, 2
      %v5389 = vmax.f32 %v5387, %v5388
      %v5390 = vrot.slane %v5389, 1
      %v5391 = vmax.f32 %v5389, %v5390
      %v5392 = vsel %vm4432, %v4150, -inf
      %v5393 = vrot.slane %v5392, 4
      %v5394 = vmax.f32 %v5392, %v5393
      %v5395 = vrot.slane %v5394, 2
      %v5396 = vmax.f32 %v5394, %v5395
      %v5397 = vrot.slane %v5396, 1
      %v5398 = vmax.f32 %v5396, %v5397
      %v5399 = vsel %vm4432, %v4151, -inf
      %v5400 = vrot.slane %v5399, 4
      %v5401 = vmax.f32 %v5399, %v5400
      %v5402 = vrot.slane %v5401, 2
      %v5403 = vmax.f32 %v5401, %v5402
      %v5404 = vrot.slane %v5403, 1
      %v5405 = vmax.f32 %v5403, %v5404
      %v5406 = vsel %vm4432, %v4152, -inf
      %v5407 = vrot.slane %v5406, 4
      %v5408 = vmax.f32 %v5406, %v5407
      %v5409 = vrot.slane %v5408, 2
      %v5410 = vmax.f32 %v5408, %v5409
      %v5411 = vrot.slane %v5410, 1
      %v5412 = vmax.f32 %v5410, %v5411
      %v5413 = vsel %vm4432, %v3955, -inf
      %v5414 = vrot.slane %v5413, 4
      %v5415 = vmax.f32 %v5413, %v5414
      %v5416 = vrot.slane %v5415, 2
      %v5417 = vmax.f32 %v5415, %v5416
      %v5418 = vrot.slane %v5417, 1
      %v5419 = vmax.f32 %v5417, %v5418
      %v5420 = vsel %vm4432, %v4153, -inf
      %v5421 = vrot.slane %v5420, 4
      %v5422 = vmax.f32 %v5420, %v5421
      %v5423 = vrot.slane %v5422, 2
      %v5424 = vmax.f32 %v5422, %v5423
      %v5425 = vrot.slane %v5424, 1
      %v5426 = vmax.f32 %v5424, %v5425
      %v5427 = vsel %vm4432, %v4154, -inf
      %v5428 = vrot.slane %v5427, 4
      %v5429 = vmax.f32 %v5427, %v5428
      %v5430 = vrot.slane %v5429, 2
      %v5431 = vmax.f32 %v5429, %v5430
      %v5432 = vrot.slane %v5431, 1
      %v5433 = vmax.f32 %v5431, %v5432
      %v5434 = vsel %vm4432, %v4155, -inf
      %v5435 = vrot.slane %v5434, 4
      %v5436 = vmax.f32 %v5434, %v5435
      %v5437 = vrot.slane %v5436, 2
      %v5438 = vmax.f32 %v5436, %v5437
      %v5439 = vrot.slane %v5438, 1
      %v5440 = vmax.f32 %v5438, %v5439
      %v5441 = vsel %vm4432, %v3956, -inf
      %v5442 = vrot.slane %v5441, 4
      %v5443 = vmax.f32 %v5441, %v5442
      %v5444 = vrot.slane %v5443, 2
      %v5445 = vmax.f32 %v5443, %v5444
      %v5446 = vrot.slane %v5445, 1
      %v5447 = vmax.f32 %v5445, %v5446
      %v5448 = vsel %vm4432, %v4156, -inf
      %v5449 = vrot.slane %v5448, 4
      %v5450 = vmax.f32 %v5448, %v5449
      %v5451 = vrot.slane %v5450, 2
      %v5452 = vmax.f32 %v5450, %v5451
      %v5453 = vrot.slane %v5452, 1
      %v5454 = vmax.f32 %v5452, %v5453
      %v5455 = vsel %vm4432, %v4157, -inf
      %v5456 = vrot.slane %v5455, 4
      %v5457 = vmax.f32 %v5455, %v5456
      %v5458 = vrot.slane %v5457, 2
      %v5459 = vmax.f32 %v5457, %v5458
      %v5460 = vrot.slane %v5459, 1
      %v5461 = vmax.f32 %v5459, %v5460
      %v5462 = vsel %vm4432, %v4158, -inf
      %v5463 = vrot.slane %v5462, 4
      %v5464 = vmax.f32 %v5462, %v5463
      %v5465 = vrot.slane %v5464, 2
      %v5466 = vmax.f32 %v5464, %v5465
      %v5467 = vrot.slane %v5466, 1
      %v5468 = vmax.f32 %v5466, %v5467
      %v5469 = vsel %vm4432, %v3957, -inf
      %v5470 = vrot.slane %v5469, 4
      %v5471 = vmax.f32 %v5469, %v5470
      %v5472 = vrot.slane %v5471, 2
      %v5473 = vmax.f32 %v5471, %v5472
      %v5474 = vrot.slane %v5473, 1
      %v5475 = vmax.f32 %v5473, %v5474
      %v5476 = vsel %vm4432, %v4159, -inf
      %v5477 = vrot.slane %v5476, 4
      %v5478 = vmax.f32 %v5476, %v5477
      %v5479 = vrot.slane %v5478, 2
      %v5480 = vmax.f32 %v5478, %v5479
      %v5481 = vrot.slane %v5480, 1
      %v5482 = vmax.f32 %v5480, %v5481
      %v5483 = vsel %vm4432, %v4160, -inf
      %v5484 = vrot.slane %v5483, 4
      %v5485 = vmax.f32 %v5483, %v5484
      %v5486 = vrot.slane %v5485, 2
      %v5487 = vmax.f32 %v5485, %v5486
      %v5488 = vrot.slane %v5487, 1
      %v5489 = vmax.f32 %v5487, %v5488
      %v5490 = vsel %vm4432, %v4161, -inf
      %v5491 = vrot.slane %v5490, 4
      %v5492 = vmax.f32 %v5490, %v5491
      %v5493 = vrot.slane %v5492, 2
      %v5494 = vmax.f32 %v5492, %v5493
      %v5495 = vrot.slane %v5494, 1
      %v5496 = vmax.f32 %v5494, %v5495
      %v5497 = vsel %vm4432, %v3958, -inf
      %v5498 = vrot.slane %v5497, 4
      %v5499 = vmax.f32 %v5497, %v5498
      %v5500 = vrot.slane %v5499, 2
      %v5501 = vmax.f32 %v5499, %v5500
      %v5502 = vrot.slane %v5501, 1
      %v5503 = vmax.f32 %v5501, %v5502
      %v5504 = vsel %vm4432, %v4162, -inf
      %v5505 = vrot.slane %v5504, 4
      %v5506 = vmax.f32 %v5504, %v5505
      %v5507 = vrot.slane %v5506, 2
      %v5508 = vmax.f32 %v5506, %v5507
      %v5509 = vrot.slane %v5508, 1
      %v5510 = vmax.f32 %v5508, %v5509
      %v5511 = vsel %vm4432, %v4163, -inf
      %v5512 = vrot.slane %v5511, 4
      %v5513 = vmax.f32 %v5511, %v5512
      %v5514 = vrot.slane %v5513, 2
      %v5515 = vmax.f32 %v5513, %v5514
      %v5516 = vrot.slane %v5515, 1
      %v5517 = vmax.f32 %v5515, %v5516
      %v5518 = vsel %vm4432, %v4164, -inf
      %v5519 = vrot.slane %v5518, 4
      %v5520 = vmax.f32 %v5518, %v5519
      %v5521 = vrot.slane %v5520, 2
      %v5522 = vmax.f32 %v5520, %v5521
      %v5523 = vrot.slane %v5522, 1
      %v5524 = vmax.f32 %v5522, %v5523
      %v5525 = vsel %vm4432, %v3959, -inf
      %v5526 = vrot.slane %v5525, 4
      %v5527 = vmax.f32 %v5525, %v5526
      %v5528 = vrot.slane %v5527, 2
      %v5529 = vmax.f32 %v5527, %v5528
      %v5530 = vrot.slane %v5529, 1
      %v5531 = vmax.f32 %v5529, %v5530
      %v5532 = vsel %vm4432, %v4165, -inf
      %v5533 = vrot.slane %v5532, 4
      %v5534 = vmax.f32 %v5532, %v5533
      %v5535 = vrot.slane %v5534, 2
      %v5536 = vmax.f32 %v5534, %v5535
      %v5537 = vrot.slane %v5536, 1
      %v5538 = vmax.f32 %v5536, %v5537
      %v5539 = vsel %vm4432, %v4166, -inf
      %v5540 = vrot.slane %v5539, 4
      %v5541 = vmax.f32 %v5539, %v5540
      %v5542 = vrot.slane %v5541, 2
      %v5543 = vmax.f32 %v5541, %v5542
      %v5544 = vrot.slane %v5543, 1
      %v5545 = vmax.f32 %v5543, %v5544
      %v5546 = vsel %vm4432, %v4167, -inf
      %v5547 = vrot.slane %v5546, 4
      %v5548 = vmax.f32 %v5546, %v5547
      %v5549 = vrot.slane %v5548, 2
      %v5550 = vmax.f32 %v5548, %v5549
      %v5551 = vrot.slane %v5550, 1
      %v5552 = vmax.f32 %v5550, %v5551
      %v5553 = vsel %vm4432, %v3960, -inf
      %v5554 = vrot.slane %v5553, 4
      %v5555 = vmax.f32 %v5553, %v5554
      %v5556 = vrot.slane %v5555, 2
      %v5557 = vmax.f32 %v5555, %v5556
      %v5558 = vrot.slane %v5557, 1
      %v5559 = vmax.f32 %v5557, %v5558
      %v5560 = vsel %vm4432, %v4168, -inf
      %v5561 = vrot.slane %v5560, 4
      %v5562 = vmax.f32 %v5560, %v5561
      %v5563 = vrot.slane %v5562, 2
      %v5564 = vmax.f32 %v5562, %v5563
      %v5565 = vrot.slane %v5564, 1
      %v5566 = vmax.f32 %v5564, %v5565
      %v5567 = vsel %vm4432, %v4169, -inf
      %v5568 = vrot.slane %v5567, 4
      %v5569 = vmax.f32 %v5567, %v5568
      %v5570 = vrot.slane %v5569, 2
      %v5571 = vmax.f32 %v5569, %v5570
      %v5572 = vrot.slane %v5571, 1
      %v5573 = vmax.f32 %v5571, %v5572
      %v5574 = vsel %vm4432, %v4170, -inf
      %v5575 = vrot.slane %v5574, 4
      %v5576 = vmax.f32 %v5574, %v5575
      %v5577 = vrot.slane %v5576, 2
      %v5578 = vmax.f32 %v5576, %v5577
      %v5579 = vrot.slane %v5578, 1
      %v5580 = vmax.f32 %v5578, %v5579
      %v5581 = vsel %vm4432, %v3961, -inf
      %v5582 = vrot.slane %v5581, 4
      %v5583 = vmax.f32 %v5581, %v5582
      %v5584 = vrot.slane %v5583, 2
      %v5585 = vmax.f32 %v5583, %v5584
      %v5586 = vrot.slane %v5585, 1
      %v5587 = vmax.f32 %v5585, %v5586
      %v5588 = vsel %vm4432, %v4171, -inf
      %v5589 = vrot.slane %v5588, 4
      %v5590 = vmax.f32 %v5588, %v5589
      %v5591 = vrot.slane %v5590, 2
      %v5592 = vmax.f32 %v5590, %v5591
      %v5593 = vrot.slane %v5592, 1
      %v5594 = vmax.f32 %v5592, %v5593
      %v5595 = vsel %vm4432, %v4172, -inf
      %v5596 = vrot.slane %v5595, 4
      %v5597 = vmax.f32 %v5595, %v5596
      %v5598 = vrot.slane %v5597, 2
      %v5599 = vmax.f32 %v5597, %v5598
      %v5600 = vrot.slane %v5599, 1
      %v5601 = vmax.f32 %v5599, %v5600
      %v5602 = vsel %vm4432, %v4173, -inf
      %v5603 = vrot.slane %v5602, 4
      %v5604 = vmax.f32 %v5602, %v5603
      %v5605 = vrot.slane %v5604, 2
      %v5606 = vmax.f32 %v5604, %v5605
      %v5607 = vrot.slane %v5606, 1
      %v5608 = vmax.f32 %v5606, %v5607
      %v5609 = vsel %vm4432, %v3962, -inf
      %v5610 = vrot.slane %v5609, 4
      %v5611 = vmax.f32 %v5609, %v5610
      %v5612 = vrot.slane %v5611, 2
      %v5613 = vmax.f32 %v5611, %v5612
      %v5614 = vrot.slane %v5613, 1
      %v5615 = vmax.f32 %v5613, %v5614
      %v5616 = vsel %vm4432, %v4174, -inf
      %v5617 = vrot.slane %v5616, 4
      %v5618 = vmax.f32 %v5616, %v5617
      %v5619 = vrot.slane %v5618, 2
      %v5620 = vmax.f32 %v5618, %v5619
      %v5621 = vrot.slane %v5620, 1
      %v5622 = vmax.f32 %v5620, %v5621
      %v5623 = vsel %vm4432, %v4175, -inf
      %v5624 = vrot.slane %v5623, 4
      %v5625 = vmax.f32 %v5623, %v5624
      %v5626 = vrot.slane %v5625, 2
      %v5627 = vmax.f32 %v5625, %v5626
      %v5628 = vrot.slane %v5627, 1
      %v5629 = vmax.f32 %v5627, %v5628
      %v5630 = vsel %vm4432, %v4176, -inf
      %v5631 = vrot.slane %v5630, 4
      %v5632 = vmax.f32 %v5630, %v5631
      %v5633 = vrot.slane %v5632, 2
      %v5634 = vmax.f32 %v5632, %v5633
      %v5635 = vrot.slane %v5634, 1
      %v5636 = vmax.f32 %v5634, %v5635
      %v5637 = vsel %vm4432, %v3963, -inf
      %v5638 = vrot.slane %v5637, 4
      %v5639 = vmax.f32 %v5637, %v5638
      %v5640 = vrot.slane %v5639, 2
      %v5641 = vmax.f32 %v5639, %v5640
      %v5642 = vrot.slane %v5641, 1
      %v5643 = vmax.f32 %v5641, %v5642
      %v5644 = vsel %vm4432, %v4177, -inf
      %v5645 = vrot.slane %v5644, 4
      %v5646 = vmax.f32 %v5644, %v5645
      %v5647 = vrot.slane %v5646, 2
      %v5648 = vmax.f32 %v5646, %v5647
      %v5649 = vrot.slane %v5648, 1
      %v5650 = vmax.f32 %v5648, %v5649
      %v5651 = vsel %vm4432, %v4178, -inf
      %v5652 = vrot.slane %v5651, 4
      %v5653 = vmax.f32 %v5651, %v5652
      %v5654 = vrot.slane %v5653, 2
      %v5655 = vmax.f32 %v5653, %v5654
      %v5656 = vrot.slane %v5655, 1
      %v5657 = vmax.f32 %v5655, %v5656
      %v5658 = vsel %vm4432, %v4179, -inf
      %v5659 = vrot.slane %v5658, 4
      %v5660 = vmax.f32 %v5658, %v5659
      %v5661 = vrot.slane %v5660, 2
      %v5662 = vmax.f32 %v5660, %v5661
      %v5663 = vrot.slane %v5662, 1
      %v5664 = vmax.f32 %v5662, %v5663
      %v5665 = vsel %vm4432, %v3964, -inf
      %v5666 = vrot.slane %v5665, 4
      %v5667 = vmax.f32 %v5665, %v5666
      %v5668 = vrot.slane %v5667, 2
      %v5669 = vmax.f32 %v5667, %v5668
      %v5670 = vrot.slane %v5669, 1
      %v5671 = vmax.f32 %v5669, %v5670
      %v5672 = vsel %vm4432, %v4180, -inf
      %v5673 = vrot.slane %v5672, 4
      %v5674 = vmax.f32 %v5672, %v5673
      %v5675 = vrot.slane %v5674, 2
      %v5676 = vmax.f32 %v5674, %v5675
      %v5677 = vrot.slane %v5676, 1
      %v5678 = vmax.f32 %v5676, %v5677
      %v5679 = vsel %vm4432, %v4181, -inf
      %v5680 = vrot.slane %v5679, 4
      %v5681 = vmax.f32 %v5679, %v5680
      %v5682 = vrot.slane %v5681, 2
      %v5683 = vmax.f32 %v5681, %v5682
      %v5684 = vrot.slane %v5683, 1
      %v5685 = vmax.f32 %v5683, %v5684
      %v5686 = vsel %vm4432, %v4182, -inf
      %v5687 = vrot.slane %v5686, 4
      %v5688 = vmax.f32 %v5686, %v5687
      %v5689 = vrot.slane %v5688, 2
      %v5690 = vmax.f32 %v5688, %v5689
      %v5691 = vrot.slane %v5690, 1
      %v5692 = vmax.f32 %v5690, %v5691
      %v5693 = vsel %vm4432, %v3965, -inf
      %v5694 = vrot.slane %v5693, 4
      %v5695 = vmax.f32 %v5693, %v5694
      %v5696 = vrot.slane %v5695, 2
      %v5697 = vmax.f32 %v5695, %v5696
      %v5698 = vrot.slane %v5697, 1
      %v5699 = vmax.f32 %v5697, %v5698
      %v5700 = vsel %vm4432, %v4183, -inf
      %v5701 = vrot.slane %v5700, 4
      %v5702 = vmax.f32 %v5700, %v5701
      %v5703 = vrot.slane %v5702, 2
      %v5704 = vmax.f32 %v5702, %v5703
      %v5705 = vrot.slane %v5704, 1
      %v5706 = vmax.f32 %v5704, %v5705
      %v5707 = vsel %vm4432, %v4184, -inf
      %v5708 = vrot.slane %v5707, 4
      %v5709 = vmax.f32 %v5707, %v5708
      %v5710 = vrot.slane %v5709, 2
      %v5711 = vmax.f32 %v5709, %v5710
      %v5712 = vrot.slane %v5711, 1
      %v5713 = vmax.f32 %v5711, %v5712
      %v5714 = vsel %vm4432, %v4185, -inf
      %v5715 = vrot.slane %v5714, 4
      %v5716 = vmax.f32 %v5714, %v5715
      %v5717 = vrot.slane %v5716, 2
      %v5718 = vmax.f32 %v5716, %v5717
      %v5719 = vrot.slane %v5718, 1
      %v5720 = vmax.f32 %v5718, %v5719
      %v5721 = vsel %vm4432, %v3966, -inf
      %v5722 = vrot.slane %v5721, 4
      %v5723 = vmax.f32 %v5721, %v5722
      %v5724 = vrot.slane %v5723, 2
      %v5725 = vmax.f32 %v5723, %v5724
      %v5726 = vrot.slane %v5725, 1
      %v5727 = vmax.f32 %v5725, %v5726
      %v5728 = vsel %vm4432, %v4186, -inf
      %v5729 = vrot.slane %v5728, 4
      %v5730 = vmax.f32 %v5728, %v5729
      %v5731 = vrot.slane %v5730, 2
      %v5732 = vmax.f32 %v5730, %v5731
      %v5733 = vrot.slane %v5732, 1
      %v5734 = vmax.f32 %v5732, %v5733
      %v5735 = vsel %vm4432, %v4187, -inf
      %v5736 = vrot.slane %v5735, 4
      %v5737 = vmax.f32 %v5735, %v5736
      %v5738 = vrot.slane %v5737, 2
      %v5739 = vmax.f32 %v5737, %v5738
      %v5740 = vrot.slane %v5739, 1
      %v5741 = vmax.f32 %v5739, %v5740
      %v5742 = vsel %vm4432, %v4188, -inf
      %v5743 = vrot.slane %v5742, 4
      %v5744 = vmax.f32 %v5742, %v5743
      %v5745 = vrot.slane %v5744, 2
      %v5746 = vmax.f32 %v5744, %v5745
      %v5747 = vrot.slane %v5746, 1
      %v5748 = vmax.f32 %v5746, %v5747
      %v5749 = vsel %vm4432, %v3967, -inf
      %v5750 = vrot.slane %v5749, 4
      %v5751 = vmax.f32 %v5749, %v5750
      %v5752 = vrot.slane %v5751, 2
      %v5753 = vmax.f32 %v5751, %v5752
      %v5754 = vrot.slane %v5753, 1
      %v5755 = vmax.f32 %v5753, %v5754
      %v5756 = vsel %vm4432, %v4189, -inf
      %v5757 = vrot.slane %v5756, 4
      %v5758 = vmax.f32 %v5756, %v5757
      %v5759 = vrot.slane %v5758, 2
      %v5760 = vmax.f32 %v5758, %v5759
      %v5761 = vrot.slane %v5760, 1
      %v5762 = vmax.f32 %v5760, %v5761
      %v5763 = vsel %vm4432, %v4190, -inf
      %v5764 = vrot.slane %v5763, 4
      %v5765 = vmax.f32 %v5763, %v5764
      %v5766 = vrot.slane %v5765, 2
      %v5767 = vmax.f32 %v5765, %v5766
      %v5768 = vrot.slane %v5767, 1
      %v5769 = vmax.f32 %v5767, %v5768
      %v5770 = vsel %vm4432, %v4191, -inf
      %v5771 = vrot.slane %v5770, 4
      %v5772 = vmax.f32 %v5770, %v5771
      %v5773 = vrot.slane %v5772, 2
      %v5774 = vmax.f32 %v5772, %v5773
      %v5775 = vrot.slane %v5774, 1
      %v5776 = vmax.f32 %v5774, %v5775
      %v5777 = vsel %vm4432, %v3968, -inf
      %v5778 = vrot.slane %v5777, 4
      %v5779 = vmax.f32 %v5777, %v5778
      %v5780 = vrot.slane %v5779, 2
      %v5781 = vmax.f32 %v5779, %v5780
      %v5782 = vrot.slane %v5781, 1
      %v5783 = vmax.f32 %v5781, %v5782
      %v5784 = vsel %vm4432, %v4192, -inf
      %v5785 = vrot.slane %v5784, 4
      %v5786 = vmax.f32 %v5784, %v5785
      %v5787 = vrot.slane %v5786, 2
      %v5788 = vmax.f32 %v5786, %v5787
      %v5789 = vrot.slane %v5788, 1
      %v5790 = vmax.f32 %v5788, %v5789
      %v5791 = vsel %vm4432, %v4193, -inf
      %v5792 = vrot.slane %v5791, 4
      %v5793 = vmax.f32 %v5791, %v5792
      %v5794 = vrot.slane %v5793, 2
      %v5795 = vmax.f32 %v5793, %v5794
      %v5796 = vrot.slane %v5795, 1
      %v5797 = vmax.f32 %v5795, %v5796
      %v5798 = vsel %vm4432, %v4194, -inf
      %v5799 = vrot.slane %v5798, 4
      %v5800 = vmax.f32 %v5798, %v5799
      %v5801 = vrot.slane %v5800, 2
      %v5802 = vmax.f32 %v5800, %v5801
      %v5803 = vrot.slane %v5802, 1
      %v5804 = vmax.f32 %v5802, %v5803
      %v5805 = vsel %vm4432, %v3969, -inf
      %v5806 = vrot.slane %v5805, 4
      %v5807 = vmax.f32 %v5805, %v5806
      %v5808 = vrot.slane %v5807, 2
      %v5809 = vmax.f32 %v5807, %v5808
      %v5810 = vrot.slane %v5809, 1
      %v5811 = vmax.f32 %v5809, %v5810
      %v5812 = vsel %vm4432, %v4195, -inf
      %v5813 = vrot.slane %v5812, 4
      %v5814 = vmax.f32 %v5812, %v5813
      %v5815 = vrot.slane %v5814, 2
      %v5816 = vmax.f32 %v5814, %v5815
      %v5817 = vrot.slane %v5816, 1
      %v5818 = vmax.f32 %v5816, %v5817
      %v5819 = vsel %vm4432, %v4196, -inf
      %v5820 = vrot.slane %v5819, 4
      %v5821 = vmax.f32 %v5819, %v5820
      %v5822 = vrot.slane %v5821, 2
      %v5823 = vmax.f32 %v5821, %v5822
      %v5824 = vrot.slane %v5823, 1
      %v5825 = vmax.f32 %v5823, %v5824
      %v5826 = vsel %vm4432, %v4197, -inf
      %v5827 = vrot.slane %v5826, 4
      %v5828 = vmax.f32 %v5826, %v5827
      %v5829 = vrot.slane %v5828, 2
      %v5830 = vmax.f32 %v5828, %v5829
      %v5831 = vrot.slane %v5830, 1
      %v5832 = vmax.f32 %v5830, %v5831
      %v5833 = vsel %vm4432, %v3970, -inf
      %v5834 = vrot.slane %v5833, 4
      %v5835 = vmax.f32 %v5833, %v5834
      %v5836 = vrot.slane %v5835, 2
      %v5837 = vmax.f32 %v5835, %v5836
      %v5838 = vrot.slane %v5837, 1
      %v5839 = vmax.f32 %v5837, %v5838
      %v5840 = vsel %vm4432, %v4198, -inf
      %v5841 = vrot.slane %v5840, 4
      %v5842 = vmax.f32 %v5840, %v5841
      %v5843 = vrot.slane %v5842, 2
      %v5844 = vmax.f32 %v5842, %v5843
      %v5845 = vrot.slane %v5844, 1
      %v5846 = vmax.f32 %v5844, %v5845
      %v5847 = vsel %vm4432, %v4199, -inf
      %v5848 = vrot.slane %v5847, 4
      %v5849 = vmax.f32 %v5847, %v5848
      %v5850 = vrot.slane %v5849, 2
      %v5851 = vmax.f32 %v5849, %v5850
      %v5852 = vrot.slane %v5851, 1
      %v5853 = vmax.f32 %v5851, %v5852
      %v5854 = vsel %vm4432, %v4200, -inf
      %v5855 = vrot.slane %v5854, 4
      %v5856 = vmax.f32 %v5854, %v5855
      %v5857 = vrot.slane %v5856, 2
      %v5858 = vmax.f32 %v5856, %v5857
      %v5859 = vrot.slane %v5858, 1
      %v5860 = vmax.f32 %v5858, %v5859
      %v5861 = vsel %vm4432, %v3971, -inf
      %v5862 = vrot.slane %v5861, 4
      %v5863 = vmax.f32 %v5861, %v5862
      %v5864 = vrot.slane %v5863, 2
      %v5865 = vmax.f32 %v5863, %v5864
      %v5866 = vrot.slane %v5865, 1
      %v5867 = vmax.f32 %v5865, %v5866
      %v5868 = vsel %vm4432, %v4201, -inf
      %v5869 = vrot.slane %v5868, 4
      %v5870 = vmax.f32 %v5868, %v5869
      %v5871 = vrot.slane %v5870, 2
      %v5872 = vmax.f32 %v5870, %v5871
      %v5873 = vrot.slane %v5872, 1
      %v5874 = vmax.f32 %v5872, %v5873
      %v5875 = vsel %vm4432, %v4202, -inf
      %v5876 = vrot.slane %v5875, 4
      %v5877 = vmax.f32 %v5875, %v5876
      %v5878 = vrot.slane %v5877, 2
      %v5879 = vmax.f32 %v5877, %v5878
      %v5880 = vrot.slane %v5879, 1
      %v5881 = vmax.f32 %v5879, %v5880
      %v5882 = vsel %vm4432, %v4203, -inf
      %v5883 = vrot.slane %v5882, 4
      %v5884 = vmax.f32 %v5882, %v5883
      %v5885 = vrot.slane %v5884, 2
      %v5886 = vmax.f32 %v5884, %v5885
      %v5887 = vrot.slane %v5886, 1
      %v5888 = vmax.f32 %v5886, %v5887
      %v5889 = vsel %vm4432, %v3972, -inf
      %v5890 = vrot.slane %v5889, 4
      %v5891 = vmax.f32 %v5889, %v5890
      %v5892 = vrot.slane %v5891, 2
      %v5893 = vmax.f32 %v5891, %v5892
      %v5894 = vrot.slane %v5893, 1
      %v5895 = vmax.f32 %v5893, %v5894
      %v5896 = vsel %vm4432, %v4204, -inf
      %v5897 = vrot.slane %v5896, 4
      %v5898 = vmax.f32 %v5896, %v5897
      %v5899 = vrot.slane %v5898, 2
      %v5900 = vmax.f32 %v5898, %v5899
      %v5901 = vrot.slane %v5900, 1
      %v5902 = vmax.f32 %v5900, %v5901
      %v5903 = vsel %vm4432, %v4205, -inf
      %v5904 = vrot.slane %v5903, 4
      %v5905 = vmax.f32 %v5903, %v5904
      %v5906 = vrot.slane %v5905, 2
      %v5907 = vmax.f32 %v5905, %v5906
      %v5908 = vrot.slane %v5907, 1
      %v5909 = vmax.f32 %v5907, %v5908
      %v5910 = vsel %vm4432, %v4206, -inf
      %v5911 = vrot.slane %v5910, 4
      %v5912 = vmax.f32 %v5910, %v5911
      %v5913 = vrot.slane %v5912, 2
      %v5914 = vmax.f32 %v5912, %v5913
      %v5915 = vrot.slane %v5914, 1
      %v5916 = vmax.f32 %v5914, %v5915
      %v5917 = vsel %vm4432, %v3973, -inf
      %v5918 = vrot.slane %v5917, 4
      %v5919 = vmax.f32 %v5917, %v5918
      %v5920 = vrot.slane %v5919, 2
      %v5921 = vmax.f32 %v5919, %v5920
      %v5922 = vrot.slane %v5921, 1
      %v5923 = vmax.f32 %v5921, %v5922
      %v5924 = vsel %vm4432, %v4207, -inf
      %v5925 = vrot.slane %v5924, 4
      %v5926 = vmax.f32 %v5924, %v5925
      %v5927 = vrot.slane %v5926, 2
      %v5928 = vmax.f32 %v5926, %v5927
      %v5929 = vrot.slane %v5928, 1
      %v5930 = vmax.f32 %v5928, %v5929
      %v5931 = vsel %vm4432, %v4208, -inf
      %v5932 = vrot.slane %v5931, 4
      %v5933 = vmax.f32 %v5931, %v5932
      %v5934 = vrot.slane %v5933, 2
      %v5935 = vmax.f32 %v5933, %v5934
      %v5936 = vrot.slane %v5935, 1
      %v5937 = vmax.f32 %v5935, %v5936
      %v5938 = vsel %vm4432, %v4209, -inf
      %v5939 = vrot.slane %v5938, 4
      %v5940 = vmax.f32 %v5938, %v5939
      %v5941 = vrot.slane %v5940, 2
      %v5942 = vmax.f32 %v5940, %v5941
      %v5943 = vrot.slane %v5942, 1
      %v5944 = vmax.f32 %v5942, %v5943
      %v5945 = vsel %vm4432, %v3974, -inf
      %v5946 = vrot.slane %v5945, 4
      %v5947 = vmax.f32 %v5945, %v5946
      %v5948 = vrot.slane %v5947, 2
      %v5949 = vmax.f32 %v5947, %v5948
      %v5950 = vrot.slane %v5949, 1
      %v5951 = vmax.f32 %v5949, %v5950
      %v5952 = vsel %vm4432, %v4210, -inf
      %v5953 = vrot.slane %v5952, 4
      %v5954 = vmax.f32 %v5952, %v5953
      %v5955 = vrot.slane %v5954, 2
      %v5956 = vmax.f32 %v5954, %v5955
      %v5957 = vrot.slane %v5956, 1
      %v5958 = vmax.f32 %v5956, %v5957
      %v5959 = vsel %vm4432, %v4211, -inf
      %v5960 = vrot.slane %v5959, 4
      %v5961 = vmax.f32 %v5959, %v5960
      %v5962 = vrot.slane %v5961, 2
      %v5963 = vmax.f32 %v5961, %v5962
      %v5964 = vrot.slane %v5963, 1
      %v5965 = vmax.f32 %v5963, %v5964
      %v5966 = vsel %vm4432, %v4212, -inf
      %v5967 = vrot.slane %v5966, 4
      %v5968 = vmax.f32 %v5966, %v5967
      %v5969 = vrot.slane %v5968, 2
      %v5970 = vmax.f32 %v5968, %v5969
      %v5971 = vrot.slane %v5970, 1
      %v5972 = vmax.f32 %v5970, %v5971
      %v5973 = vsel %vm4432, %v3975, -inf
      %v5974 = vrot.slane %v5973, 4
      %v5975 = vmax.f32 %v5973, %v5974
      %v5976 = vrot.slane %v5975, 2
      %v5977 = vmax.f32 %v5975, %v5976
      %v5978 = vrot.slane %v5977, 1
      %v5979 = vmax.f32 %v5977, %v5978
      %v5980 = vsel %vm4432, %v4213, -inf
      %v5981 = vrot.slane %v5980, 4
      %v5982 = vmax.f32 %v5980, %v5981
      %v5983 = vrot.slane %v5982, 2
      %v5984 = vmax.f32 %v5982, %v5983
      %v5985 = vrot.slane %v5984, 1
      %v5986 = vmax.f32 %v5984, %v5985
      %v5987 = vsel %vm4432, %v4214, -inf
      %v5988 = vrot.slane %v5987, 4
      %v5989 = vmax.f32 %v5987, %v5988
      %v5990 = vrot.slane %v5989, 2
      %v5991 = vmax.f32 %v5989, %v5990
      %v5992 = vrot.slane %v5991, 1
      %v5993 = vmax.f32 %v5991, %v5992
      %v5994 = vsel %vm4432, %v4215, -inf
      %v5995 = vrot.slane %v5994, 4
      %v5996 = vmax.f32 %v5994, %v5995
      %v5997 = vrot.slane %v5996, 2
      %v5998 = vmax.f32 %v5996, %v5997
      %v5999 = vrot.slane %v5998, 1
      %v6000 = vmax.f32 %v5998, %v5999
      %v6001 = vsel %vm4432, %v3976, -inf
      %v6002 = vrot.slane %v6001, 4
      %v6003 = vmax.f32 %v6001, %v6002
      %v6004 = vrot.slane %v6003, 2
      %v6005 = vmax.f32 %v6003, %v6004
      %v6006 = vrot.slane %v6005, 1
      %v6007 = vmax.f32 %v6005, %v6006
      %v6008 = vsel %vm4432, %v4216, -inf
      %v6009 = vrot.slane %v6008, 4
      %v6010 = vmax.f32 %v6008, %v6009
      %v6011 = vrot.slane %v6010, 2
      %v6012 = vmax.f32 %v6010, %v6011
      %v6013 = vrot.slane %v6012, 1
      %v6014 = vmax.f32 %v6012, %v6013
      %v6015 = vsel %vm4432, %v4217, -inf
      %v6016 = vrot.slane %v6015, 4
      %v6017 = vmax.f32 %v6015, %v6016
      %v6018 = vrot.slane %v6017, 2
      %v6019 = vmax.f32 %v6017, %v6018
      %v6020 = vrot.slane %v6019, 1
      %v6021 = vmax.f32 %v6019, %v6020
      %v6022 = vsel %vm4432, %v4218, -inf
      %v6023 = vrot.slane %v6022, 4
      %v6024 = vmax.f32 %v6022, %v6023
      %v6025 = vrot.slane %v6024, 2
      %v6026 = vmax.f32 %v6024, %v6025
      %v6027 = vrot.slane %v6026, 1
      %v6028 = vmax.f32 %v6026, %v6027
      %v6029 = vsel %vm4432, %v3977, -inf
      %v6030 = vrot.slane %v6029, 4
      %v6031 = vmax.f32 %v6029, %v6030
      %v6032 = vrot.slane %v6031, 2
      %v6033 = vmax.f32 %v6031, %v6032
      %v6034 = vrot.slane %v6033, 1
      %v6035 = vmax.f32 %v6033, %v6034
      %v6036 = vsel %vm4432, %v4219, -inf
      %v6037 = vrot.slane %v6036, 4
      %v6038 = vmax.f32 %v6036, %v6037
      %v6039 = vrot.slane %v6038, 2
      %v6040 = vmax.f32 %v6038, %v6039
      %v6041 = vrot.slane %v6040, 1
      %v6042 = vmax.f32 %v6040, %v6041
      %v6043 = vsel %vm4432, %v4220, -inf
      %v6044 = vrot.slane %v6043, 4
      %v6045 = vmax.f32 %v6043, %v6044
      %v6046 = vrot.slane %v6045, 2
      %v6047 = vmax.f32 %v6045, %v6046
      %v6048 = vrot.slane %v6047, 1
      %v6049 = vmax.f32 %v6047, %v6048
      %v6050 = vsel %vm4432, %v4221, -inf
      %v6051 = vrot.slane %v6050, 4
      %v6052 = vmax.f32 %v6050, %v6051
      %v6053 = vrot.slane %v6052, 2
      %v6054 = vmax.f32 %v6052, %v6053
      %v6055 = vrot.slane %v6054, 1
      %v6056 = vmax.f32 %v6054, %v6055
      %v6057 = vsel %vm4432, %v3978, -inf
      %v6058 = vrot.slane %v6057, 4
      %v6059 = vmax.f32 %v6057, %v6058
      %v6060 = vrot.slane %v6059, 2
      %v6061 = vmax.f32 %v6059, %v6060
      %v6062 = vrot.slane %v6061, 1
      %v6063 = vmax.f32 %v6061, %v6062
      %v6064 = vsel %vm4432, %v4222, -inf
      %v6065 = vrot.slane %v6064, 4
      %v6066 = vmax.f32 %v6064, %v6065
      %v6067 = vrot.slane %v6066, 2
      %v6068 = vmax.f32 %v6066, %v6067
      %v6069 = vrot.slane %v6068, 1
      %v6070 = vmax.f32 %v6068, %v6069
      %v6071 = vsel %vm4432, %v4223, -inf
      %v6072 = vrot.slane %v6071, 4
      %v6073 = vmax.f32 %v6071, %v6072
      %v6074 = vrot.slane %v6073, 2
      %v6075 = vmax.f32 %v6073, %v6074
      %v6076 = vrot.slane %v6075, 1
      %v6077 = vmax.f32 %v6075, %v6076
      %v6078 = vsel %vm4432, %v4224, -inf
      %v6079 = vrot.slane %v6078, 4
      %v6080 = vmax.f32 %v6078, %v6079
      %v6081 = vrot.slane %v6080, 2
      %v6082 = vmax.f32 %v6080, %v6081
      %v6083 = vrot.slane %v6082, 1
      %v6084 = vmax.f32 %v6082, %v6083
      %v6085 = vsel %vm4432, %v3979, -inf
      %v6086 = vrot.slane %v6085, 4
      %v6087 = vmax.f32 %v6085, %v6086
      %v6088 = vrot.slane %v6087, 2
      %v6089 = vmax.f32 %v6087, %v6088
      %v6090 = vrot.slane %v6089, 1
      %v6091 = vmax.f32 %v6089, %v6090
      %v6092 = vsel %vm4432, %v4225, -inf
      %v6093 = vrot.slane %v6092, 4
      %v6094 = vmax.f32 %v6092, %v6093
      %v6095 = vrot.slane %v6094, 2
      %v6096 = vmax.f32 %v6094, %v6095
      %v6097 = vrot.slane %v6096, 1
      %v6098 = vmax.f32 %v6096, %v6097
      %v6099 = vsel %vm4432, %v4226, -inf
      %v6100 = vrot.slane %v6099, 4
      %v6101 = vmax.f32 %v6099, %v6100
      %v6102 = vrot.slane %v6101, 2
      %v6103 = vmax.f32 %v6101, %v6102
      %v6104 = vrot.slane %v6103, 1
      %v6105 = vmax.f32 %v6103, %v6104
      %v6106 = vsel %vm4432, %v4227, -inf
      %v6107 = vrot.slane %v6106, 4
      %v6108 = vmax.f32 %v6106, %v6107
      %v6109 = vrot.slane %v6108, 2
      %v6110 = vmax.f32 %v6108, %v6109
      %v6111 = vrot.slane %v6110, 1
      %v6112 = vmax.f32 %v6110, %v6111
      %v6113 = vsel %vm4432, %v3980, -inf
      %v6114 = vrot.slane %v6113, 4
      %v6115 = vmax.f32 %v6113, %v6114
      %v6116 = vrot.slane %v6115, 2
      %v6117 = vmax.f32 %v6115, %v6116
      %v6118 = vrot.slane %v6117, 1
      %v6119 = vmax.f32 %v6117, %v6118
      %v6120 = vsel %vm4432, %v4228, -inf
      %v6121 = vrot.slane %v6120, 4
      %v6122 = vmax.f32 %v6120, %v6121
      %v6123 = vrot.slane %v6122, 2
      %v6124 = vmax.f32 %v6122, %v6123
      %v6125 = vrot.slane %v6124, 1
      %v6126 = vmax.f32 %v6124, %v6125
      %v6127 = vsel %vm4432, %v4229, -inf
      %v6128 = vrot.slane %v6127, 4
      %v6129 = vmax.f32 %v6127, %v6128
      %v6130 = vrot.slane %v6129, 2
      %v6131 = vmax.f32 %v6129, %v6130
      %v6132 = vrot.slane %v6131, 1
      %v6133 = vmax.f32 %v6131, %v6132
      %v6134 = vsel %vm4432, %v4230, -inf
      %v6135 = vrot.slane %v6134, 4
      %v6136 = vmax.f32 %v6134, %v6135
      %v6137 = vrot.slane %v6136, 2
      %v6138 = vmax.f32 %v6136, %v6137
      %v6139 = vrot.slane %v6138, 1
      %v6140 = vmax.f32 %v6138, %v6139
      %v6141 = vsel %vm4432, %v3981, -inf
      %v6142 = vrot.slane %v6141, 4
      %v6143 = vmax.f32 %v6141, %v6142
      %v6144 = vrot.slane %v6143, 2
      %v6145 = vmax.f32 %v6143, %v6144
      %v6146 = vrot.slane %v6145, 1
      %v6147 = vmax.f32 %v6145, %v6146
      %v6148 = vsel %vm4432, %v4231, -inf
      %v6149 = vrot.slane %v6148, 4
      %v6150 = vmax.f32 %v6148, %v6149
      %v6151 = vrot.slane %v6150, 2
      %v6152 = vmax.f32 %v6150, %v6151
      %v6153 = vrot.slane %v6152, 1
      %v6154 = vmax.f32 %v6152, %v6153
      %v6155 = vsel %vm4432, %v4232, -inf
      %v6156 = vrot.slane %v6155, 4
      %v6157 = vmax.f32 %v6155, %v6156
      %v6158 = vrot.slane %v6157, 2
      %v6159 = vmax.f32 %v6157, %v6158
      %v6160 = vrot.slane %v6159, 1
      %v6161 = vmax.f32 %v6159, %v6160
      %v6162 = vsel %vm4432, %v4233, -inf
      %v6163 = vrot.slane %v6162, 4
      %v6164 = vmax.f32 %v6162, %v6163
      %v6165 = vrot.slane %v6164, 2
      %v6166 = vmax.f32 %v6164, %v6165
      %v6167 = vrot.slane %v6166, 1
      %v6168 = vmax.f32 %v6166, %v6167
      %v6169 = vsel %vm4432, %v3982, -inf
      %v6170 = vrot.slane %v6169, 4
      %v6171 = vmax.f32 %v6169, %v6170
      %v6172 = vrot.slane %v6171, 2
      %v6173 = vmax.f32 %v6171, %v6172
      %v6174 = vrot.slane %v6173, 1
      %v6175 = vmax.f32 %v6173, %v6174
      %v6176 = vsel %vm4432, %v4234, -inf
      %v6177 = vrot.slane %v6176, 4
      %v6178 = vmax.f32 %v6176, %v6177
      %v6179 = vrot.slane %v6178, 2
      %v6180 = vmax.f32 %v6178, %v6179
      %v6181 = vrot.slane %v6180, 1
      %v6182 = vmax.f32 %v6180, %v6181
      %v6183 = vsel %vm4432, %v4235, -inf
      %v6184 = vrot.slane %v6183, 4
      %v6185 = vmax.f32 %v6183, %v6184
      %v6186 = vrot.slane %v6185, 2
      %v6187 = vmax.f32 %v6185, %v6186
      %v6188 = vrot.slane %v6187, 1
      %v6189 = vmax.f32 %v6187, %v6188
      %v6190 = vsel %vm4432, %v4236, -inf
      %v6191 = vrot.slane %v6190, 4
      %v6192 = vmax.f32 %v6190, %v6191
      %v6193 = vrot.slane %v6192, 2
      %v6194 = vmax.f32 %v6192, %v6193
      %v6195 = vrot.slane %v6194, 1
      %v6196 = vmax.f32 %v6194, %v6195
      %v6197 = vsel %vm4432, %v3983, -inf
      %v6198 = vrot.slane %v6197, 4
      %v6199 = vmax.f32 %v6197, %v6198
      %v6200 = vrot.slane %v6199, 2
      %v6201 = vmax.f32 %v6199, %v6200
      %v6202 = vrot.slane %v6201, 1
      %v6203 = vmax.f32 %v6201, %v6202
      %v6204 = vsel %vm4432, %v4237, -inf
      %v6205 = vrot.slane %v6204, 4
      %v6206 = vmax.f32 %v6204, %v6205
      %v6207 = vrot.slane %v6206, 2
      %v6208 = vmax.f32 %v6206, %v6207
      %v6209 = vrot.slane %v6208, 1
      %v6210 = vmax.f32 %v6208, %v6209
      %v6211 = vsel %vm4432, %v4238, -inf
      %v6212 = vrot.slane %v6211, 4
      %v6213 = vmax.f32 %v6211, %v6212
      %v6214 = vrot.slane %v6213, 2
      %v6215 = vmax.f32 %v6213, %v6214
      %v6216 = vrot.slane %v6215, 1
      %v6217 = vmax.f32 %v6215, %v6216
      %v6218 = vsel %vm4432, %v4239, -inf
      %v6219 = vrot.slane %v6218, 4
      %v6220 = vmax.f32 %v6218, %v6219
      %v6221 = vrot.slane %v6220, 2
      %v6222 = vmax.f32 %v6220, %v6221
      %v6223 = vrot.slane %v6222, 1
      %v6224 = vmax.f32 %v6222, %v6223
      %v6225 = vsel %vm3071, %v4439, -inf
      %v6226 = vsel %vm3071, %v4551, -inf
      %v6227 = vmax.f32 %v6225, %v6226
      %v6228 = vsel %vm3071, %v4446, -inf
      %v6229 = vsel %vm3071, %v4558, -inf
      %v6230 = vmax.f32 %v6228, %v6229
      %v6231 = vsel %vm3071, %v4453, -inf
      %v6232 = vsel %vm3071, %v4565, -inf
      %v6233 = vmax.f32 %v6231, %v6232
      %v6234 = vsel %vm3071, %v4460, -inf
      %v6235 = vsel %vm3071, %v4572, -inf
      %v6236 = vmax.f32 %v6234, %v6235
      %v6237 = vsel %vm3071, %v4467, -inf
      %v6238 = vsel %vm3071, %v4579, -inf
      %v6239 = vmax.f32 %v6237, %v6238
      %v6240 = vsel %vm3071, %v4474, -inf
      %v6241 = vsel %vm3071, %v4586, -inf
      %v6242 = vmax.f32 %v6240, %v6241
      %v6243 = vsel %vm3071, %v4481, -inf
      %v6244 = vsel %vm3071, %v4593, -inf
      %v6245 = vmax.f32 %v6243, %v6244
      %v6246 = vsel %vm3071, %v4488, -inf
      %v6247 = vsel %vm3071, %v4600, -inf
      %v6248 = vmax.f32 %v6246, %v6247
      %v6249 = vsel %vm3071, %v4495, -inf
      %v6250 = vsel %vm3071, %v4607, -inf
      %v6251 = vmax.f32 %v6249, %v6250
      %v6252 = vsel %vm3071, %v4502, -inf
      %v6253 = vsel %vm3071, %v4614, -inf
      %v6254 = vmax.f32 %v6252, %v6253
      %v6255 = vsel %vm3071, %v4509, -inf
      %v6256 = vsel %vm3071, %v4621, -inf
      %v6257 = vmax.f32 %v6255, %v6256
      %v6258 = vsel %vm3071, %v4516, -inf
      %v6259 = vsel %vm3071, %v4628, -inf
      %v6260 = vmax.f32 %v6258, %v6259
      %v6261 = vsel %vm3071, %v4523, -inf
      %v6262 = vsel %vm3071, %v4635, -inf
      %v6263 = vmax.f32 %v6261, %v6262
      %v6264 = vsel %vm3071, %v4530, -inf
      %v6265 = vsel %vm3071, %v4642, -inf
      %v6266 = vmax.f32 %v6264, %v6265
      %v6267 = vsel %vm3071, %v4537, -inf
      %v6268 = vsel %vm3071, %v4649, -inf
      %v6269 = vmax.f32 %v6267, %v6268
      %v6270 = vsel %vm3071, %v4544, -inf
      %v6271 = vsel %vm3071, %v4656, -inf
      %v6272 = vmax.f32 %v6270, %v6271
      %v6273 = vsel %vm3071, %v4663, -inf
      %v6274 = vsel %vm3071, %v4775, -inf
      %v6275 = vmax.f32 %v6273, %v6274
      %v6276 = vsel %vm3071, %v4670, -inf
      %v6277 = vsel %vm3071, %v4782, -inf
      %v6278 = vmax.f32 %v6276, %v6277
      %v6279 = vsel %vm3071, %v4677, -inf
      %v6280 = vsel %vm3071, %v4789, -inf
      %v6281 = vmax.f32 %v6279, %v6280
      %v6282 = vsel %vm3071, %v4684, -inf
      %v6283 = vsel %vm3071, %v4796, -inf
      %v6284 = vmax.f32 %v6282, %v6283
      %v6285 = vsel %vm3071, %v4691, -inf
      %v6286 = vsel %vm3071, %v4803, -inf
      %v6287 = vmax.f32 %v6285, %v6286
      %v6288 = vsel %vm3071, %v4698, -inf
      %v6289 = vsel %vm3071, %v4810, -inf
      %v6290 = vmax.f32 %v6288, %v6289
      %v6291 = vsel %vm3071, %v4705, -inf
      %v6292 = vsel %vm3071, %v4817, -inf
      %v6293 = vmax.f32 %v6291, %v6292
      %v6294 = vsel %vm3071, %v4712, -inf
      %v6295 = vsel %vm3071, %v4824, -inf
      %v6296 = vmax.f32 %v6294, %v6295
      %v6297 = vsel %vm3071, %v4719, -inf
      %v6298 = vsel %vm3071, %v4831, -inf
      %v6299 = vmax.f32 %v6297, %v6298
      %v6300 = vsel %vm3071, %v4726, -inf
      %v6301 = vsel %vm3071, %v4838, -inf
      %v6302 = vmax.f32 %v6300, %v6301
      %v6303 = vsel %vm3071, %v4733, -inf
      %v6304 = vsel %vm3071, %v4845, -inf
      %v6305 = vmax.f32 %v6303, %v6304
      %v6306 = vsel %vm3071, %v4740, -inf
      %v6307 = vsel %vm3071, %v4852, -inf
      %v6308 = vmax.f32 %v6306, %v6307
      %v6309 = vsel %vm3071, %v4747, -inf
      %v6310 = vsel %vm3071, %v4859, -inf
      %v6311 = vmax.f32 %v6309, %v6310
      %v6312 = vsel %vm3071, %v4754, -inf
      %v6313 = vsel %vm3071, %v4866, -inf
      %v6314 = vmax.f32 %v6312, %v6313
      %v6315 = vsel %vm3071, %v4761, -inf
      %v6316 = vsel %vm3071, %v4873, -inf
      %v6317 = vmax.f32 %v6315, %v6316
      %v6318 = vsel %vm3071, %v4768, -inf
      %v6319 = vsel %vm3071, %v4880, -inf
      %v6320 = vmax.f32 %v6318, %v6319
      %v6321 = vsel %vm3071, %v4887, -inf
      %v6322 = vsel %vm3071, %v4999, -inf
      %v6323 = vmax.f32 %v6321, %v6322
      %v6324 = vsel %vm3071, %v4894, -inf
      %v6325 = vsel %vm3071, %v5006, -inf
      %v6326 = vmax.f32 %v6324, %v6325
      %v6327 = vsel %vm3071, %v4901, -inf
      %v6328 = vsel %vm3071, %v5013, -inf
      %v6329 = vmax.f32 %v6327, %v6328
      %v6330 = vsel %vm3071, %v4908, -inf
      %v6331 = vsel %vm3071, %v5020, -inf
      %v6332 = vmax.f32 %v6330, %v6331
      %v6333 = vsel %vm3071, %v4915, -inf
      %v6334 = vsel %vm3071, %v5027, -inf
      %v6335 = vmax.f32 %v6333, %v6334
      %v6336 = vsel %vm3071, %v4922, -inf
      %v6337 = vsel %vm3071, %v5034, -inf
      %v6338 = vmax.f32 %v6336, %v6337
      %v6339 = vsel %vm3071, %v4929, -inf
      %v6340 = vsel %vm3071, %v5041, -inf
      %v6341 = vmax.f32 %v6339, %v6340
      %v6342 = vsel %vm3071, %v4936, -inf
      %v6343 = vsel %vm3071, %v5048, -inf
      %v6344 = vmax.f32 %v6342, %v6343
      %v6345 = vsel %vm3071, %v4943, -inf
      %v6346 = vsel %vm3071, %v5055, -inf
      %v6347 = vmax.f32 %v6345, %v6346
      %v6348 = vsel %vm3071, %v4950, -inf
      %v6349 = vsel %vm3071, %v5062, -inf
      %v6350 = vmax.f32 %v6348, %v6349
      %v6351 = vsel %vm3071, %v4957, -inf
      %v6352 = vsel %vm3071, %v5069, -inf
      %v6353 = vmax.f32 %v6351, %v6352
      %v6354 = vsel %vm3071, %v4964, -inf
      %v6355 = vsel %vm3071, %v5076, -inf
      %v6356 = vmax.f32 %v6354, %v6355
      %v6357 = vsel %vm3071, %v4971, -inf
      %v6358 = vsel %vm3071, %v5083, -inf
      %v6359 = vmax.f32 %v6357, %v6358
      %v6360 = vsel %vm3071, %v4978, -inf
      %v6361 = vsel %vm3071, %v5090, -inf
      %v6362 = vmax.f32 %v6360, %v6361
      %v6363 = vsel %vm3071, %v4985, -inf
      %v6364 = vsel %vm3071, %v5097, -inf
      %v6365 = vmax.f32 %v6363, %v6364
      %v6366 = vsel %vm3071, %v4992, -inf
      %v6367 = vsel %vm3071, %v5104, -inf
      %v6368 = vmax.f32 %v6366, %v6367
      %v6369 = vsel %vm3071, %v5111, -inf
      %v6370 = vsel %vm3071, %v5223, -inf
      %v6371 = vmax.f32 %v6369, %v6370
      %v6372 = vsel %vm3071, %v5118, -inf
      %v6373 = vsel %vm3071, %v5230, -inf
      %v6374 = vmax.f32 %v6372, %v6373
      %v6375 = vsel %vm3071, %v5125, -inf
      %v6376 = vsel %vm3071, %v5237, -inf
      %v6377 = vmax.f32 %v6375, %v6376
      %v6378 = vsel %vm3071, %v5132, -inf
      %v6379 = vsel %vm3071, %v5244, -inf
      %v6380 = vmax.f32 %v6378, %v6379
      %v6381 = vsel %vm3071, %v5139, -inf
      %v6382 = vsel %vm3071, %v5251, -inf
      %v6383 = vmax.f32 %v6381, %v6382
      %v6384 = vsel %vm3071, %v5146, -inf
      %v6385 = vsel %vm3071, %v5258, -inf
      %v6386 = vmax.f32 %v6384, %v6385
      %v6387 = vsel %vm3071, %v5153, -inf
      %v6388 = vsel %vm3071, %v5265, -inf
      %v6389 = vmax.f32 %v6387, %v6388
      %v6390 = vsel %vm3071, %v5160, -inf
      %v6391 = vsel %vm3071, %v5272, -inf
      %v6392 = vmax.f32 %v6390, %v6391
      %v6393 = vsel %vm3071, %v5167, -inf
      %v6394 = vsel %vm3071, %v5279, -inf
      %v6395 = vmax.f32 %v6393, %v6394
      %v6396 = vsel %vm3071, %v5174, -inf
      %v6397 = vsel %vm3071, %v5286, -inf
      %v6398 = vmax.f32 %v6396, %v6397
      %v6399 = vsel %vm3071, %v5181, -inf
      %v6400 = vsel %vm3071, %v5293, -inf
      %v6401 = vmax.f32 %v6399, %v6400
      %v6402 = vsel %vm3071, %v5188, -inf
      %v6403 = vsel %vm3071, %v5300, -inf
      %v6404 = vmax.f32 %v6402, %v6403
      %v6405 = vsel %vm3071, %v5195, -inf
      %v6406 = vsel %vm3071, %v5307, -inf
      %v6407 = vmax.f32 %v6405, %v6406
      %v6408 = vsel %vm3071, %v5202, -inf
      %v6409 = vsel %vm3071, %v5314, -inf
      %v6410 = vmax.f32 %v6408, %v6409
      %v6411 = vsel %vm3071, %v5209, -inf
      %v6412 = vsel %vm3071, %v5321, -inf
      %v6413 = vmax.f32 %v6411, %v6412
      %v6414 = vsel %vm3071, %v5216, -inf
      %v6415 = vsel %vm3071, %v5328, -inf
      %v6416 = vmax.f32 %v6414, %v6415
      %v6417 = vsel %vm3071, %v5335, -inf
      %v6418 = vsel %vm3071, %v5447, -inf
      %v6419 = vmax.f32 %v6417, %v6418
      %v6420 = vsel %vm3071, %v5342, -inf
      %v6421 = vsel %vm3071, %v5454, -inf
      %v6422 = vmax.f32 %v6420, %v6421
      %v6423 = vsel %vm3071, %v5349, -inf
      %v6424 = vsel %vm3071, %v5461, -inf
      %v6425 = vmax.f32 %v6423, %v6424
      %v6426 = vsel %vm3071, %v5356, -inf
      %v6427 = vsel %vm3071, %v5468, -inf
      %v6428 = vmax.f32 %v6426, %v6427
      %v6429 = vsel %vm3071, %v5363, -inf
      %v6430 = vsel %vm3071, %v5475, -inf
      %v6431 = vmax.f32 %v6429, %v6430
      %v6432 = vsel %vm3071, %v5370, -inf
      %v6433 = vsel %vm3071, %v5482, -inf
      %v6434 = vmax.f32 %v6432, %v6433
      %v6435 = vsel %vm3071, %v5377, -inf
      %v6436 = vsel %vm3071, %v5489, -inf
      %v6437 = vmax.f32 %v6435, %v6436
      %v6438 = vsel %vm3071, %v5384, -inf
      %v6439 = vsel %vm3071, %v5496, -inf
      %v6440 = vmax.f32 %v6438, %v6439
      %v6441 = vsel %vm3071, %v5391, -inf
      %v6442 = vsel %vm3071, %v5503, -inf
      %v6443 = vmax.f32 %v6441, %v6442
      %v6444 = vsel %vm3071, %v5398, -inf
      %v6445 = vsel %vm3071, %v5510, -inf
      %v6446 = vmax.f32 %v6444, %v6445
      %v6447 = vsel %vm3071, %v5405, -inf
      %v6448 = vsel %vm3071, %v5517, -inf
      %v6449 = vmax.f32 %v6447, %v6448
      %v6450 = vsel %vm3071, %v5412, -inf
      %v6451 = vsel %vm3071, %v5524, -inf
      %v6452 = vmax.f32 %v6450, %v6451
      %v6453 = vsel %vm3071, %v5419, -inf
      %v6454 = vsel %vm3071, %v5531, -inf
      %v6455 = vmax.f32 %v6453, %v6454
      %v6456 = vsel %vm3071, %v5426, -inf
      %v6457 = vsel %vm3071, %v5538, -inf
      %v6458 = vmax.f32 %v6456, %v6457
      %v6459 = vsel %vm3071, %v5433, -inf
      %v6460 = vsel %vm3071, %v5545, -inf
      %v6461 = vmax.f32 %v6459, %v6460
      %v6462 = vsel %vm3071, %v5440, -inf
      %v6463 = vsel %vm3071, %v5552, -inf
      %v6464 = vmax.f32 %v6462, %v6463
      %v6465 = vsel %vm3071, %v5559, -inf
      %v6466 = vsel %vm3071, %v5671, -inf
      %v6467 = vmax.f32 %v6465, %v6466
      %v6468 = vsel %vm3071, %v5566, -inf
      %v6469 = vsel %vm3071, %v5678, -inf
      %v6470 = vmax.f32 %v6468, %v6469
      %v6471 = vsel %vm3071, %v5573, -inf
      %v6472 = vsel %vm3071, %v5685, -inf
      %v6473 = vmax.f32 %v6471, %v6472
      %v6474 = vsel %vm3071, %v5580, -inf
      %v6475 = vsel %vm3071, %v5692, -inf
      %v6476 = vmax.f32 %v6474, %v6475
      %v6477 = vsel %vm3071, %v5587, -inf
      %v6478 = vsel %vm3071, %v5699, -inf
      %v6479 = vmax.f32 %v6477, %v6478
      %v6480 = vsel %vm3071, %v5594, -inf
      %v6481 = vsel %vm3071, %v5706, -inf
      %v6482 = vmax.f32 %v6480, %v6481
      %v6483 = vsel %vm3071, %v5601, -inf
      %v6484 = vsel %vm3071, %v5713, -inf
      %v6485 = vmax.f32 %v6483, %v6484
      %v6486 = vsel %vm3071, %v5608, -inf
      %v6487 = vsel %vm3071, %v5720, -inf
      %v6488 = vmax.f32 %v6486, %v6487
      %v6489 = vsel %vm3071, %v5615, -inf
      %v6490 = vsel %vm3071, %v5727, -inf
      %v6491 = vmax.f32 %v6489, %v6490
      %v6492 = vsel %vm3071, %v5622, -inf
      %v6493 = vsel %vm3071, %v5734, -inf
      %v6494 = vmax.f32 %v6492, %v6493
      %v6495 = vsel %vm3071, %v5629, -inf
      %v6496 = vsel %vm3071, %v5741, -inf
      %v6497 = vmax.f32 %v6495, %v6496
      %v6498 = vsel %vm3071, %v5636, -inf
      %v6499 = vsel %vm3071, %v5748, -inf
      %v6500 = vmax.f32 %v6498, %v6499
      %v6501 = vsel %vm3071, %v5643, -inf
      %v6502 = vsel %vm3071, %v5755, -inf
      %v6503 = vmax.f32 %v6501, %v6502
      %v6504 = vsel %vm3071, %v5650, -inf
      %v6505 = vsel %vm3071, %v5762, -inf
      %v6506 = vmax.f32 %v6504, %v6505
      %v6507 = vsel %vm3071, %v5657, -inf
      %v6508 = vsel %vm3071, %v5769, -inf
      %v6509 = vmax.f32 %v6507, %v6508
      %v6510 = vsel %vm3071, %v5664, -inf
      %v6511 = vsel %vm3071, %v5776, -inf
      %v6512 = vmax.f32 %v6510, %v6511
      %v6513 = vsel %vm3071, %v5783, -inf
      %v6514 = vsel %vm3071, %v5895, -inf
      %v6515 = vmax.f32 %v6513, %v6514
      %v6516 = vsel %vm3071, %v5790, -inf
      %v6517 = vsel %vm3071, %v5902, -inf
      %v6518 = vmax.f32 %v6516, %v6517
      %v6519 = vsel %vm3071, %v5797, -inf
      %v6520 = vsel %vm3071, %v5909, -inf
      %v6521 = vmax.f32 %v6519, %v6520
      %v6522 = vsel %vm3071, %v5804, -inf
      %v6523 = vsel %vm3071, %v5916, -inf
      %v6524 = vmax.f32 %v6522, %v6523
      %v6525 = vsel %vm3071, %v5811, -inf
      %v6526 = vsel %vm3071, %v5923, -inf
      %v6527 = vmax.f32 %v6525, %v6526
      %v6528 = vsel %vm3071, %v5818, -inf
      %v6529 = vsel %vm3071, %v5930, -inf
      %v6530 = vmax.f32 %v6528, %v6529
      %v6531 = vsel %vm3071, %v5825, -inf
      %v6532 = vsel %vm3071, %v5937, -inf
      %v6533 = vmax.f32 %v6531, %v6532
      %v6534 = vsel %vm3071, %v5832, -inf
      %v6535 = vsel %vm3071, %v5944, -inf
      %v6536 = vmax.f32 %v6534, %v6535
      %v6537 = vsel %vm3071, %v5839, -inf
      %v6538 = vsel %vm3071, %v5951, -inf
      %v6539 = vmax.f32 %v6537, %v6538
      %v6540 = vsel %vm3071, %v5846, -inf
      %v6541 = vsel %vm3071, %v5958, -inf
      %v6542 = vmax.f32 %v6540, %v6541
      %v6543 = vsel %vm3071, %v5853, -inf
      %v6544 = vsel %vm3071, %v5965, -inf
      %v6545 = vmax.f32 %v6543, %v6544
      %v6546 = vsel %vm3071, %v5860, -inf
      %v6547 = vsel %vm3071, %v5972, -inf
      %v6548 = vmax.f32 %v6546, %v6547
      %v6549 = vsel %vm3071, %v5867, -inf
      %v6550 = vsel %vm3071, %v5979, -inf
      %v6551 = vmax.f32 %v6549, %v6550
      %v6552 = vsel %vm3071, %v5874, -inf
      %v6553 = vsel %vm3071, %v5986, -inf
      %v6554 = vmax.f32 %v6552, %v6553
      %v6555 = vsel %vm3071, %v5881, -inf
      %v6556 = vsel %vm3071, %v5993, -inf
      %v6557 = vmax.f32 %v6555, %v6556
      %v6558 = vsel %vm3071, %v5888, -inf
      %v6559 = vsel %vm3071, %v6000, -inf
      %v6560 = vmax.f32 %v6558, %v6559
      %v6561 = vsel %vm3071, %v6007, -inf
      %v6562 = vsel %vm3071, %v6119, -inf
      %v6563 = vmax.f32 %v6561, %v6562
      %v6564 = vsel %vm3071, %v6014, -inf
      %v6565 = vsel %vm3071, %v6126, -inf
      %v6566 = vmax.f32 %v6564, %v6565
      %v6567 = vsel %vm3071, %v6021, -inf
      %v6568 = vsel %vm3071, %v6133, -inf
      %v6569 = vmax.f32 %v6567, %v6568
      %v6570 = vsel %vm3071, %v6028, -inf
      %v6571 = vsel %vm3071, %v6140, -inf
      %v6572 = vmax.f32 %v6570, %v6571
      %v6573 = vsel %vm3071, %v6035, -inf
      %v6574 = vsel %vm3071, %v6147, -inf
      %v6575 = vmax.f32 %v6573, %v6574
      %v6576 = vsel %vm3071, %v6042, -inf
      %v6577 = vsel %vm3071, %v6154, -inf
      %v6578 = vmax.f32 %v6576, %v6577
      %v6579 = vsel %vm3071, %v6049, -inf
      %v6580 = vsel %vm3071, %v6161, -inf
      %v6581 = vmax.f32 %v6579, %v6580
      %v6582 = vsel %vm3071, %v6056, -inf
      %v6583 = vsel %vm3071, %v6168, -inf
      %v6584 = vmax.f32 %v6582, %v6583
      %v6585 = vsel %vm3071, %v6063, -inf
      %v6586 = vsel %vm3071, %v6175, -inf
      %v6587 = vmax.f32 %v6585, %v6586
      %v6588 = vsel %vm3071, %v6070, -inf
      %v6589 = vsel %vm3071, %v6182, -inf
      %v6590 = vmax.f32 %v6588, %v6589
      %v6591 = vsel %vm3071, %v6077, -inf
      %v6592 = vsel %vm3071, %v6189, -inf
      %v6593 = vmax.f32 %v6591, %v6592
      %v6594 = vsel %vm3071, %v6084, -inf
      %v6595 = vsel %vm3071, %v6196, -inf
      %v6596 = vmax.f32 %v6594, %v6595
      %v6597 = vsel %vm3071, %v6091, -inf
      %v6598 = vsel %vm3071, %v6203, -inf
      %v6599 = vmax.f32 %v6597, %v6598
      %v6600 = vsel %vm3071, %v6098, -inf
      %v6601 = vsel %vm3071, %v6210, -inf
      %v6602 = vmax.f32 %v6600, %v6601
      %v6603 = vsel %vm3071, %v6105, -inf
      %v6604 = vsel %vm3071, %v6217, -inf
      %v6605 = vmax.f32 %v6603, %v6604
      %v6606 = vsel %vm3071, %v6112, -inf
      %v6607 = vsel %vm3071, %v6224, -inf
      %v6608 = vmax.f32 %v6606, %v6607
      %vm6737 = vcmask 1041409
      %v6738 = vsel %vm6737, %v6230, %v6227
      %vm6739 = vcmask 1042434
      %v6740 = vsel %vm6739, %v6233, %v6738
      %vm6741 = vcmask 1043459
      %v6742 = vsel %vm6741, %v6236, %v6740
      %vm6743 = vcmask 1044484
      %v6744 = vsel %vm6743, %v6239, %v6742
      %vm6745 = vcmask 1045509
      %v6746 = vsel %vm6745, %v6242, %v6744
      %vm6747 = vcmask 1046534
      %v6748 = vsel %vm6747, %v6245, %v6746
      %vm6749 = vcmask 1047559
      %v6750 = vsel %vm6749, %v6248, %v6748
      %v6751 = vsel %vm6737, %v6254, %v6251
      %v6752 = vsel %vm6739, %v6257, %v6751
      %v6753 = vsel %vm6741, %v6260, %v6752
      %v6754 = vsel %vm6743, %v6263, %v6753
      %v6755 = vsel %vm6745, %v6266, %v6754
      %v6756 = vsel %vm6747, %v6269, %v6755
      %v6757 = vsel %vm6749, %v6272, %v6756
      %v6758 = vsel %vm6737, %v6278, %v6275
      %v6759 = vsel %vm6739, %v6281, %v6758
      %v6760 = vsel %vm6741, %v6284, %v6759
      %v6761 = vsel %vm6743, %v6287, %v6760
      %v6762 = vsel %vm6745, %v6290, %v6761
      %v6763 = vsel %vm6747, %v6293, %v6762
      %v6764 = vsel %vm6749, %v6296, %v6763
      %v6765 = vsel %vm6737, %v6302, %v6299
      %v6766 = vsel %vm6739, %v6305, %v6765
      %v6767 = vsel %vm6741, %v6308, %v6766
      %v6768 = vsel %vm6743, %v6311, %v6767
      %v6769 = vsel %vm6745, %v6314, %v6768
      %v6770 = vsel %vm6747, %v6317, %v6769
      %v6771 = vsel %vm6749, %v6320, %v6770
      %v6772 = vsel %vm6737, %v6326, %v6323
      %v6773 = vsel %vm6739, %v6329, %v6772
      %v6774 = vsel %vm6741, %v6332, %v6773
      %v6775 = vsel %vm6743, %v6335, %v6774
      %v6776 = vsel %vm6745, %v6338, %v6775
      %v6777 = vsel %vm6747, %v6341, %v6776
      %v6778 = vsel %vm6749, %v6344, %v6777
      %v6779 = vsel %vm6737, %v6350, %v6347
      %v6780 = vsel %vm6739, %v6353, %v6779
      %v6781 = vsel %vm6741, %v6356, %v6780
      %v6782 = vsel %vm6743, %v6359, %v6781
      %v6783 = vsel %vm6745, %v6362, %v6782
      %v6784 = vsel %vm6747, %v6365, %v6783
      %v6785 = vsel %vm6749, %v6368, %v6784
      %v6786 = vsel %vm6737, %v6374, %v6371
      %v6787 = vsel %vm6739, %v6377, %v6786
      %v6788 = vsel %vm6741, %v6380, %v6787
      %v6789 = vsel %vm6743, %v6383, %v6788
      %v6790 = vsel %vm6745, %v6386, %v6789
      %v6791 = vsel %vm6747, %v6389, %v6790
      %v6792 = vsel %vm6749, %v6392, %v6791
      %v6793 = vsel %vm6737, %v6398, %v6395
      %v6794 = vsel %vm6739, %v6401, %v6793
      %v6795 = vsel %vm6741, %v6404, %v6794
      %v6796 = vsel %vm6743, %v6407, %v6795
      %v6797 = vsel %vm6745, %v6410, %v6796
      %v6798 = vsel %vm6747, %v6413, %v6797
      %v6799 = vsel %vm6749, %v6416, %v6798
      %v6800 = vsel %vm6737, %v6422, %v6419
      %v6801 = vsel %vm6739, %v6425, %v6800
      %v6802 = vsel %vm6741, %v6428, %v6801
      %v6803 = vsel %vm6743, %v6431, %v6802
      %v6804 = vsel %vm6745, %v6434, %v6803
      %v6805 = vsel %vm6747, %v6437, %v6804
      %v6806 = vsel %vm6749, %v6440, %v6805
      %v6807 = vsel %vm6737, %v6446, %v6443
      %v6808 = vsel %vm6739, %v6449, %v6807
      %v6809 = vsel %vm6741, %v6452, %v6808
      %v6810 = vsel %vm6743, %v6455, %v6809
      %v6811 = vsel %vm6745, %v6458, %v6810
      %v6812 = vsel %vm6747, %v6461, %v6811
      %v6813 = vsel %vm6749, %v6464, %v6812
      %v6814 = vsel %vm6737, %v6470, %v6467
      %v6815 = vsel %vm6739, %v6473, %v6814
      %v6816 = vsel %vm6741, %v6476, %v6815
      %v6817 = vsel %vm6743, %v6479, %v6816
      %v6818 = vsel %vm6745, %v6482, %v6817
      %v6819 = vsel %vm6747, %v6485, %v6818
      %v6820 = vsel %vm6749, %v6488, %v6819
      %v6821 = vsel %vm6737, %v6494, %v6491
      %v6822 = vsel %vm6739, %v6497, %v6821
      %v6823 = vsel %vm6741, %v6500, %v6822
      %v6824 = vsel %vm6743, %v6503, %v6823
      %v6825 = vsel %vm6745, %v6506, %v6824
      %v6826 = vsel %vm6747, %v6509, %v6825
      %v6827 = vsel %vm6749, %v6512, %v6826
      %v6828 = vsel %vm6737, %v6518, %v6515
      %v6829 = vsel %vm6739, %v6521, %v6828
      %v6830 = vsel %vm6741, %v6524, %v6829
      %v6831 = vsel %vm6743, %v6527, %v6830
      %v6832 = vsel %vm6745, %v6530, %v6831
      %v6833 = vsel %vm6747, %v6533, %v6832
      %v6834 = vsel %vm6749, %v6536, %v6833
      %v6835 = vsel %vm6737, %v6542, %v6539
      %v6836 = vsel %vm6739, %v6545, %v6835
      %v6837 = vsel %vm6741, %v6548, %v6836
      %v6838 = vsel %vm6743, %v6551, %v6837
      %v6839 = vsel %vm6745, %v6554, %v6838
      %v6840 = vsel %vm6747, %v6557, %v6839
      %v6841 = vsel %vm6749, %v6560, %v6840
      %v6842 = vsel %vm6737, %v6566, %v6563
      %v6843 = vsel %vm6739, %v6569, %v6842
      %v6844 = vsel %vm6741, %v6572, %v6843
      %v6845 = vsel %vm6743, %v6575, %v6844
      %v6846 = vsel %vm6745, %v6578, %v6845
      %v6847 = vsel %vm6747, %v6581, %v6846
      %v6848 = vsel %vm6749, %v6584, %v6847
      %v6849 = vsel %vm6737, %v6590, %v6587
      %v6850 = vsel %vm6739, %v6593, %v6849
      %v6851 = vsel %vm6741, %v6596, %v6850
      %v6852 = vsel %vm6743, %v6599, %v6851
      %v6853 = vsel %vm6745, %v6602, %v6852
      %v6854 = vsel %vm6747, %v6605, %v6853
      %v6855 = vsel %vm6749, %v6608, %v6854
      %6872 = vst.msk [vmem:[%s221] sm:$0xff] %vm3071, %v6750
      %6873 = vst.msk [vmem:[%s221 + $0x8] sm:$0xff] %vm3071, %v6757
      %6874 = vst.msk [vmem:[%s221 + $0x10] sm:$0xff] %vm3071, %v6764
      %6875 = vst.msk [vmem:[%s221 + $0x18] sm:$0xff] %vm3071, %v6771
      %6876 = vst.msk [vmem:[%s221 + $0x20] sm:$0xff] %vm3071, %v6778
      %6877 = vst.msk [vmem:[%s221 + $0x28] sm:$0xff] %vm3071, %v6785
      %6878 = vst.msk [vmem:[%s221 + $0x30] sm:$0xff] %vm3071, %v6792
      %6879 = vst.msk [vmem:[%s221 + $0x38] sm:$0xff] %vm3071, %v6799
      %6880 = vst.msk [vmem:[%s221 + $0x40] sm:$0xff] %vm3071, %v6806
      %6881 = vst.msk [vmem:[%s221 + $0x48] sm:$0xff] %vm3071, %v6813
      %6882 = vst.msk [vmem:[%s221 + $0x50] sm:$0xff] %vm3071, %v6820
      %6883 = vst.msk [vmem:[%s221 + $0x58] sm:$0xff] %vm3071, %v6827
      %6884 = vst.msk [vmem:[%s221 + $0x60] sm:$0xff] %vm3071, %v6834
      %6885 = vst.msk [vmem:[%s221 + $0x68] sm:$0xff] %vm3071, %v6841
      %6886 = vst.msk [vmem:[%s221 + $0x70] sm:$0xff] %vm3071, %v6848
      %6887 = vst.msk [vmem:[%s221 + $0x78] sm:$0xff] %vm3071, %v6855
      %s6888 = smul.u32 8, %s20
      %p6889 = scmp.lt.s32.totalorder %s19, 1
      %s6890 = scalar_select %p6889, %s19, 1
      %p6891 = scmp.lt.s32.totalorder %s6888, 15
      %s6892 = scalar_select %p6891, %s6888, 15
      %s6893 = smul.addr %s6892, 2
      %s6894 = smul.addr %s6890, 32
      %s6895 = sadd.s32 %s6893, %s6894
      %s6896 = smul.addr %s6895, 8
      %s6897 = scalar_lea.vmem %s4, %s6896
      // Predicated region
      $region37: #{tpu_custom_call.1} parent=35 // pred_check
        %p6898 = pneg %p136
      $region38: #{tpu_custom_call.1} parent=35 // pred_check_branch
        %6900 = sbr.rel (%p6898) target = $region40
      $region39: #{tpu_custom_call.1} parent=35 // pred_region
        %s6901 = smul.u32 8, %s20
      $region40: #{tpu_custom_call.1} parent=35 // pred_fallthru
        _
    $region36: #{tpu_custom_call.1} parent=5 // pred_fallthru
      _
    %p6902 = scmp.le.s32.totalorder 2, %s10
    // Predicated region
    $region41: #{tpu_custom_call.1} parent=5 // pred_check
      %p6903 = pneg %p6902
    $region42: #{tpu_custom_call.1} parent=5 // pred_check_branch
      %6905 = sbr.rel (%p6903) target = $region44
    $region43: #{tpu_custom_call.1} parent=5 // pred_region
      %s6906 = ssub.s32 %s10, 2
      // Predicated region
      $region45: #{tpu_custom_call.1} parent=43 // pred_check
        %p6907 = pneg %p142
      $region46: #{tpu_custom_call.1} parent=43 // pred_check_branch
        %6909 = sbr.rel (%p6907) target = $region48
      $region47: #{tpu_custom_call.1} parent=43 // pred_region
        %s6910 = smul.u32 8, %s22
        %p6911 = scmp.lt.s32.totalorder %s21, 1
        %s6912 = scalar_select %p6911, %s21, 1
        %p6913 = scmp.lt.s32.totalorder %s6910, 15
        %s6914 = scalar_select %p6913, %s6910, 15
        %s6915 = smul.addr %s6914, 2
        %s6916 = smul.addr %s6912, 32
        %s6917 = sadd.s32 %s6915, %s6916
        %s6918 = smul.addr %s6917, 8
        %s6919 = scalar_lea.vmem %s4, %s6918
      $region48: #{tpu_custom_call.1} parent=43 // pred_fallthru
        _
    $region44: #{tpu_custom_call.1} parent=5 // pred_fallthru
      _
  $region6: #{tpu_custom_call.1} parent=0 // loop_footer
    %s14 = sadd.s32 1, %s10
  $region7: #{tpu_custom_call.1} parent=0 // loop_footer_branch
    %9 = sbr.rel target = $region3
  $region8: #{tpu_custom_call.1} parent=0 // loop_exit
    _

</llo_original>
